<compile_context>
chip_gen: v5e
topology: v5e:2x2
jax: 0.10.0
libtpu: 0.0.40
codegen_flags: <defaults>
</compile_context>

<pallas_src>
import functools

import jax
import jax.numpy as jnp
from jax.experimental import pallas as pl
from jax.experimental.pallas import tpu as pltpu


_GEMM_DTYPE = jnp.bfloat16  # MXU operand dtype (accumulation stays f32)

# Per-dim phase/tap -> transposed-conv kernel-index selector for stride 2, k=3,
# p=1, output_padding=1.  Output index o = 2*m + r,
#   y[o] = sum_{j in {0,1}} x_padright[m + j] * wt[g(r, j)]
#   r=0: (j=0 -> wt[1]);           r=1: (j=0 -> wt[2], j=1 -> wt[0])
_PHASE_SEL = jnp.array(
    [[[0.0, 1.0, 0.0],   # r=0, j=0 -> wt[1]
      [0.0, 0.0, 0.0]],  # r=0, j=1 -> (none)
     [[0.0, 0.0, 1.0],   # r=1, j=0 -> wt[2]
      [1.0, 0.0, 0.0]]], # r=1, j=1 -> wt[0]
    jnp.float32)         # shape (phase r, tap j, kernel k)


# ----------------------------------------------------------------------------
# Fused Pallas kernel: GEMM + bias [+ InstanceNorm(eps=1e-5) + PReLU(scalar)]
# ----------------------------------------------------------------------------
def _fused_gemm_kernel(p_ref, w_ref, b_ref, a_ref, o_ref, *, groups, apply_norm):
    """One batch sample.

    p_ref: (1, K, M) bf16  -- transposed im2col patches (K taps*Cin, M spatial)
    w_ref: (R, K)    bf16  -- GEMM weight (R output rows)
    b_ref: (R, 1)    f32   -- bias
    a_ref: (1,)      f32   -- PReLU slope in SMEM (unused if not apply_norm)
    o_ref: (1, R, M) f32

    When groups > 1 the rows are (phase, channel)-packed: row = p*C + c with
    C = R // groups; instance-norm statistics for channel c are taken over all
    `groups` phase rows of that channel and all M columns (== the full output
    spatial volume of the transposed conv).
    """
    y = jnp.dot(w_ref[...], p_ref[0], preferred_element_type=jnp.float32)
    y = y + b_ref[...]
    if apply_norm:
        R, M = y.shape
        if groups == 1:
            mean = jnp.mean(y, axis=-1, keepdims=True)
            d = y - mean
            var = jnp.mean(d * d, axis=-1, keepdims=True)
        else:
            C = R // groups
            ri = jax.lax.broadcasted_iota(jnp.int32, (R, R), 0)
            ci = jax.lax.broadcasted_iota(jnp.int32, (R, R), 1)
            sel = ((ri % C) == (ci % C)).astype(jnp.float32)  # same-channel selector
            inv_n = 1.0 / float(groups * M)
            mean = jnp.dot(sel, jnp.sum(y, axis=-1, keepdims=True),
                           preferred_element_type=jnp.float32) * inv_n
            d = y - mean
            var = jnp.dot(sel, jnp.sum(d * d, axis=-1, keepdims=True),
                          preferred_element_type=jnp.float32) * inv_n
        xn = d * jax.lax.rsqrt(var + 1e-5)
        a = a_ref[0]
        y = jnp.where(xn >= 0.0, xn, a * xn)
    o_ref[0] = y.astype(o_ref.dtype)


def _fused_gemm(patches, w_rows, bias, alpha, *, apply_norm, groups):
    """patches: (N, K, M) f32; w_rows: (R, K) f32; bias: (R,); alpha: (1,)."""
    N, K, M = patches.shape
    R = w_rows.shape[0]
    kernel = functools.partial(_fused_gemm_kernel, groups=groups,
                               apply_norm=apply_norm)
    return pl.pallas_call(
        kernel,
        grid=(N,),
        in_specs=[
            pl.BlockSpec((1, K, M), lambda n: (n, 0, 0)),
            pl.BlockSpec((R, K), lambda n: (0, 0)),
            pl.BlockSpec((R, 1), lambda n: (0, 0)),
            pl.BlockSpec(memory_space=pltpu.MemorySpace.SMEM),
        ],
        out_specs=pl.BlockSpec((1, R, M), lambda n: (n, 0, 0)),
        out_shape=jax.ShapeDtypeStruct((N, R, M), jnp.float32),
        compiler_params=pltpu.CompilerParams(dimension_semantics=("parallel",)),
    )(patches.astype(_GEMM_DTYPE), w_rows.astype(_GEMM_DTYPE),
      bias.reshape(R, 1).astype(jnp.float32), alpha)


# ----------------------------------------------------------------------------
# im2col / pixel-shuffle glue (XLA; small tensors)
# ----------------------------------------------------------------------------
def _extract_patches_conv(x, *, k, stride, pad):
    """x: (N, C, D, H, W) -> (patches (N, k^3*C, Do*Ho*Wo), (Do, Ho, Wo)).

    Rows are ordered (tap, input-channel), matching w.reshape(k^3*C, Cout).
    """
    N, C, D, H, W = x.shape
    xp = jnp.pad(x, ((0, 0), (0, 0), (pad, pad), (pad, pad), (pad, pad)))
    Do = (D + 2 * pad - k) // stride + 1
    Ho = (H + 2 * pad - k) // stride + 1
    Wo = (W + 2 * pad - k) // stride + 1
    taps = []
    for kd in range(k):
        for kh in range(k):
            for kw in range(k):
                sl = jax.lax.slice(
                    xp,
                    (0, 0, kd, kh, kw),
                    (N, C,
                     kd + (Do - 1) * stride + 1,
                     kh + (Ho - 1) * stride + 1,
                     kw + (Wo - 1) * stride + 1),
                    (1, 1, stride, stride, stride),
                )
                taps.append(sl.reshape(N, C, Do * Ho * Wo))
    return jnp.concatenate(taps, axis=1), (Do, Ho, Wo)


def _extract_patches_deconv(x):
    """2x2x2 stride-1 patches of x right-padded by 1: (N, 8*C, D*H*W)."""
    N, C, D, H, W = x.shape
    xp = jnp.pad(x, ((0, 0), (0, 0), (0, 1), (0, 1), (0, 1)))
    taps = []
    for jd in range(2):
        for jh in range(2):
            for jw in range(2):
                sl = jax.lax.slice(xp, (0, 0, jd, jh, jw),
                                   (N, C, jd + D, jh + H, jw + W))
                taps.append(sl.reshape(N, C, D * H * W))
    return jnp.concatenate(taps, axis=1)


def _deconv_phase_weight(wt, b):
    """Transposed-conv kernel (3,3,3,Cin,Cout), bias (Cout,) ->
    phase-packed GEMM weight (8*Cout, 8*Cin) with rows (rd,rh,rw,cout) and
    columns (jd,jh,jw,cin), plus packed bias (8*Cout,)."""
    S = _PHASE_SEL
    wc = jnp.einsum('adk,bel,cfm,klmio->abcodefi', S, S, S, wt)
    Cin, Cout = wt.shape[3], wt.shape[4]
    return wc.reshape(8 * Cout, 8 * Cin), jnp.tile(b, 8)


def _fold_heads(w_rows, b_rows, heads_w, heads_b):
    """Fold 1x1x1 heads into the phase-packed up0 GEMM.

    w_rows: (8*C, K), b_rows: (8*C,);  heads_w: list of (C, Ch); heads_b: (Ch,)
    Returns (8*n_heads*Ch, K) weight and matching bias, rows = (phase, head, ch).
    """
    C = heads_w[0].shape[0]
    K = w_rows.shape[1]
    wr = w_rows.reshape(8, C, K)
    br = b_rows.reshape(8, C)
    Wh = jnp.stack(heads_w)                                   # (H, C, Ch)
    bh = jnp.stack(heads_b)                                   # (H, Ch)
    wf = jnp.einsum('pck,hco->phok', wr, Wh)                  # (8, H, Ch, K)
    bf = jnp.einsum('pc,hco->pho', br, Wh) + bh[None, :, :]   # (8, H, Ch)
    return wf.reshape(-1, K), bf.reshape(-1)


def _unshuffle_phases(yp, Cout, D, H, W):
    """(N, 8*Cout, D*H*W) phase-packed -> (N, Cout, 2D, 2H, 2W)."""
    N = yp.shape[0]
    y = yp.reshape(N, 2, 2, 2, Cout, D, H, W)
    y = jnp.transpose(y, (0, 4, 5, 1, 6, 2, 7, 3))
    return y.reshape(N, Cout, 2 * D, 2 * H, 2 * W)


def _unshuffle_phases_heads(yp, n_heads, Cout, D, H, W):
    """(N, 8*n_heads*Cout, D*H*W) -> tuple of n_heads (N, Cout, 2D, 2H, 2W)."""
    N = yp.shape[0]
    y = yp.reshape(N, 2, 2, 2, n_heads, Cout, D, H, W)
    y = jnp.transpose(y, (4, 0, 5, 6, 1, 7, 2, 8, 3))
    y = y.reshape(n_heads, N, Cout, 2 * D, 2 * H, 2 * W)
    return tuple(y[h] for h in range(n_heads))


# ----------------------------------------------------------------------------
# Layer wrappers
# ----------------------------------------------------------------------------
def _conv_block(x, w, b, alpha, *, stride):
    """Conv3d(k=3, pad=1, stride) + InstanceNorm + PReLU, fused in one call."""
    N, Cin, D, H, W = x.shape
    k = w.shape[0]
    Cout = w.shape[-1]
    patches, (Do, Ho, Wo) = _extract_patches_conv(x, k=k, stride=stride, pad=k // 2)
    w_rows = jnp.transpose(w.reshape(k * k * k * Cin, Cout))  # (Cout, K)
    y = _fused_gemm(patches, w_rows, b, alpha, apply_norm=True, groups=1)
    return y.reshape(N, Cout, Do, Ho, Wo)


# ----------------------------------------------------------------------------
# MultiHeadUNet forward (channels=(4, 8, 16), strides=(2, 2), num_res_units=0)
# ----------------------------------------------------------------------------
def multi_head_unet_forward(x, params):
    """x: (N, 1, D, H, W) f32 (NCDHW). Returns (out, out_dist), each (N, 2, D, H, W)."""
    # encoder (conv + InstanceNorm + PReLU; adn_ordering="NDA", dropout=0 -> identity)
    d0 = _conv_block(x, params["down0_w"], params["down0_b"],
                     params["down0_alpha"], stride=2)                      # 1 -> 4
    d1 = _conv_block(d0, params["down1_w"], params["down1_b"],
                     params["down1_alpha"], stride=2)                      # 4 -> 8
    bt = _conv_block(d1, params["bottom_w"], params["bottom_b"],
                     params["bottom_alpha"], stride=1)                     # 8 -> 16

    # inner SkipConnection: cat([x, submodule(x)], channel dim)
    cat1 = jnp.concatenate([d1, bt], axis=1)                               # 24 ch
    _, _, Dc, Hc, Wc = cat1.shape

    # up1: ConvTranspose(24 -> 4) + InstanceNorm + PReLU, phase-packed + fused
    w1_rows, b1_rows = _deconv_phase_weight(params["up1_w"], params["up1_b"])
    p1 = _extract_patches_deconv(cat1)                                     # (N, 192, M)
    y1 = _fused_gemm(p1, w1_rows, b1_rows, params["up1_alpha"],
                     apply_norm=True, groups=8)                            # (N, 32, M)
    u1 = _unshuffle_phases(y1, params["up1_w"].shape[-1], Dc, Hc, Wc)      # (N, 4, ...)

    # outer SkipConnection
    cat0 = jnp.concatenate([d0, u1], axis=1)                               # 8 ch
    _, _, Db, Hb, Wb = cat0.shape

    # up0 (conv_only ConvTranspose 8 -> 2) with BOTH 1x1x1 heads folded into
    # the GEMM weights: one GEMM produces both head outputs.
    w0_rows, b0_rows = _deconv_phase_weight(params["up0_w"], params["up0_b"])
    wf, bf = _fold_heads(w0_rows, b0_rows,
                         [params["head1_w"], params["head2_w"]],
                         [params["head1_b"], params["head2_b"]])
    p0 = _extract_patches_deconv(cat0)                                     # (N, 64, M)
    dummy_alpha = jnp.zeros((1,), jnp.float32)
    y0 = _fused_gemm(p0, wf, bf, dummy_alpha, apply_norm=False, groups=8)  # (N, 32, M)
    out, out_dist = _unshuffle_phases_heads(y0, 2, params["head1_w"].shape[-1],
                                            Db, Hb, Wb)
    return out, out_dist


# ----------------------------------------------------------------------------
# Deterministic synthetic parameters
# ----------------------------------------------------------------------------
def init_params(key):
    ks = jax.random.split(key, 14)

    def conv_w(k, kern, cin, cout):
        fan_in = kern * kern * kern * cin
        return (jax.random.normal(k, (kern, kern, kern, cin, cout), jnp.float32)
                / jnp.sqrt(float(fan_in)))

    def vec(k, n):
        return jax.random.normal(k, (n,), jnp.float32) * 0.01

    p = {}
    p["down0_w"], p["down0_b"] = conv_w(ks[0], 3, 1, 4), vec(ks[1], 4)
    p["down1_w"], p["down1_b"] = conv_w(ks[2], 3, 4, 8), vec(ks[3], 8)
    p["bottom_w"], p["bottom_b"] = conv_w(ks[4], 3, 8, 16), vec(ks[5], 16)
    p["up1_w"], p["up1_b"] = conv_w(ks[6], 3, 24, 4), vec(ks[7], 4)
    p["up0_w"], p["up0_b"] = conv_w(ks[8], 3, 8, 2), vec(ks[9], 2)
    p["head1_w"] = jax.random.normal(ks[10], (2, 2), jnp.float32) / jnp.sqrt(2.0)
    p["head1_b"] = vec(ks[11], 2)
    p["head2_w"] = jax.random.normal(ks[12], (2, 2), jnp.float32) / jnp.sqrt(2.0)
    p["head2_b"] = vec(ks[13], 2)
    for name in ("down0", "down1", "bottom", "up1"):
        p[name + "_alpha"] = jnp.full((1,), 0.25, jnp.float32)  # nn.PReLU() default
    return p


if __name__ == "__main__":
    key = jax.random.PRNGKey(0)
    kp, kx = jax.random.split(key)
    params = init_params(kp)

    # N=2, C_in=1, D=H=W=8 (divisible by prod(strides)=4)
    x = jax.random.normal(kx, (2, 1, 8, 8, 8), jnp.float32)

    fwd = jax.jit(multi_head_unet_forward)
    out, out_dist = fwd(x, params)
    jax.block_until_ready((out, out_dist))

    assert out.shape == (2, 2, 8, 8, 8), out.shape
    assert out_dist.shape == (2, 2, 8, 8, 8), out_dist.shape
    assert out.dtype == jnp.float32 and out_dist.dtype == jnp.float32
    assert bool(jnp.all(jnp.isfinite(out))) and bool(jnp.all(jnp.isfinite(out_dist)))
    print("KERNEL_OK")
</pallas_src>

<mosaic_0001>
module attributes {stable_mosaic.version = 11 : i64} {
  func.func @_fused_gemm_kernel(%arg0: i32, %arg1: memref<1x27x64xbf16, #tpu.memory_space<vmem>>, %arg2: memref<4x27xbf16, #tpu.memory_space<vmem>>, %arg3: memref<4x1xf32, #tpu.memory_space<vmem>>, %arg4: memref<1xf32, #tpu.memory_space<smem>>, %arg5: memref<1x4x64xf32, #tpu.memory_space<vmem>>) attributes {dimension_semantics = [#tpu.dimension_semantics<parallel>], iteration_bounds = array<i64: 2>, scalar_prefetch = 0 : i64, scratch_operands = 0 : i64, tpu.core_type = #tpu.core_type<tc>, window_params = [{transform_indices = @transform_0, window_bounds = array<i64: 1, 27, 64>}, {pipeline_mode = #tpu.pipeline_mode<synchronous>, transform_indices = @transform_1, window_bounds = array<i64: 4, 27>}, {pipeline_mode = #tpu.pipeline_mode<synchronous>, transform_indices = @transform_2, window_bounds = array<i64: 4, 1>}, {transform_indices = @transform_3, window_bounds = array<i64: 1>}, {transform_indices = @transform_4, window_bounds = array<i64: 1, 4, 64>}]} {
    %c0 = arith.constant 0 : index
    %c0_0 = arith.constant 0 : index
    %0 = vector.load %arg2[%c0, %c0_0] : memref<4x27xbf16, #tpu.memory_space<vmem>>, vector<4x27xbf16>
    %c0_1 = arith.constant 0 : index
    %c0_2 = arith.constant 0 : index
    %c0_3 = arith.constant 0 : index
    %1 = vector.load %arg1[%c0_1, %c0_2, %c0_3] : memref<1x27x64xbf16, #tpu.memory_space<vmem>>, vector<1x27x64xbf16>
    %2 = vector.shape_cast %1 : vector<1x27x64xbf16> to vector<27x64xbf16>
    %cst = arith.constant dense<0.000000e+00> : vector<4x64xf32>
    %3 = tpu.matmul %0, %2, %cst {dimension_numbers = #tpu.dot_dimension_numbers<[1], [0], [0], [1], [0, 0, 1, 1], [], []>} : vector<4x27xbf16>, vector<27x64xbf16>, vector<4x64xf32> -> vector<4x64xf32>
    %c0_4 = arith.constant 0 : index
    %c0_5 = arith.constant 0 : index
    %4 = vector.load %arg3[%c0_4, %c0_5] : memref<4x1xf32, #tpu.memory_space<vmem>>, vector<4x1xf32>
    %5 = vector.broadcast %4 : vector<4x1xf32> to vector<4x64xf32>
    %6 = arith.addf %3, %5 : vector<4x64xf32>
    %cst_6 = arith.constant dense<0.000000e+00> : vector<4xf32>
    %7 = vector.multi_reduction <add>, %6, %cst_6 [1] : vector<4x64xf32> to vector<4xf32>
    %8 = vector.shape_cast %7 : vector<4xf32> to vector<4x1xf32>
    %cst_7 = arith.constant 6.400000e+01 : f32
    %9 = vector.broadcast %cst_7 : f32 to vector<4x1xf32>
    %10 = arith.divf %8, %9 : vector<4x1xf32>
    %11 = vector.broadcast %10 : vector<4x1xf32> to vector<4x64xf32>
    %12 = arith.subf %6, %11 : vector<4x64xf32>
    %13 = arith.mulf %12, %12 : vector<4x64xf32>
    %cst_8 = arith.constant dense<0.000000e+00> : vector<4xf32>
    %14 = vector.multi_reduction <add>, %13, %cst_8 [1] : vector<4x64xf32> to vector<4xf32>
    %15 = vector.shape_cast %14 : vector<4xf32> to vector<4x1xf32>
    %cst_9 = arith.constant 6.400000e+01 : f32
    %16 = vector.broadcast %cst_9 : f32 to vector<4x1xf32>
    %17 = arith.divf %15, %16 : vector<4x1xf32>
    %cst_10 = arith.constant 9.99999974E-6 : f32
    %18 = vector.broadcast %cst_10 : f32 to vector<4x1xf32>
    %19 = arith.addf %17, %18 : vector<4x1xf32>
    %20 = math.rsqrt %19 : vector<4x1xf32>
    %21 = vector.broadcast %20 : vector<4x1xf32> to vector<4x64xf32>
    %22 = arith.mulf %12, %21 : vector<4x64xf32>
    %c0_11 = arith.constant 0 : index
    %23 = memref.load %arg4[%c0_11] : memref<1xf32, #tpu.memory_space<smem>>
    %cst_12 = arith.constant 0.000000e+00 : f32
    %24 = vector.broadcast %cst_12 : f32 to vector<4x64xf32>
    %25 = arith.cmpf oge, %22, %24 : vector<4x64xf32>
    %26 = vector.broadcast %23 : f32 to vector<4x64xf32>
    %27 = arith.mulf %26, %22 : vector<4x64xf32>
    %28 = arith.select %25, %22, %27 : vector<4x64xi1>, vector<4x64xf32>
    %c0_13 = arith.constant 0 : index
    %c0_14 = arith.constant 0 : index
    %c0_15 = arith.constant 0 : index
    %29 = vector.load %arg5[%c0_13, %c0_14, %c0_15] : memref<1x4x64xf32, #tpu.memory_space<vmem>>, vector<1x4x64xf32>
    %30 = vector.shape_cast %29 : vector<1x4x64xf32> to vector<4x64xf32>
    %31 = vector.shape_cast %28 : vector<4x64xf32> to vector<1x4x64xf32>
    tpu.vector_store %arg5[%c0_13, %c0_14, %c0_15], %31 {strides = array<i32>} : memref<1x4x64xf32, #tpu.memory_space<vmem>>, vector<1x4x64xf32>,
    return
  }
  func.func @transform_0(%arg0: i32) -> (i32, i32, i32) {
    %c0_i32 = arith.constant 0 : i32
    %c0_i32_0 = arith.constant 0 : i32
    %c0_i32_1 = arith.constant 0 : i32
    return %arg0, %c0_i32, %c0_i32_0 : i32, i32, i32
  }
  func.func @transform_1(%arg0: i32) -> (i32, i32) {
    %c0_i32 = arith.constant 0 : i32
    %c0_i32_0 = arith.constant 0 : i32
    %c0_i32_1 = arith.constant 0 : i32
    return %c0_i32, %c0_i32_0 : i32, i32
  }
  func.func @transform_2(%arg0: i32) -> (i32, i32) {
    %c0_i32 = arith.constant 0 : i32
    %c0_i32_0 = arith.constant 0 : i32
    %c0_i32_1 = arith.constant 0 : i32
    return %c0_i32, %c0_i32_0 : i32, i32
  }
  func.func @transform_3(%arg0: i32) -> i32 {
    %c0_i32 = arith.constant 0 : i32
    %c0_i32_0 = arith.constant 0 : i32
    return %c0_i32 : i32
  }
  func.func @transform_4(%arg0: i32) -> (i32, i32, i32) {
    %c0_i32 = arith.constant 0 : i32
    %c0_i32_0 = arith.constant 0 : i32
    %c0_i32_1 = arith.constant 0 : i32
    return %arg0, %c0_i32, %c0_i32_0 : i32, i32, i32
  }
}

module attributes {stable_mosaic.version = 11 : i64} {
  func.func @_fused_gemm_kernel(%arg0: i32, %arg1: memref<1x108x8xbf16, #tpu.memory_space<vmem>>, %arg2: memref<8x108xbf16, #tpu.memory_space<vmem>>, %arg3: memref<8x1xf32, #tpu.memory_space<vmem>>, %arg4: memref<1xf32, #tpu.memory_space<smem>>, %arg5: memref<1x8x8xf32, #tpu.memory_space<vmem>>) attributes {dimension_semantics = [#tpu.dimension_semantics<parallel>], iteration_bounds = array<i64: 2>, scalar_prefetch = 0 : i64, scratch_operands = 0 : i64, tpu.core_type = #tpu.core_type<tc>, window_params = [{transform_indices = @transform_0, window_bounds = array<i64: 1, 108, 8>}, {pipeline_mode = #tpu.pipeline_mode<synchronous>, transform_indices = @transform_1, window_bounds = array<i64: 8, 108>}, {pipeline_mode = #tpu.pipeline_mode<synchronous>, transform_indices = @transform_2, window_bounds = array<i64: 8, 1>}, {transform_indices = @transform_3, window_bounds = array<i64: 1>}, {transform_indices = @transform_4, window_bounds = array<i64: 1, 8, 8>}]} {
    %c0 = arith.constant 0 : index
    %c0_0 = arith.constant 0 : index
    %0 = vector.load %arg2[%c0, %c0_0] : memref<8x108xbf16, #tpu.memory_space<vmem>>, vector<8x108xbf16>
    %c0_1 = arith.constant 0 : index
    %c0_2 = arith.constant 0 : index
    %c0_3 = arith.constant 0 : index
    %1 = vector.load %arg1[%c0_1, %c0_2, %c0_3] : memref<1x108x8xbf16, #tpu.memory_space<vmem>>, vector<1x108x8xbf16>
    %2 = vector.shape_cast %1 : vector<1x108x8xbf16> to vector<108x8xbf16>
    %cst = arith.constant dense<0.000000e+00> : vector<8x8xf32>
    %3 = tpu.matmul %0, %2, %cst {dimension_numbers = #tpu.dot_dimension_numbers<[1], [0], [0], [1], [0, 0, 1, 1], [], []>} : vector<8x108xbf16>, vector<108x8xbf16>, vector<8x8xf32> -> vector<8x8xf32>
    %c0_4 = arith.constant 0 : index
    %c0_5 = arith.constant 0 : index
    %4 = vector.load %arg3[%c0_4, %c0_5] : memref<8x1xf32, #tpu.memory_space<vmem>>, vector<8x1xf32>
    %5 = vector.broadcast %4 : vector<8x1xf32> to vector<8x8xf32>
    %6 = arith.addf %3, %5 : vector<8x8xf32>
    %cst_6 = arith.constant dense<0.000000e+00> : vector<8xf32>
    %7 = vector.multi_reduction <add>, %6, %cst_6 [1] : vector<8x8xf32> to vector<8xf32>
    %8 = vector.shape_cast %7 : vector<8xf32> to vector<8x1xf32>
    %cst_7 = arith.constant 8.000000e+00 : f32
    %9 = vector.broadcast %cst_7 : f32 to vector<8x1xf32>
    %10 = arith.divf %8, %9 : vector<8x1xf32>
    %11 = vector.broadcast %10 : vector<8x1xf32> to vector<8x8xf32>
    %12 = arith.subf %6, %11 : vector<8x8xf32>
    %13 = arith.mulf %12, %12 : vector<8x8xf32>
    %cst_8 = arith.constant dense<0.000000e+00> : vector<8xf32>
    %14 = vector.multi_reduction <add>, %13, %cst_8 [1] : vector<8x8xf32> to vector<8xf32>
    %15 = vector.shape_cast %14 : vector<8xf32> to vector<8x1xf32>
    %cst_9 = arith.constant 8.000000e+00 : f32
    %16 = vector.broadcast %cst_9 : f32 to vector<8x1xf32>
    %17 = arith.divf %15, %16 : vector<8x1xf32>
    %cst_10 = arith.constant 9.99999974E-6 : f32
    %18 = vector.broadcast %cst_10 : f32 to vector<8x1xf32>
    %19 = arith.addf %17, %18 : vector<8x1xf32>
    %20 = math.rsqrt %19 : vector<8x1xf32>
    %21 = vector.broadcast %20 : vector<8x1xf32> to vector<8x8xf32>
    %22 = arith.mulf %12, %21 : vector<8x8xf32>
    %c0_11 = arith.constant 0 : index
    %23 = memref.load %arg4[%c0_11] : memref<1xf32, #tpu.memory_space<smem>>
    %cst_12 = arith.constant 0.000000e+00 : f32
    %24 = vector.broadcast %cst_12 : f32 to vector<8x8xf32>
    %25 = arith.cmpf oge, %22, %24 : vector<8x8xf32>
    %26 = vector.broadcast %23 : f32 to vector<8x8xf32>
    %27 = arith.mulf %26, %22 : vector<8x8xf32>
    %28 = arith.select %25, %22, %27 : vector<8x8xi1>, vector<8x8xf32>
    %c0_13 = arith.constant 0 : index
    %c0_14 = arith.constant 0 : index
    %c0_15 = arith.constant 0 : index
    %29 = vector.load %arg5[%c0_13, %c0_14, %c0_15] : memref<1x8x8xf32, #tpu.memory_space<vmem>>, vector<1x8x8xf32>
    %30 = vector.shape_cast %29 : vector<1x8x8xf32> to vector<8x8xf32>
    %31 = vector.shape_cast %28 : vector<8x8xf32> to vector<1x8x8xf32>
    tpu.vector_store %arg5[%c0_13, %c0_14, %c0_15], %31 {strides = array<i32>} : memref<1x8x8xf32, #tpu.memory_space<vmem>>, vector<1x8x8xf32>,
    return
  }
  func.func @transform_0(%arg0: i32) -> (i32, i32, i32) {
    %c0_i32 = arith.constant 0 : i32
    %c0_i32_0 = arith.constant 0 : i32
    %c0_i32_1 = arith.constant 0 : i32
    return %arg0, %c0_i32, %c0_i32_0 : i32, i32, i32
  }
  func.func @transform_1(%arg0: i32) -> (i32, i32) {
    %c0_i32 = arith.constant 0 : i32
    %c0_i32_0 = arith.constant 0 : i32
    %c0_i32_1 = arith.constant 0 : i32
    return %c0_i32, %c0_i32_0 : i32, i32
  }
  func.func @transform_2(%arg0: i32) -> (i32, i32) {
    %c0_i32 = arith.constant 0 : i32
    %c0_i32_0 = arith.constant 0 : i32
    %c0_i32_1 = arith.constant 0 : i32
    return %c0_i32, %c0_i32_0 : i32, i32
  }
  func.func @transform_3(%arg0: i32) -> i32 {
    %c0_i32 = arith.constant 0 : i32
    %c0_i32_0 = arith.constant 0 : i32
    return %c0_i32 : i32
  }
  func.func @transform_4(%arg0: i32) -> (i32, i32, i32) {
    %c0_i32 = arith.constant 0 : i32
    %c0_i32_0 = arith.constant 0 : i32
    %c0_i32_1 = arith.constant 0 : i32
    return %arg0, %c0_i32, %c0_i32_0 : i32, i32, i32
  }
}

module attributes {stable_mosaic.version = 11 : i64} {
  func.func @_fused_gemm_kernel(%arg0: i32, %arg1: memref<1x216x8xbf16, #tpu.memory_space<vmem>>, %arg2: memref<16x216xbf16, #tpu.memory_space<vmem>>, %arg3: memref<16x1xf32, #tpu.memory_space<vmem>>, %arg4: memref<1xf32, #tpu.memory_space<smem>>, %arg5: memref<1x16x8xf32, #tpu.memory_space<vmem>>) attributes {dimension_semantics = [#tpu.dimension_semantics<parallel>], iteration_bounds = array<i64: 2>, scalar_prefetch = 0 : i64, scratch_operands = 0 : i64, tpu.core_type = #tpu.core_type<tc>, window_params = [{transform_indices = @transform_0, window_bounds = array<i64: 1, 216, 8>}, {pipeline_mode = #tpu.pipeline_mode<synchronous>, transform_indices = @transform_1, window_bounds = array<i64: 16, 216>}, {pipeline_mode = #tpu.pipeline_mode<synchronous>, transform_indices = @transform_2, window_bounds = array<i64: 16, 1>}, {transform_indices = @transform_3, window_bounds = array<i64: 1>}, {transform_indices = @transform_4, window_bounds = array<i64: 1, 16, 8>}]} {
    %c0 = arith.constant 0 : index
    %c0_0 = arith.constant 0 : index
    %0 = vector.load %arg2[%c0, %c0_0] : memref<16x216xbf16, #tpu.memory_space<vmem>>, vector<16x216xbf16>
    %c0_1 = arith.constant 0 : index
    %c0_2 = arith.constant 0 : index
    %c0_3 = arith.constant 0 : index
    %1 = vector.load %arg1[%c0_1, %c0_2, %c0_3] : memref<1x216x8xbf16, #tpu.memory_space<vmem>>, vector<1x216x8xbf16>
    %2 = vector.shape_cast %1 : vector<1x216x8xbf16> to vector<216x8xbf16>
    %cst = arith.constant dense<0.000000e+00> : vector<16x8xf32>
    %3 = tpu.matmul %0, %2, %cst {dimension_numbers = #tpu.dot_dimension_numbers<[1], [0], [0], [1], [0, 0, 1, 1], [], []>} : vector<16x216xbf16>, vector<216x8xbf16>, vector<16x8xf32> -> vector<16x8xf32>
    %c0_4 = arith.constant 0 : index
    %c0_5 = arith.constant 0 : index
    %4 = vector.load %arg3[%c0_4, %c0_5] : memref<16x1xf32, #tpu.memory_space<vmem>>, vector<16x1xf32>
    %5 = vector.broadcast %4 : vector<16x1xf32> to vector<16x8xf32>
    %6 = arith.addf %3, %5 : vector<16x8xf32>
    %cst_6 = arith.constant dense<0.000000e+00> : vector<16xf32>
    %7 = vector.multi_reduction <add>, %6, %cst_6 [1] : vector<16x8xf32> to vector<16xf32>
    %8 = vector.shape_cast %7 : vector<16xf32> to vector<16x1xf32>
    %cst_7 = arith.constant 8.000000e+00 : f32
    %9 = vector.broadcast %cst_7 : f32 to vector<16x1xf32>
    %10 = arith.divf %8, %9 : vector<16x1xf32>
    %11 = vector.broadcast %10 : vector<16x1xf32> to vector<16x8xf32>
    %12 = arith.subf %6, %11 : vector<16x8xf32>
    %13 = arith.mulf %12, %12 : vector<16x8xf32>
    %cst_8 = arith.constant dense<0.000000e+00> : vector<16xf32>
    %14 = vector.multi_reduction <add>, %13, %cst_8 [1] : vector<16x8xf32> to vector<16xf32>
    %15 = vector.shape_cast %14 : vector<16xf32> to vector<16x1xf32>
    %cst_9 = arith.constant 8.000000e+00 : f32
    %16 = vector.broadcast %cst_9 : f32 to vector<16x1xf32>
    %17 = arith.divf %15, %16 : vector<16x1xf32>
    %cst_10 = arith.constant 9.99999974E-6 : f32
    %18 = vector.broadcast %cst_10 : f32 to vector<16x1xf32>
    %19 = arith.addf %17, %18 : vector<16x1xf32>
    %20 = math.rsqrt %19 : vector<16x1xf32>
    %21 = vector.broadcast %20 : vector<16x1xf32> to vector<16x8xf32>
    %22 = arith.mulf %12, %21 : vector<16x8xf32>
    %c0_11 = arith.constant 0 : index
    %23 = memref.load %arg4[%c0_11] : memref<1xf32, #tpu.memory_space<smem>>
    %cst_12 = arith.constant 0.000000e+00 : f32
    %24 = vector.broadcast %cst_12 : f32 to vector<16x8xf32>
    %25 = arith.cmpf oge, %22, %24 : vector<16x8xf32>
    %26 = vector.broadcast %23 : f32 to vector<16x8xf32>
    %27 = arith.mulf %26, %22 : vector<16x8xf32>
    %28 = arith.select %25, %22, %27 : vector<16x8xi1>, vector<16x8xf32>
    %c0_13 = arith.constant 0 : index
    %c0_14 = arith.constant 0 : index
    %c0_15 = arith.constant 0 : index
    %29 = vector.load %arg5[%c0_13, %c0_14, %c0_15] : memref<1x16x8xf32, #tpu.memory_space<vmem>>, vector<1x16x8xf32>
    %30 = vector.shape_cast %29 : vector<1x16x8xf32> to vector<16x8xf32>
    %31 = vector.shape_cast %28 : vector<16x8xf32> to vector<1x16x8xf32>
    tpu.vector_store %arg5[%c0_13, %c0_14, %c0_15], %31 {strides = array<i32>} : memref<1x16x8xf32, #tpu.memory_space<vmem>>, vector<1x16x8xf32>,
    return
  }
  func.func @transform_0(%arg0: i32) -> (i32, i32, i32) {
    %c0_i32 = arith.constant 0 : i32
    %c0_i32_0 = arith.constant 0 : i32
    %c0_i32_1 = arith.constant 0 : i32
    return %arg0, %c0_i32, %c0_i32_0 : i32, i32, i32
  }
  func.func @transform_1(%arg0: i32) -> (i32, i32) {
    %c0_i32 = arith.constant 0 : i32
    %c0_i32_0 = arith.constant 0 : i32
    %c0_i32_1 = arith.constant 0 : i32
    return %c0_i32, %c0_i32_0 : i32, i32
  }
  func.func @transform_2(%arg0: i32) -> (i32, i32) {
    %c0_i32 = arith.constant 0 : i32
    %c0_i32_0 = arith.constant 0 : i32
    %c0_i32_1 = arith.constant 0 : i32
    return %c0_i32, %c0_i32_0 : i32, i32
  }
  func.func @transform_3(%arg0: i32) -> i32 {
    %c0_i32 = arith.constant 0 : i32
    %c0_i32_0 = arith.constant 0 : i32
    return %c0_i32 : i32
  }
  func.func @transform_4(%arg0: i32) -> (i32, i32, i32) {
    %c0_i32 = arith.constant 0 : i32
    %c0_i32_0 = arith.constant 0 : i32
    %c0_i32_1 = arith.constant 0 : i32
    return %arg0, %c0_i32, %c0_i32_0 : i32, i32, i32
  }
}

module attributes {stable_mosaic.version = 11 : i64} {
  func.func @_fused_gemm_kernel(%arg0: i32, %arg1: memref<1x192x8xbf16, #tpu.memory_space<vmem>>, %arg2: memref<32x192xbf16, #tpu.memory_space<vmem>>, %arg3: memref<32x1xf32, #tpu.memory_space<vmem>>, %arg4: memref<1xf32, #tpu.memory_space<smem>>, %arg5: memref<1x32x8xf32, #tpu.memory_space<vmem>>) attributes {dimension_semantics = [#tpu.dimension_semantics<parallel>], iteration_bounds = array<i64: 2>, scalar_prefetch = 0 : i64, scratch_operands = 0 : i64, tpu.core_type = #tpu.core_type<tc>, window_params = [{transform_indices = @transform_0, window_bounds = array<i64: 1, 192, 8>}, {pipeline_mode = #tpu.pipeline_mode<synchronous>, transform_indices = @transform_1, window_bounds = array<i64: 32, 192>}, {pipeline_mode = #tpu.pipeline_mode<synchronous>, transform_indices = @transform_2, window_bounds = array<i64: 32, 1>}, {transform_indices = @transform_3, window_bounds = array<i64: 1>}, {transform_indices = @transform_4, window_bounds = array<i64: 1, 32, 8>}]} {
    %c0 = arith.constant 0 : index
    %c0_0 = arith.constant 0 : index
    %0 = vector.load %arg2[%c0, %c0_0] : memref<32x192xbf16, #tpu.memory_space<vmem>>, vector<32x192xbf16>
    %c0_1 = arith.constant 0 : index
    %c0_2 = arith.constant 0 : index
    %c0_3 = arith.constant 0 : index
    %1 = vector.load %arg1[%c0_1, %c0_2, %c0_3] : memref<1x192x8xbf16, #tpu.memory_space<vmem>>, vector<1x192x8xbf16>
    %2 = vector.shape_cast %1 : vector<1x192x8xbf16> to vector<192x8xbf16>
    %cst = arith.constant dense<0.000000e+00> : vector<32x8xf32>
    %3 = tpu.matmul %0, %2, %cst {dimension_numbers = #tpu.dot_dimension_numbers<[1], [0], [0], [1], [0, 0, 1, 1], [], []>} : vector<32x192xbf16>, vector<192x8xbf16>, vector<32x8xf32> -> vector<32x8xf32>
    %c0_4 = arith.constant 0 : index
    %c0_5 = arith.constant 0 : index
    %4 = vector.load %arg3[%c0_4, %c0_5] : memref<32x1xf32, #tpu.memory_space<vmem>>, vector<32x1xf32>
    %5 = vector.broadcast %4 : vector<32x1xf32> to vector<32x8xf32>
    %6 = arith.addf %3, %5 : vector<32x8xf32>
    %7 = tpu.iota {dimensions = array<i32: 0>} : vector<32x32xi32>
    %8 = tpu.iota {dimensions = array<i32: 1>} : vector<32x32xi32>
    %c4_i32 = arith.constant 4 : i32
    %c0_i32 = arith.constant 0 : i32
    %9 = arith.cmpi eq, %c4_i32, %c0_i32 : i32
    %c1_i32 = arith.constant 1 : i32
    %10 = arith.select %9, %c1_i32, %c4_i32 : i32
    %11 = vector.broadcast %10 : i32 to vector<32x32xi32>
    %12 = arith.remsi %7, %11 : vector<32x32xi32>
    %c0_i32_6 = arith.constant 0 : i32
    %13 = vector.broadcast %c0_i32_6 : i32 to vector<32x32xi32>
    %14 = arith.cmpi ne, %12, %13 : vector<32x32xi32>
    %c0_i32_7 = arith.constant 0 : i32
    %15 = vector.broadcast %c0_i32_7 : i32 to vector<32x32xi32>
    %16 = arith.cmpi slt, %12, %15 : vector<32x32xi32>
    %c0_i32_8 = arith.constant 0 : i32
    %17 = arith.cmpi slt, %10, %c0_i32_8 : i32
    %18 = vector.broadcast %17 : i1 to vector<32x32xi1>
    %19 = vector.broadcast %18 : vector<32x32xi1> to vector<32x32xi1>
    %20 = arith.xori %16, %19 : vector<32x32xi1>
    %21 = arith.andi %20, %14 : vector<32x32xi1>
    %22 = vector.broadcast %10 : i32 to vector<32x32xi32>
    %23 = arith.addi %12, %22 : vector<32x32xi32>
    %24 = arith.select %21, %23, %12 : vector<32x32xi1>, vector<32x32xi32>
    %c4_i32_9 = arith.constant 4 : i32
    %c0_i32_10 = arith.constant 0 : i32
    %25 = arith.cmpi eq, %c4_i32_9, %c0_i32_10 : i32
    %c1_i32_11 = arith.constant 1 : i32
    %26 = arith.select %25, %c1_i32_11, %c4_i32_9 : i32
    %27 = vector.broadcast %26 : i32 to vector<32x32xi32>
    %28 = arith.remsi %8, %27 : vector<32x32xi32>
    %c0_i32_12 = arith.constant 0 : i32
    %29 = vector.broadcast %c0_i32_12 : i32 to vector<32x32xi32>
    %30 = arith.cmpi ne, %28, %29 : vector<32x32xi32>
    %c0_i32_13 = arith.constant 0 : i32
    %31 = vector.broadcast %c0_i32_13 : i32 to vector<32x32xi32>
    %32 = arith.cmpi slt, %28, %31 : vector<32x32xi32>
    %c0_i32_14 = arith.constant 0 : i32
    %33 = arith.cmpi slt, %26, %c0_i32_14 : i32
    %34 = vector.broadcast %33 : i1 to vector<32x32xi1>
    %35 = vector.broadcast %34 : vector<32x32xi1> to vector<32x32xi1>
    %36 = arith.xori %32, %35 : vector<32x32xi1>
    %37 = arith.andi %36, %30 : vector<32x32xi1>
    %38 = vector.broadcast %26 : i32 to vector<32x32xi32>
    %39 = arith.addi %28, %38 : vector<32x32xi32>
    %40 = arith.select %37, %39, %28 : vector<32x32xi1>, vector<32x32xi32>
    %41 = arith.cmpi eq, %24, %40 : vector<32x32xi32>
    %42 = arith.extui %41 : vector<32x32xi1> to vector<32x32xi32>
    %43 = arith.sitofp %42 : vector<32x32xi32> to vector<32x32xf32>
    %cst_15 = arith.constant dense<0.000000e+00> : vector<32xf32>
    %44 = vector.multi_reduction <add>, %6, %cst_15 [1] : vector<32x8xf32> to vector<32xf32>
    %45 = vector.shape_cast %44 : vector<32xf32> to vector<32x1xf32>
    %cst_16 = arith.constant dense<0.000000e+00> : vector<32x1xf32>
    %46 = tpu.matmul %43, %45, %cst_16 {dimension_numbers = #tpu.dot_dimension_numbers<[1], [0], [0], [1], [0, 0, 1, 1], [], []>} : vector<32x32xf32>, vector<32x1xf32>, vector<32x1xf32> -> vector<32x1xf32>
    %cst_17 = arith.constant 1.562500e-02 : f32
    %47 = vector.broadcast %cst_17 : f32 to vector<32x1xf32>
    %48 = arith.mulf %46, %47 : vector<32x1xf32>
    %49 = vector.broadcast %48 : vector<32x1xf32> to vector<32x8xf32>
    %50 = arith.subf %6, %49 : vector<32x8xf32>
    %51 = arith.mulf %50, %50 : vector<32x8xf32>
    %cst_18 = arith.constant dense<0.000000e+00> : vector<32xf32>
    %52 = vector.multi_reduction <add>, %51, %cst_18 [1] : vector<32x8xf32> to vector<32xf32>
    %53 = vector.shape_cast %52 : vector<32xf32> to vector<32x1xf32>
    %cst_19 = arith.constant dense<0.000000e+00> : vector<32x1xf32>
    %54 = tpu.matmul %43, %53, %cst_19 {dimension_numbers = #tpu.dot_dimension_numbers<[1], [0], [0], [1], [0, 0, 1, 1], [], []>} : vector<32x32xf32>, vector<32x1xf32>, vector<32x1xf32> -> vector<32x1xf32>
    %cst_20 = arith.constant 1.562500e-02 : f32
    %55 = vector.broadcast %cst_20 : f32 to vector<32x1xf32>
    %56 = arith.mulf %54, %55 : vector<32x1xf32>
    %cst_21 = arith.constant 9.99999974E-6 : f32
    %57 = vector.broadcast %cst_21 : f32 to vector<32x1xf32>
    %58 = arith.addf %56, %57 : vector<32x1xf32>
    %59 = math.rsqrt %58 : vector<32x1xf32>
    %60 = vector.broadcast %59 : vector<32x1xf32> to vector<32x8xf32>
    %61 = arith.mulf %50, %60 : vector<32x8xf32>
    %c0_22 = arith.constant 0 : index
    %62 = memref.load %arg4[%c0_22] : memref<1xf32, #tpu.memory_space<smem>>
    %cst_23 = arith.constant 0.000000e+00 : f32
    %63 = vector.broadcast %cst_23 : f32 to vector<32x8xf32>
    %64 = arith.cmpf oge, %61, %63 : vector<32x8xf32>
    %65 = vector.broadcast %62 : f32 to vector<32x8xf32>
    %66 = arith.mulf %65, %61 : vector<32x8xf32>
    %67 = arith.select %64, %61, %66 : vector<32x8xi1>, vector<32x8xf32>
    %c0_24 = arith.constant 0 : index
    %c0_25 = arith.constant 0 : index
    %c0_26 = arith.constant 0 : index
    %68 = vector.load %arg5[%c0_24, %c0_25, %c0_26] : memref<1x32x8xf32, #tpu.memory_space<vmem>>, vector<1x32x8xf32>
    %69 = vector.shape_cast %68 : vector<1x32x8xf32> to vector<32x8xf32>
    %70 = vector.shape_cast %67 : vector<32x8xf32> to vector<1x32x8xf32>
    tpu.vector_store %arg5[%c0_24, %c0_25, %c0_26], %70 {strides = array<i32>} : memref<1x32x8xf32, #tpu.memory_space<vmem>>, vector<1x32x8xf32>,
    return
  }
  func.func @transform_0(%arg0: i32) -> (i32, i32, i32) {
    %c0_i32 = arith.constant 0 : i32
    %c0_i32_0 = arith.constant 0 : i32
    %c0_i32_1 = arith.constant 0 : i32
    return %arg0, %c0_i32, %c0_i32_0 : i32, i32, i32
  }
  func.func @transform_1(%arg0: i32) -> (i32, i32) {
    %c0_i32 = arith.constant 0 : i32
    %c0_i32_0 = arith.constant 0 : i32
    %c0_i32_1 = arith.constant 0 : i32
    return %c0_i32, %c0_i32_0 : i32, i32
  }
  func.func @transform_2(%arg0: i32) -> (i32, i32) {
    %c0_i32 = arith.constant 0 : i32
    %c0_i32_0 = arith.constant 0 : i32
    %c0_i32_1 = arith.constant 0 : i32
    return %c0_i32, %c0_i32_0 : i32, i32
  }
  func.func @transform_3(%arg0: i32) -> i32 {
    %c0_i32 = arith.constant 0 : i32
    %c0_i32_0 = arith.constant 0 : i32
    return %c0_i32 : i32
  }
  func.func @transform_4(%arg0: i32) -> (i32, i32, i32) {
    %c0_i32 = arith.constant 0 : i32
    %c0_i32_0 = arith.constant 0 : i32
    %c0_i32_1 = arith.constant 0 : i32
    return %arg0, %c0_i32, %c0_i32_0 : i32, i32, i32
  }
}

module attributes {stable_mosaic.version = 11 : i64} {
  func.func @_fused_gemm_kernel(%arg0: i32, %arg1: memref<1x64x64xbf16, #tpu.memory_space<vmem>>, %arg2: memref<32x64xbf16, #tpu.memory_space<vmem>>, %arg3: memref<32x1xf32, #tpu.memory_space<vmem>>, %arg4: memref<1xf32, #tpu.memory_space<smem>>, %arg5: memref<1x32x64xf32, #tpu.memory_space<vmem>>) attributes {dimension_semantics = [#tpu.dimension_semantics<parallel>], iteration_bounds = array<i64: 2>, scalar_prefetch = 0 : i64, scratch_operands = 0 : i64, tpu.core_type = #tpu.core_type<tc>, window_params = [{transform_indices = @transform_0, window_bounds = array<i64: 1, 64, 64>}, {pipeline_mode = #tpu.pipeline_mode<synchronous>, transform_indices = @transform_1, window_bounds = array<i64: 32, 64>}, {pipeline_mode = #tpu.pipeline_mode<synchronous>, transform_indices = @transform_2, window_bounds = array<i64: 32, 1>}, {transform_indices = @transform_3, window_bounds = array<i64: 1>}, {transform_indices = @transform_4, window_bounds = array<i64: 1, 32, 64>}]} {
    %c0 = arith.constant 0 : index
    %c0_0 = arith.constant 0 : index
    %0 = vector.load %arg2[%c0, %c0_0] : memref<32x64xbf16, #tpu.memory_space<vmem>>, vector<32x64xbf16>
    %c0_1 = arith.constant 0 : index
    %c0_2 = arith.constant 0 : index
    %c0_3 = arith.constant 0 : index
    %1 = vector.load %arg1[%c0_1, %c0_2, %c0_3] : memref<1x64x64xbf16, #tpu.memory_space<vmem>>, vector<1x64x64xbf16>
    %2 = vector.shape_cast %1 : vector<1x64x64xbf16> to vector<64x64xbf16>
    %cst = arith.constant dense<0.000000e+00> : vector<32x64xf32>
    %3 = tpu.matmul %0, %2, %cst {dimension_numbers = #tpu.dot_dimension_numbers<[1], [0], [0], [1], [0, 0, 1, 1], [], []>} : vector<32x64xbf16>, vector<64x64xbf16>, vector<32x64xf32> -> vector<32x64xf32>
    %c0_4 = arith.constant 0 : index
    %c0_5 = arith.constant 0 : index
    %4 = vector.load %arg3[%c0_4, %c0_5] : memref<32x1xf32, #tpu.memory_space<vmem>>, vector<32x1xf32>
    %5 = vector.broadcast %4 : vector<32x1xf32> to vector<32x64xf32>
    %6 = arith.addf %3, %5 : vector<32x64xf32>
    %c0_6 = arith.constant 0 : index
    %c0_7 = arith.constant 0 : index
    %c0_8 = arith.constant 0 : index
    %7 = vector.load %arg5[%c0_6, %c0_7, %c0_8] : memref<1x32x64xf32, #tpu.memory_space<vmem>>, vector<1x32x64xf32>
    %8 = vector.shape_cast %7 : vector<1x32x64xf32> to vector<32x64xf32>
    %9 = vector.shape_cast %6 : vector<32x64xf32> to vector<1x32x64xf32>
    tpu.vector_store %arg5[%c0_6, %c0_7, %c0_8], %9 {strides = array<i32>} : memref<1x32x64xf32, #tpu.memory_space<vmem>>, vector<1x32x64xf32>,
    return
  }
  func.func @transform_0(%arg0: i32) -> (i32, i32, i32) {
    %c0_i32 = arith.constant 0 : i32
    %c0_i32_0 = arith.constant 0 : i32
    %c0_i32_1 = arith.constant 0 : i32
    return %arg0, %c0_i32, %c0_i32_0 : i32, i32, i32
  }
  func.func @transform_1(%arg0: i32) -> (i32, i32) {
    %c0_i32 = arith.constant 0 : i32
    %c0_i32_0 = arith.constant 0 : i32
    %c0_i32_1 = arith.constant 0 : i32
    return %c0_i32, %c0_i32_0 : i32, i32
  }
  func.func @transform_2(%arg0: i32) -> (i32, i32) {
    %c0_i32 = arith.constant 0 : i32
    %c0_i32_0 = arith.constant 0 : i32
    %c0_i32_1 = arith.constant 0 : i32
    return %c0_i32, %c0_i32_0 : i32, i32
  }
  func.func @transform_3(%arg0: i32) -> i32 {
    %c0_i32 = arith.constant 0 : i32
    %c0_i32_0 = arith.constant 0 : i32
    return %c0_i32 : i32
  }
  func.func @transform_4(%arg0: i32) -> (i32, i32, i32) {
    %c0_i32 = arith.constant 0 : i32
    %c0_i32_0 = arith.constant 0 : i32
    %c0_i32_1 = arith.constant 0 : i32
    return %arg0, %c0_i32, %c0_i32_0 : i32, i32, i32
  }
}

</mosaic_0001>

<llo_original>
// kernel: multi_head_unet_forward.5
$region0: #{multi_head_unet_forward.5}
  #allocation0 [shape = 'u32[]', space=smem, size = 0x4, offset = 0x4, fixed_abs, tag = 'smem constant byte address 0x4 - core index']
  #allocation1 [shape = 'u32[72,128]{1,0:T(1,128)}', space=vmem, size = 0x9000, scoped, tag = 'internal scratch']
  #allocation2 [shape = 'f32[1]{0:T(128)S(6)}', space=smem, size = 0x200, scoped, tag = 'scoped memory for multi_head_unet_forward.5']
  %s0 = inlined_call_operand.vmem [shape: bf16[2,27,64], index: 0, kind: input, shape index: {}]
  %s1 = inlined_call_operand.vmem [shape: bf16[4,27], index: 1, kind: input, shape index: {}]
  %s2 = inlined_call_operand.vmem [shape: f32[4,1], index: 2, kind: input, shape index: {}]
  %s3 = inlined_call_operand.<no memory space> [shape: f32[1], index: 3, kind: input, shape index: {}]
  %s4 = inlined_call_operand.vmem [shape: f32[2,4,64], index: 4, kind: output, shape index: {}]
  %s5 = sld [smem:[#allocation0]]
  $region49: #{multi_head_unet_forward.5} parent=0
    _
  %s7 = ssub.s32 1, %s5
  %s8 = scalar_select 0, %s7, %s5
  %9 = sst [smem:[#allocation2]] %s3
  loop: start=0, step=1, limit=4
  $region2: #{multi_head_unet_forward.5} parent=0 // loop_pre_header
    _
  $region3: #{multi_head_unet_forward.5} parent=0 // loop_header
    %s11 = sphi 0, %s15
    %p12 = scmp.ge.s32.totalorder %s11, 4
    %s21 = sphi 0, %s23
    %s24 = sphi 0, %s21
    %s25 = sphi 0, %s24
    %s41 = sphi 0, %s25
    %s45 = sphi 0, %s45
    %s47 = sphi 0, %s45
    %s48 = sphi 0, %s47
    %s62 = sphi 0, %s48
    %s66 = sphi 0, %s66
    %s68 = sphi 0, %s66
    %s69 = sphi 0, %s68
    %s83 = sphi 0, %s69
    %s87 = sphi 0, %s87
    %s89 = sphi 0, %s87
    %s90 = sphi 0, %s89
    %s104 = sphi 0, %s90
    %s110 = sphi 0, %s112
    %s113 = sphi 0, %s110
    %s114 = sphi 0, %s113
    %s130 = sphi 0, %s114
  $region4: #{multi_head_unet_forward.5} parent=0 // loop_header_branch
    %14 = sbr.rel (%p12) target = $region8
  $region5: #{multi_head_unet_forward.5} parent=0 // loop_body
    %s16 = ssub.s32 %s11, 1
    %s17 = ssub.s32 %s11, 2
    %s18 = sadd.s32 %s11, 1
    %s19 = ssub.s32 %s11, %s18
    %p20 = scmp.eq.s32.totalorder %s19, 0
    %s22 = sadd.s32 %s21, 1
    %s23 = scalar_select %p20, %s21, %s22
    %p26 = pneg %p20
    %p27 = scmp.eq.s32.totalorder %s11, 1
    %p28 = por %p26, %p27
    %p29 = scmp.ne.s32.totalorder %s21, %s24
    %p30 = scmp.eq.s32.totalorder %s11, 0
    %p31 = por %p29, %p30
    %p32 = scmp.ne.s32.totalorder %s21, %s24
    %p33 = scmp.eq.s32.totalorder %s16, 1
    %p34 = por %p32, %p33
    %p35 = scmp.ne.s32.totalorder %s24, %s25
    %p36 = scmp.eq.s32.totalorder %s16, 0
    %p37 = por %p35, %p36
    %p38 = scmp.ne.s32.totalorder %s24, %s25
    %p39 = scmp.eq.s32.totalorder %s17, 1
    %p40 = por %p38, %p39
    %p42 = scmp.ne.s32.totalorder %s25, %s41
    %p43 = scmp.eq.s32.totalorder %s17, 0
    %p44 = por %p42, %p43
    %s46 = sadd.s32 %s45, 1
    %p49 = scmp.eq.s32.totalorder %s11, 1
    %p50 = scmp.ne.s32.totalorder %s45, %s47
    %p51 = scmp.eq.s32.totalorder %s11, 0
    %p52 = por %p50, %p51
    %p53 = scmp.ne.s32.totalorder %s45, %s47
    %p54 = scmp.eq.s32.totalorder %s16, 1
    %p55 = por %p53, %p54
    %p56 = scmp.ne.s32.totalorder %s47, %s48
    %p57 = scmp.eq.s32.totalorder %s16, 0
    %p58 = por %p56, %p57
    %p59 = scmp.ne.s32.totalorder %s47, %s48
    %p60 = scmp.eq.s32.totalorder %s17, 1
    %p61 = por %p59, %p60
    %p63 = scmp.ne.s32.totalorder %s48, %s62
    %p64 = scmp.eq.s32.totalorder %s17, 0
    %p65 = por %p63, %p64
    %s67 = sadd.s32 %s66, 1
    %p70 = scmp.eq.s32.totalorder %s11, 1
    %p71 = scmp.ne.s32.totalorder %s66, %s68
    %p72 = scmp.eq.s32.totalorder %s11, 0
    %p73 = por %p71, %p72
    %p74 = scmp.ne.s32.totalorder %s66, %s68
    %p75 = scmp.eq.s32.totalorder %s16, 1
    %p76 = por %p74, %p75
    %p77 = scmp.ne.s32.totalorder %s68, %s69
    %p78 = scmp.eq.s32.totalorder %s16, 0
    %p79 = por %p77, %p78
    %p80 = scmp.ne.s32.totalorder %s68, %s69
    %p81 = scmp.eq.s32.totalorder %s17, 1
    %p82 = por %p80, %p81
    %p84 = scmp.ne.s32.totalorder %s69, %s83
    %p85 = scmp.eq.s32.totalorder %s17, 0
    %p86 = por %p84, %p85
    %s88 = sadd.s32 %s87, 1
    %p91 = scmp.eq.s32.totalorder %s11, 1
    %p92 = scmp.ne.s32.totalorder %s87, %s89
    %p93 = scmp.eq.s32.totalorder %s11, 0
    %p94 = por %p92, %p93
    %p95 = scmp.ne.s32.totalorder %s87, %s89
    %p96 = scmp.eq.s32.totalorder %s16, 1
    %p97 = por %p95, %p96
    %p98 = scmp.ne.s32.totalorder %s89, %s90
    %p99 = scmp.eq.s32.totalorder %s16, 0
    %p100 = por %p98, %p99
    %p101 = scmp.ne.s32.totalorder %s89, %s90
    %p102 = scmp.eq.s32.totalorder %s17, 1
    %p103 = por %p101, %p102
    %p105 = scmp.ne.s32.totalorder %s90, %s104
    %p106 = scmp.eq.s32.totalorder %s17, 0
    %p107 = por %p105, %p106
    %s108 = ssub.s32 %s11, %s18
    %p109 = scmp.eq.s32.totalorder %s108, 0
    %s111 = sadd.s32 %s110, 1
    %s112 = scalar_select %p109, %s110, %s111
    %p115 = pneg %p109
    %p116 = scmp.eq.s32.totalorder %s11, 1
    %p117 = por %p115, %p116
    %p118 = scmp.ne.s32.totalorder %s110, %s113
    %p119 = scmp.eq.s32.totalorder %s11, 0
    %p120 = por %p118, %p119
    %p121 = scmp.ne.s32.totalorder %s110, %s113
    %p122 = scmp.eq.s32.totalorder %s16, 1
    %p123 = por %p121, %p122
    %p124 = scmp.ne.s32.totalorder %s113, %s114
    %p125 = scmp.eq.s32.totalorder %s16, 0
    %p126 = por %p124, %p125
    %p127 = scmp.ne.s32.totalorder %s113, %s114
    %p128 = scmp.eq.s32.totalorder %s17, 1
    %p129 = por %p127, %p128
    %p131 = scmp.ne.s32.totalorder %s114, %s130
    %p132 = scmp.eq.s32.totalorder %s17, 0
    %p133 = por %p131, %p132
    %p134 = scmp.le.s32.totalorder 1, %s11
    %p135 = scmp.lt.s32.totalorder %s11, 3
    %p136 = pnand %p134, %p135
    %p137 = pneg %p136
    // Predicated region
    $region9: #{multi_head_unet_forward.5} parent=5 // pred_check
      _
    $region10: #{multi_head_unet_forward.5} parent=5 // pred_check_branch
      %139 = sbr.rel (%p136) target = $region12
    $region11: #{multi_head_unet_forward.5} parent=5 // pred_region
      %s140 = ssub.s32 %s11, 1
      // Predicated region
      $region13: #{multi_head_unet_forward.5} parent=11 // pred_check
        %p141 = pneg %p58
      $region14: #{multi_head_unet_forward.5} parent=11 // pred_check_branch
        %143 = sbr.rel (%p141) target = $region16
      $region15: #{multi_head_unet_forward.5} parent=11 // pred_region
        _
      $region16: #{multi_head_unet_forward.5} parent=11 // pred_fallthru
        _
      // Predicated region
      $region17: #{multi_head_unet_forward.5} parent=11 // pred_check
        %p144 = pneg %p79
      $region18: #{multi_head_unet_forward.5} parent=11 // pred_check_branch
        %146 = sbr.rel (%p144) target = $region20
      $region19: #{multi_head_unet_forward.5} parent=11 // pred_region
        _
      $region20: #{multi_head_unet_forward.5} parent=11 // pred_fallthru
        _
      // Predicated region
      $region21: #{multi_head_unet_forward.5} parent=11 // pred_check
        %p147 = pneg %p100
      $region22: #{multi_head_unet_forward.5} parent=11 // pred_check_branch
        %149 = sbr.rel (%p147) target = $region24
      $region23: #{multi_head_unet_forward.5} parent=11 // pred_region
        _
      $region24: #{multi_head_unet_forward.5} parent=11 // pred_fallthru
        _
    $region12: #{multi_head_unet_forward.5} parent=5 // pred_fallthru
      _
    %p150 = scmp.lt.s32.totalorder %s11, 2
    // Predicated region
    $region25: #{multi_head_unet_forward.5} parent=5 // pred_check
      %p151 = pneg %p150
    $region26: #{multi_head_unet_forward.5} parent=5 // pred_check_branch
      %153 = sbr.rel (%p151) target = $region28
    $region27: #{multi_head_unet_forward.5} parent=5 // pred_region
      // Predicated region
      $region29: #{multi_head_unet_forward.5} parent=27 // pred_check
        %p154 = pneg %p31
      $region30: #{multi_head_unet_forward.5} parent=27 // pred_check_branch
        %156 = sbr.rel (%p154) target = $region32
      $region31: #{multi_head_unet_forward.5} parent=27 // pred_region
        %p157 = scmp.lt.s32.totalorder %s11, 1
        %s158 = scalar_select %p157, %s11, 1
        %s159 = smul.addr %s158, 4
        %s160 = smul.addr %s159, 4
        %s161 = scalar_lea.vmem %s0, %s160
      $region32: #{multi_head_unet_forward.5} parent=27 // pred_fallthru
        _
    $region28: #{multi_head_unet_forward.5} parent=5 // pred_fallthru
      _
    %p162 = scmp.le.s32.totalorder 1, %s11
    %p163 = scmp.lt.s32.totalorder %s11, 3
    %p164 = pnand %p162, %p163
    %p165 = pneg %p164
    // Predicated region
    $region33: #{multi_head_unet_forward.5} parent=5 // pred_check
      _
    $region34: #{multi_head_unet_forward.5} parent=5 // pred_check_branch
      %167 = sbr.rel (%p164) target = $region36
    $region35: #{multi_head_unet_forward.5} parent=5 // pred_region
      %s168 = ssub.s32 %s11, 1
      %p169 = scmp.lt.s32.totalorder %s16, 1
      %s170 = scalar_select %p169, %s16, 1
      %s171 = smul.addr %s170, 4
      %s172 = smul.addr %s171, 4
      %s173 = scalar_lea.vmem %s0, %s172
      %p174 = pneg %p37
      %p175 = pneg %p34
      %p176 = pneg %p58
      %p177 = pneg %p55
      %p178 = pneg %p79
      %p179 = pneg %p76
      %p180 = pneg %p100
      %p181 = pneg %p97
      %p182 = pneg %p126
      %p183 = pneg %p123
      %p184 = scmp.lt.s32.totalorder %s16, 1
      %s185 = scalar_select %p184, %s16, 1
      %s186 = smul.addr %s185, 4
      %s187 = scalar_lea.vmem %s4, %s186
      %p188 = scmp.lt.s32.totalorder %s16, 1
      %s189 = scalar_select %p188, %s16, 1
      %s190 = smul.addr %s189, 4
      %s191 = smul.addr %s190, 4
      %s192 = scalar_lea.vmem %s0, %s191
      %p193 = scmp.lt.s32.totalorder %s16, 1
      %s194 = scalar_select %p193, %s16, 1
      %s195 = smul.addr %s194, 4
      %s196 = scalar_lea.vmem %s4, %s195
      %v198 = vld [vmem:[%s1] sm:$0x3]
      %v199 = vld [vmem:[%s192] sm:$0xf]
      %v200 = vld [vmem:[%s192 + $0x4] sm:$0xf]
      %v201 = vld [vmem:[%s192 + $0x8] sm:$0xf]
      %v202 = vld [vmem:[%s192 + $0xc] sm:$0x3]
      %v203 = vld [vmem:[%s2] sm:$0xf]
      %205 = vset.pattern.permute.xlu0 0
      %206 = vperm.xlu0 %205, %v203
      %v207 = vpop.permute.xlu0 %206
      %v213 = vunpack.c.l.b16 %v199
      %v214 = vunpack.c.l.b16 %v200
      %v215 = vunpack.c.l.b16 %v201
      %v216 = vunpack.c.l.b16 %v202
      %v217 = vpack.c.b16 %v214, %v213
      %v218 = vpack.c.b16 %v216, %v215
      %vm220 = vcmask 220160
      %v222 = vsel %vm220, %v198, 0
      %vm224 = vcmask 1044480
      %vm225 = vcmask 1045504
      %v226 = vsel %vm224, 4294967295, 65535
      %v227 = vsel %vm225, %v226, 0
      %v229 = vand.u32 %v218, %v227
      %231 = vmatpush.bf16.msra.mxu0 0
      %232 = vmatpush.bf16.msra.mxu0 0
      %233 = vmatpush.bf16.msra.mxu0 0
      %234 = vmatpush.bf16.msra.mxu0 0
      %235 = vmatpush.bf16.msra.mxu0 0
      %236 = vmatpush.bf16.msra.mxu0 0
      %237 = vmatpush.bf16.msra.mxu0 %v229
      %238 = vmatpush.bf16.msra.mxu0 %v217
      %239 = vmatmul.bf16.gmra.mxu0 %v222
      %v240 = vpop.f32.mrf.mxu0
      %v241 = vadd.f32 %v207, %v240
      %v242 = vpop.f32.mrf.mxu0
      %243 = vdwg.mxu0
      %vm244 = vcmask 519168
      %v245 = vsel %vm244, %v241, 0.0
      %246 = vadd.xlane.f32.xlu0 %v245
      %v247 = vpop.xlane.xlu0 %246
      %v248 = vrcp.pop 64.0
      %v249 = vmul.f32 64.0, %v248
      %v250 = vsub.f32 1.0, %v249
      %v251 = vmul.f32 %v248, %v250
      %v252 = vadd.f32 %v248, %v251
      %vm253 = vweird.f32 %v248
      %v254 = vsel %vm253, %v248, %v252
      %v255 = vmul.f32 %v247, %v254
      %v256 = vsub.f32 %v241, %v255
      %v257 = vmul.f32 %v256, %v256
      %v258 = vsel %vm244, %v257, 0.0
      %259 = vadd.xlane.f32.xlu0 %v258
      %v260 = vpop.xlane.xlu0 %259
      %v261 = vmul.f32 %v260, %v254
      %v262 = vadd.f32 %v261, 1e-05
      %v263 = vrsqrt.pop %v262
      %v264 = vmul.f32 %v263, %v262
      %v265 = vmul.f32 %v264, %v263
      %v266 = vmul.f32 0.5, %v265
      %v267 = vsub.f32 1.5, %v266
      %v268 = vmul.f32 %v263, %v267
      %vm269 = vweird.f32 %v262
      %vm270 = vweird.f32 %v263
      %vm271 = vmor %vm269, %vm270
      %v272 = vsel %vm271, %v263, %v268
      %v273 = vmul.f32 %v256, %v272
      %s274 = sld [smem:[#allocation2]]
      %vm275 = vcmp.ge.f32.partialorder %v273, 0.0
      %v276 = vstv %s274
      %v277 = vmul.f32 %v276, %v273
      %v278 = vsel %vm275, %v273, %v277
      %279 = vst.msk [vmem:[%s196] sm:$0xf] %vm244, %v278
      %p280 = scmp.lt.s32.totalorder %s16, 1
      %s281 = scalar_select %p280, %s16, 1
      %s282 = smul.addr %s281, 4
      %s283 = scalar_lea.vmem %s4, %s282
      // Predicated region
      $region37: #{multi_head_unet_forward.5} parent=35 // pred_check
        %p284 = pneg %p123
      $region38: #{multi_head_unet_forward.5} parent=35 // pred_check_branch
        %286 = sbr.rel (%p284) target = $region40
      $region39: #{multi_head_unet_forward.5} parent=35 // pred_region
        _
      $region40: #{multi_head_unet_forward.5} parent=35 // pred_fallthru
        _
    $region36: #{multi_head_unet_forward.5} parent=5 // pred_fallthru
      _
    %p287 = scmp.le.s32.totalorder 2, %s11
    // Predicated region
    $region41: #{multi_head_unet_forward.5} parent=5 // pred_check
      %p288 = pneg %p287
    $region42: #{multi_head_unet_forward.5} parent=5 // pred_check_branch
      %290 = sbr.rel (%p288) target = $region44
    $region43: #{multi_head_unet_forward.5} parent=5 // pred_region
      %s291 = ssub.s32 %s11, 2
      // Predicated region
      $region45: #{multi_head_unet_forward.5} parent=43 // pred_check
        %p292 = pneg %p129
      $region46: #{multi_head_unet_forward.5} parent=43 // pred_check_branch
        %294 = sbr.rel (%p292) target = $region48
      $region47: #{multi_head_unet_forward.5} parent=43 // pred_region
        %p295 = scmp.lt.s32.totalorder %s17, 1
        %s296 = scalar_select %p295, %s17, 1
        %s297 = smul.addr %s296, 4
        %s298 = scalar_lea.vmem %s4, %s297
      $region48: #{multi_head_unet_forward.5} parent=43 // pred_fallthru
        _
    $region44: #{multi_head_unet_forward.5} parent=5 // pred_fallthru
      _
  $region6: #{multi_head_unet_forward.5} parent=0 // loop_footer
    %s15 = sadd.s32 1, %s11
  $region7: #{multi_head_unet_forward.5} parent=0 // loop_footer_branch
    %10 = sbr.rel target = $region3
  $region8: #{multi_head_unet_forward.5} parent=0 // loop_exit
    _

// kernel: multi_head_unet_forward.6
$region0: #{multi_head_unet_forward.6}
  #allocation0 [shape = 'u32[]', space=smem, size = 0x4, offset = 0x4, fixed_abs, tag = 'smem constant byte address 0x4 - core index']
  #allocation1 [shape = 'u32[72,128]{1,0:T(1,128)}', space=vmem, size = 0x9000, scoped, tag = 'internal scratch']
  #allocation2 [shape = 'f32[1]{0:T(128)S(6)}', space=smem, size = 0x200, scoped, tag = 'scoped memory for multi_head_unet_forward.6']
  %s0 = inlined_call_operand.vmem [shape: bf16[2,108,8], index: 0, kind: input, shape index: {}]
  %s1 = inlined_call_operand.vmem [shape: bf16[8,108], index: 1, kind: input, shape index: {}]
  %s2 = inlined_call_operand.vmem [shape: f32[8,1], index: 2, kind: input, shape index: {}]
  %s3 = inlined_call_operand.<no memory space> [shape: f32[1], index: 3, kind: input, shape index: {}]
  %s4 = inlined_call_operand.vmem [shape: f32[2,8,8], index: 4, kind: output, shape index: {}]
  %s5 = sld [smem:[#allocation0]]
  $region49: #{multi_head_unet_forward.6} parent=0
    _
  %s7 = ssub.s32 1, %s5
  %s8 = scalar_select 0, %s7, %s5
  %9 = sst [smem:[#allocation2]] %s3
  loop: start=0, step=1, limit=4
  $region2: #{multi_head_unet_forward.6} parent=0 // loop_pre_header
    _
  $region3: #{multi_head_unet_forward.6} parent=0 // loop_header
    %s11 = sphi 0, %s15
    %p12 = scmp.ge.s32.totalorder %s11, 4
    %s21 = sphi 0, %s23
    %s24 = sphi 0, %s21
    %s25 = sphi 0, %s24
    %s41 = sphi 0, %s25
    %s45 = sphi 0, %s45
    %s47 = sphi 0, %s45
    %s48 = sphi 0, %s47
    %s62 = sphi 0, %s48
    %s66 = sphi 0, %s66
    %s68 = sphi 0, %s66
    %s69 = sphi 0, %s68
    %s83 = sphi 0, %s69
    %s87 = sphi 0, %s87
    %s89 = sphi 0, %s87
    %s90 = sphi 0, %s89
    %s104 = sphi 0, %s90
    %s110 = sphi 0, %s112
    %s113 = sphi 0, %s110
    %s114 = sphi 0, %s113
    %s130 = sphi 0, %s114
  $region4: #{multi_head_unet_forward.6} parent=0 // loop_header_branch
    %14 = sbr.rel (%p12) target = $region8
  $region5: #{multi_head_unet_forward.6} parent=0 // loop_body
    %s16 = ssub.s32 %s11, 1
    %s17 = ssub.s32 %s11, 2
    %s18 = sadd.s32 %s11, 1
    %s19 = ssub.s32 %s11, %s18
    %p20 = scmp.eq.s32.totalorder %s19, 0
    %s22 = sadd.s32 %s21, 1
    %s23 = scalar_select %p20, %s21, %s22
    %p26 = pneg %p20
    %p27 = scmp.eq.s32.totalorder %s11, 1
    %p28 = por %p26, %p27
    %p29 = scmp.ne.s32.totalorder %s21, %s24
    %p30 = scmp.eq.s32.totalorder %s11, 0
    %p31 = por %p29, %p30
    %p32 = scmp.ne.s32.totalorder %s21, %s24
    %p33 = scmp.eq.s32.totalorder %s16, 1
    %p34 = por %p32, %p33
    %p35 = scmp.ne.s32.totalorder %s24, %s25
    %p36 = scmp.eq.s32.totalorder %s16, 0
    %p37 = por %p35, %p36
    %p38 = scmp.ne.s32.totalorder %s24, %s25
    %p39 = scmp.eq.s32.totalorder %s17, 1
    %p40 = por %p38, %p39
    %p42 = scmp.ne.s32.totalorder %s25, %s41
    %p43 = scmp.eq.s32.totalorder %s17, 0
    %p44 = por %p42, %p43
    %s46 = sadd.s32 %s45, 1
    %p49 = scmp.eq.s32.totalorder %s11, 1
    %p50 = scmp.ne.s32.totalorder %s45, %s47
    %p51 = scmp.eq.s32.totalorder %s11, 0
    %p52 = por %p50, %p51
    %p53 = scmp.ne.s32.totalorder %s45, %s47
    %p54 = scmp.eq.s32.totalorder %s16, 1
    %p55 = por %p53, %p54
    %p56 = scmp.ne.s32.totalorder %s47, %s48
    %p57 = scmp.eq.s32.totalorder %s16, 0
    %p58 = por %p56, %p57
    %p59 = scmp.ne.s32.totalorder %s47, %s48
    %p60 = scmp.eq.s32.totalorder %s17, 1
    %p61 = por %p59, %p60
    %p63 = scmp.ne.s32.totalorder %s48, %s62
    %p64 = scmp.eq.s32.totalorder %s17, 0
    %p65 = por %p63, %p64
    %s67 = sadd.s32 %s66, 1
    %p70 = scmp.eq.s32.totalorder %s11, 1
    %p71 = scmp.ne.s32.totalorder %s66, %s68
    %p72 = scmp.eq.s32.totalorder %s11, 0
    %p73 = por %p71, %p72
    %p74 = scmp.ne.s32.totalorder %s66, %s68
    %p75 = scmp.eq.s32.totalorder %s16, 1
    %p76 = por %p74, %p75
    %p77 = scmp.ne.s32.totalorder %s68, %s69
    %p78 = scmp.eq.s32.totalorder %s16, 0
    %p79 = por %p77, %p78
    %p80 = scmp.ne.s32.totalorder %s68, %s69
    %p81 = scmp.eq.s32.totalorder %s17, 1
    %p82 = por %p80, %p81
    %p84 = scmp.ne.s32.totalorder %s69, %s83
    %p85 = scmp.eq.s32.totalorder %s17, 0
    %p86 = por %p84, %p85
    %s88 = sadd.s32 %s87, 1
    %p91 = scmp.eq.s32.totalorder %s11, 1
    %p92 = scmp.ne.s32.totalorder %s87, %s89
    %p93 = scmp.eq.s32.totalorder %s11, 0
    %p94 = por %p92, %p93
    %p95 = scmp.ne.s32.totalorder %s87, %s89
    %p96 = scmp.eq.s32.totalorder %s16, 1
    %p97 = por %p95, %p96
    %p98 = scmp.ne.s32.totalorder %s89, %s90
    %p99 = scmp.eq.s32.totalorder %s16, 0
    %p100 = por %p98, %p99
    %p101 = scmp.ne.s32.totalorder %s89, %s90
    %p102 = scmp.eq.s32.totalorder %s17, 1
    %p103 = por %p101, %p102
    %p105 = scmp.ne.s32.totalorder %s90, %s104
    %p106 = scmp.eq.s32.totalorder %s17, 0
    %p107 = por %p105, %p106
    %s108 = ssub.s32 %s11, %s18
    %p109 = scmp.eq.s32.totalorder %s108, 0
    %s111 = sadd.s32 %s110, 1
    %s112 = scalar_select %p109, %s110, %s111
    %p115 = pneg %p109
    %p116 = scmp.eq.s32.totalorder %s11, 1
    %p117 = por %p115, %p116
    %p118 = scmp.ne.s32.totalorder %s110, %s113
    %p119 = scmp.eq.s32.totalorder %s11, 0
    %p120 = por %p118, %p119
    %p121 = scmp.ne.s32.totalorder %s110, %s113
    %p122 = scmp.eq.s32.totalorder %s16, 1
    %p123 = por %p121, %p122
    %p124 = scmp.ne.s32.totalorder %s113, %s114
    %p125 = scmp.eq.s32.totalorder %s16, 0
    %p126 = por %p124, %p125
    %p127 = scmp.ne.s32.totalorder %s113, %s114
    %p128 = scmp.eq.s32.totalorder %s17, 1
    %p129 = por %p127, %p128
    %p131 = scmp.ne.s32.totalorder %s114, %s130
    %p132 = scmp.eq.s32.totalorder %s17, 0
    %p133 = por %p131, %p132
    %p134 = scmp.le.s32.totalorder 1, %s11
    %p135 = scmp.lt.s32.totalorder %s11, 3
    %p136 = pnand %p134, %p135
    %p137 = pneg %p136
    // Predicated region
    $region9: #{multi_head_unet_forward.6} parent=5 // pred_check
      _
    $region10: #{multi_head_unet_forward.6} parent=5 // pred_check_branch
      %139 = sbr.rel (%p136) target = $region12
    $region11: #{multi_head_unet_forward.6} parent=5 // pred_region
      %s140 = ssub.s32 %s11, 1
      // Predicated region
      $region13: #{multi_head_unet_forward.6} parent=11 // pred_check
        %p141 = pneg %p58
      $region14: #{multi_head_unet_forward.6} parent=11 // pred_check_branch
        %143 = sbr.rel (%p141) target = $region16
      $region15: #{multi_head_unet_forward.6} parent=11 // pred_region
        _
      $region16: #{multi_head_unet_forward.6} parent=11 // pred_fallthru
        _
      // Predicated region
      $region17: #{multi_head_unet_forward.6} parent=11 // pred_check
        %p144 = pneg %p79
      $region18: #{multi_head_unet_forward.6} parent=11 // pred_check_branch
        %146 = sbr.rel (%p144) target = $region20
      $region19: #{multi_head_unet_forward.6} parent=11 // pred_region
        _
      $region20: #{multi_head_unet_forward.6} parent=11 // pred_fallthru
        _
      // Predicated region
      $region21: #{multi_head_unet_forward.6} parent=11 // pred_check
        %p147 = pneg %p100
      $region22: #{multi_head_unet_forward.6} parent=11 // pred_check_branch
        %149 = sbr.rel (%p147) target = $region24
      $region23: #{multi_head_unet_forward.6} parent=11 // pred_region
        _
      $region24: #{multi_head_unet_forward.6} parent=11 // pred_fallthru
        _
    $region12: #{multi_head_unet_forward.6} parent=5 // pred_fallthru
      _
    %p150 = scmp.lt.s32.totalorder %s11, 2
    // Predicated region
    $region25: #{multi_head_unet_forward.6} parent=5 // pred_check
      %p151 = pneg %p150
    $region26: #{multi_head_unet_forward.6} parent=5 // pred_check_branch
      %153 = sbr.rel (%p151) target = $region28
    $region27: #{multi_head_unet_forward.6} parent=5 // pred_region
      // Predicated region
      $region29: #{multi_head_unet_forward.6} parent=27 // pred_check
        %p154 = pneg %p31
      $region30: #{multi_head_unet_forward.6} parent=27 // pred_check_branch
        %156 = sbr.rel (%p154) target = $region32
      $region31: #{multi_head_unet_forward.6} parent=27 // pred_region
        %p157 = scmp.lt.s32.totalorder %s11, 1
        %s158 = scalar_select %p157, %s11, 1
        %s159 = smul.addr %s158, 14
        %s160 = smul.addr %s159, 4
        %s161 = scalar_lea.vmem %s0, %s160
      $region32: #{multi_head_unet_forward.6} parent=27 // pred_fallthru
        _
    $region28: #{multi_head_unet_forward.6} parent=5 // pred_fallthru
      _
    %p162 = scmp.le.s32.totalorder 1, %s11
    %p163 = scmp.lt.s32.totalorder %s11, 3
    %p164 = pnand %p162, %p163
    %p165 = pneg %p164
    // Predicated region
    $region33: #{multi_head_unet_forward.6} parent=5 // pred_check
      _
    $region34: #{multi_head_unet_forward.6} parent=5 // pred_check_branch
      %167 = sbr.rel (%p164) target = $region36
    $region35: #{multi_head_unet_forward.6} parent=5 // pred_region
      %s168 = ssub.s32 %s11, 1
      %p169 = scmp.lt.s32.totalorder %s16, 1
      %s170 = scalar_select %p169, %s16, 1
      %s171 = smul.addr %s170, 14
      %s172 = smul.addr %s171, 4
      %s173 = scalar_lea.vmem %s0, %s172
      %p174 = pneg %p37
      %p175 = pneg %p34
      %p176 = pneg %p58
      %p177 = pneg %p55
      %p178 = pneg %p79
      %p179 = pneg %p76
      %p180 = pneg %p100
      %p181 = pneg %p97
      %p182 = pneg %p126
      %p183 = pneg %p123
      %p184 = scmp.lt.s32.totalorder %s16, 1
      %s185 = scalar_select %p184, %s16, 1
      %s186 = smul.addr %s185, 8
      %s187 = scalar_lea.vmem %s4, %s186
      %p188 = scmp.lt.s32.totalorder %s16, 1
      %s189 = scalar_select %p188, %s16, 1
      %s190 = smul.addr %s189, 14
      %s191 = smul.addr %s190, 4
      %s192 = scalar_lea.vmem %s0, %s191
      %p193 = scmp.lt.s32.totalorder %s16, 1
      %s194 = scalar_select %p193, %s16, 1
      %s195 = smul.addr %s194, 8
      %s196 = scalar_lea.vmem %s4, %s195
      %v198 = vld [vmem:[%s1] sm:$0xf]
      %v199 = vld [vmem:[%s192] sm:$0xf]
      %v200 = vld [vmem:[%s192 + $0x4] sm:$0xf]
      %v201 = vld [vmem:[%s192 + $0x8] sm:$0xf]
      %v202 = vld [vmem:[%s192 + $0xc] sm:$0xf]
      %v203 = vld [vmem:[%s192 + $0x10] sm:$0xf]
      %v204 = vld [vmem:[%s192 + $0x14] sm:$0xf]
      %v205 = vld [vmem:[%s192 + $0x18] sm:$0xf]
      %v206 = vld [vmem:[%s192 + $0x1c] sm:$0xf]
      %v207 = vld [vmem:[%s192 + $0x20] sm:$0xf]
      %v208 = vld [vmem:[%s192 + $0x24] sm:$0xf]
      %v209 = vld [vmem:[%s192 + $0x28] sm:$0xf]
      %v210 = vld [vmem:[%s192 + $0x2c] sm:$0xf]
      %v211 = vld [vmem:[%s192 + $0x30] sm:$0xf]
      %v212 = vld [vmem:[%s192 + $0x34] sm:$0x3]
      %v213 = vld [vmem:[%s2] sm:$0xff]
      %215 = vset.pattern.permute.xlu0 0
      %216 = vperm.xlu0 %215, %v213
      %v217 = vpop.permute.xlu0 %216
      %v233 = vunpack.c.l.b16 %v199
      %v234 = vunpack.c.l.b16 %v200
      %v235 = vunpack.c.l.b16 %v201
      %v236 = vunpack.c.l.b16 %v202
      %v237 = vunpack.c.l.b16 %v203
      %v238 = vunpack.c.l.b16 %v204
      %v239 = vunpack.c.l.b16 %v205
      %v240 = vunpack.c.l.b16 %v206
      %v241 = vunpack.c.l.b16 %v207
      %v242 = vunpack.c.l.b16 %v208
      %v243 = vunpack.c.l.b16 %v209
      %v244 = vunpack.c.l.b16 %v210
      %v245 = vunpack.c.l.b16 %v211
      %v246 = vunpack.c.l.b16 %v212
      %v247 = vpack.c.b16 %v234, %v233
      %v248 = vpack.c.b16 %v236, %v235
      %v249 = vpack.c.b16 %v238, %v237
      %v250 = vpack.c.b16 %v240, %v239
      %v251 = vpack.c.b16 %v242, %v241
      %v252 = vpack.c.b16 %v244, %v243
      %v253 = vpack.c.b16 %v246, %v245
      %vm260 = vcmask 883712
      %v262 = vsel %vm260, %v198, 0
      %vm264 = vcmask 1045504
      %v266 = vsel %vm264, %v253, 0
      %268 = vmatpush.bf16.msra.mxu0 0
      %269 = vmatpush.bf16.msra.mxu0 %v266
      %270 = vmatpush.bf16.msra.mxu0 %v252
      %271 = vmatpush.bf16.msra.mxu0 %v251
      %272 = vmatpush.bf16.msra.mxu0 %v250
      %273 = vmatpush.bf16.msra.mxu0 %v249
      %274 = vmatpush.bf16.msra.mxu0 %v248
      %275 = vmatpush.bf16.msra.mxu0 %v247
      %276 = vmatmul.bf16.gmra.mxu0 %v262
      %v277 = vpop.f32.mrf.mxu0
      %v278 = vadd.f32 %v217, %v277
      %v279 = vpop.f32.mrf.mxu0
      %280 = vdwg.mxu0
      %vm281 = vcmask 64512
      %v282 = vsel %vm281, %v278, 0.0
      %283 = vadd.xlane.f32.xlu0 %v282
      %v284 = vpop.xlane.xlu0 %283
      %v285 = vrcp.pop 8.0
      %v286 = vmul.f32 8.0, %v285
      %v287 = vsub.f32 1.0, %v286
      %v288 = vmul.f32 %v285, %v287
      %v289 = vadd.f32 %v285, %v288
      %vm290 = vweird.f32 %v285
      %v291 = vsel %vm290, %v285, %v289
      %v292 = vmul.f32 %v284, %v291
      %v293 = vsub.f32 %v278, %v292
      %v294 = vmul.f32 %v293, %v293
      %v295 = vsel %vm281, %v294, 0.0
      %296 = vadd.xlane.f32.xlu0 %v295
      %v297 = vpop.xlane.xlu0 %296
      %v298 = vmul.f32 %v297, %v291
      %v299 = vadd.f32 %v298, 1e-05
      %v300 = vrsqrt.pop %v299
      %v301 = vmul.f32 %v300, %v299
      %v302 = vmul.f32 %v301, %v300
      %v303 = vmul.f32 0.5, %v302
      %v304 = vsub.f32 1.5, %v303
      %v305 = vmul.f32 %v300, %v304
      %vm306 = vweird.f32 %v299
      %vm307 = vweird.f32 %v300
      %vm308 = vmor %vm306, %vm307
      %v309 = vsel %vm308, %v300, %v305
      %v310 = vmul.f32 %v293, %v309
      %s311 = sld [smem:[#allocation2]]
      %vm312 = vcmp.ge.f32.partialorder %v310, 0.0
      %v313 = vstv %s311
      %v314 = vmul.f32 %v313, %v310
      %v315 = vsel %vm312, %v310, %v314
      %316 = vst.msk [vmem:[%s196] sm:$0xff] %vm281, %v315
      %p317 = scmp.lt.s32.totalorder %s16, 1
      %s318 = scalar_select %p317, %s16, 1
      %s319 = smul.addr %s318, 8
      %s320 = scalar_lea.vmem %s4, %s319
      // Predicated region
      $region37: #{multi_head_unet_forward.6} parent=35 // pred_check
        %p321 = pneg %p123
      $region38: #{multi_head_unet_forward.6} parent=35 // pred_check_branch
        %323 = sbr.rel (%p321) target = $region40
      $region39: #{multi_head_unet_forward.6} parent=35 // pred_region
        _
      $region40: #{multi_head_unet_forward.6} parent=35 // pred_fallthru
        _
    $region36: #{multi_head_unet_forward.6} parent=5 // pred_fallthru
      _
    %p324 = scmp.le.s32.totalorder 2, %s11
    // Predicated region
    $region41: #{multi_head_unet_forward.6} parent=5 // pred_check
      %p325 = pneg %p324
    $region42: #{multi_head_unet_forward.6} parent=5 // pred_check_branch
      %327 = sbr.rel (%p325) target = $region44
    $region43: #{multi_head_unet_forward.6} parent=5 // pred_region
      %s328 = ssub.s32 %s11, 2
      // Predicated region
      $region45: #{multi_head_unet_forward.6} parent=43 // pred_check
        %p329 = pneg %p129
      $region46: #{multi_head_unet_forward.6} parent=43 // pred_check_branch
        %331 = sbr.rel (%p329) target = $region48
      $region47: #{multi_head_unet_forward.6} parent=43 // pred_region
        %p332 = scmp.lt.s32.totalorder %s17, 1
        %s333 = scalar_select %p332, %s17, 1
        %s334 = smul.addr %s333, 8
        %s335 = scalar_lea.vmem %s4, %s334
      $region48: #{multi_head_unet_forward.6} parent=43 // pred_fallthru
        _
    $region44: #{multi_head_unet_forward.6} parent=5 // pred_fallthru
      _
  $region6: #{multi_head_unet_forward.6} parent=0 // loop_footer
    %s15 = sadd.s32 1, %s11
  $region7: #{multi_head_unet_forward.6} parent=0 // loop_footer_branch
    %10 = sbr.rel target = $region3
  $region8: #{multi_head_unet_forward.6} parent=0 // loop_exit
    _

// kernel: multi_head_unet_forward.7
$region0: #{multi_head_unet_forward.7}
  #allocation0 [shape = 'u32[]', space=smem, size = 0x4, offset = 0x4, fixed_abs, tag = 'smem constant byte address 0x4 - core index']
  #allocation1 [shape = 'u32[72,128]{1,0:T(1,128)}', space=vmem, size = 0x9000, scoped, tag = 'internal scratch']
  #allocation2 [shape = 'f32[1]{0:T(128)S(6)}', space=smem, size = 0x200, scoped, tag = 'scoped memory for multi_head_unet_forward.7']
  %s0 = inlined_call_operand.vmem [shape: bf16[2,216,8], index: 0, kind: input, shape index: {}]
  %s1 = inlined_call_operand.vmem [shape: bf16[16,216], index: 1, kind: input, shape index: {}]
  %s2 = inlined_call_operand.vmem [shape: f32[16,1], index: 2, kind: input, shape index: {}]
  %s3 = inlined_call_operand.<no memory space> [shape: f32[1], index: 3, kind: input, shape index: {}]
  %s4 = inlined_call_operand.vmem [shape: f32[2,16,8], index: 4, kind: output, shape index: {}]
  %s5 = sld [smem:[#allocation0]]
  $region49: #{multi_head_unet_forward.7} parent=0
    _
  %s7 = ssub.s32 1, %s5
  %s8 = scalar_select 0, %s7, %s5
  %9 = sst [smem:[#allocation2]] %s3
  loop: start=0, step=1, limit=4
  $region2: #{multi_head_unet_forward.7} parent=0 // loop_pre_header
    _
  $region3: #{multi_head_unet_forward.7} parent=0 // loop_header
    %s11 = sphi 0, %s15
    %p12 = scmp.ge.s32.totalorder %s11, 4
    %s21 = sphi 0, %s23
    %s24 = sphi 0, %s21
    %s25 = sphi 0, %s24
    %s41 = sphi 0, %s25
    %s45 = sphi 0, %s45
    %s47 = sphi 0, %s45
    %s48 = sphi 0, %s47
    %s62 = sphi 0, %s48
    %s66 = sphi 0, %s66
    %s68 = sphi 0, %s66
    %s69 = sphi 0, %s68
    %s83 = sphi 0, %s69
    %s87 = sphi 0, %s87
    %s89 = sphi 0, %s87
    %s90 = sphi 0, %s89
    %s104 = sphi 0, %s90
    %s110 = sphi 0, %s112
    %s113 = sphi 0, %s110
    %s114 = sphi 0, %s113
    %s130 = sphi 0, %s114
  $region4: #{multi_head_unet_forward.7} parent=0 // loop_header_branch
    %14 = sbr.rel (%p12) target = $region8
  $region5: #{multi_head_unet_forward.7} parent=0 // loop_body
    %s16 = ssub.s32 %s11, 1
    %s17 = ssub.s32 %s11, 2
    %s18 = sadd.s32 %s11, 1
    %s19 = ssub.s32 %s11, %s18
    %p20 = scmp.eq.s32.totalorder %s19, 0
    %s22 = sadd.s32 %s21, 1
    %s23 = scalar_select %p20, %s21, %s22
    %p26 = pneg %p20
    %p27 = scmp.eq.s32.totalorder %s11, 1
    %p28 = por %p26, %p27
    %p29 = scmp.ne.s32.totalorder %s21, %s24
    %p30 = scmp.eq.s32.totalorder %s11, 0
    %p31 = por %p29, %p30
    %p32 = scmp.ne.s32.totalorder %s21, %s24
    %p33 = scmp.eq.s32.totalorder %s16, 1
    %p34 = por %p32, %p33
    %p35 = scmp.ne.s32.totalorder %s24, %s25
    %p36 = scmp.eq.s32.totalorder %s16, 0
    %p37 = por %p35, %p36
    %p38 = scmp.ne.s32.totalorder %s24, %s25
    %p39 = scmp.eq.s32.totalorder %s17, 1
    %p40 = por %p38, %p39
    %p42 = scmp.ne.s32.totalorder %s25, %s41
    %p43 = scmp.eq.s32.totalorder %s17, 0
    %p44 = por %p42, %p43
    %s46 = sadd.s32 %s45, 1
    %p49 = scmp.eq.s32.totalorder %s11, 1
    %p50 = scmp.ne.s32.totalorder %s45, %s47
    %p51 = scmp.eq.s32.totalorder %s11, 0
    %p52 = por %p50, %p51
    %p53 = scmp.ne.s32.totalorder %s45, %s47
    %p54 = scmp.eq.s32.totalorder %s16, 1
    %p55 = por %p53, %p54
    %p56 = scmp.ne.s32.totalorder %s47, %s48
    %p57 = scmp.eq.s32.totalorder %s16, 0
    %p58 = por %p56, %p57
    %p59 = scmp.ne.s32.totalorder %s47, %s48
    %p60 = scmp.eq.s32.totalorder %s17, 1
    %p61 = por %p59, %p60
    %p63 = scmp.ne.s32.totalorder %s48, %s62
    %p64 = scmp.eq.s32.totalorder %s17, 0
    %p65 = por %p63, %p64
    %s67 = sadd.s32 %s66, 1
    %p70 = scmp.eq.s32.totalorder %s11, 1
    %p71 = scmp.ne.s32.totalorder %s66, %s68
    %p72 = scmp.eq.s32.totalorder %s11, 0
    %p73 = por %p71, %p72
    %p74 = scmp.ne.s32.totalorder %s66, %s68
    %p75 = scmp.eq.s32.totalorder %s16, 1
    %p76 = por %p74, %p75
    %p77 = scmp.ne.s32.totalorder %s68, %s69
    %p78 = scmp.eq.s32.totalorder %s16, 0
    %p79 = por %p77, %p78
    %p80 = scmp.ne.s32.totalorder %s68, %s69
    %p81 = scmp.eq.s32.totalorder %s17, 1
    %p82 = por %p80, %p81
    %p84 = scmp.ne.s32.totalorder %s69, %s83
    %p85 = scmp.eq.s32.totalorder %s17, 0
    %p86 = por %p84, %p85
    %s88 = sadd.s32 %s87, 1
    %p91 = scmp.eq.s32.totalorder %s11, 1
    %p92 = scmp.ne.s32.totalorder %s87, %s89
    %p93 = scmp.eq.s32.totalorder %s11, 0
    %p94 = por %p92, %p93
    %p95 = scmp.ne.s32.totalorder %s87, %s89
    %p96 = scmp.eq.s32.totalorder %s16, 1
    %p97 = por %p95, %p96
    %p98 = scmp.ne.s32.totalorder %s89, %s90
    %p99 = scmp.eq.s32.totalorder %s16, 0
    %p100 = por %p98, %p99
    %p101 = scmp.ne.s32.totalorder %s89, %s90
    %p102 = scmp.eq.s32.totalorder %s17, 1
    %p103 = por %p101, %p102
    %p105 = scmp.ne.s32.totalorder %s90, %s104
    %p106 = scmp.eq.s32.totalorder %s17, 0
    %p107 = por %p105, %p106
    %s108 = ssub.s32 %s11, %s18
    %p109 = scmp.eq.s32.totalorder %s108, 0
    %s111 = sadd.s32 %s110, 1
    %s112 = scalar_select %p109, %s110, %s111
    %p115 = pneg %p109
    %p116 = scmp.eq.s32.totalorder %s11, 1
    %p117 = por %p115, %p116
    %p118 = scmp.ne.s32.totalorder %s110, %s113
    %p119 = scmp.eq.s32.totalorder %s11, 0
    %p120 = por %p118, %p119
    %p121 = scmp.ne.s32.totalorder %s110, %s113
    %p122 = scmp.eq.s32.totalorder %s16, 1
    %p123 = por %p121, %p122
    %p124 = scmp.ne.s32.totalorder %s113, %s114
    %p125 = scmp.eq.s32.totalorder %s16, 0
    %p126 = por %p124, %p125
    %p127 = scmp.ne.s32.totalorder %s113, %s114
    %p128 = scmp.eq.s32.totalorder %s17, 1
    %p129 = por %p127, %p128
    %p131 = scmp.ne.s32.totalorder %s114, %s130
    %p132 = scmp.eq.s32.totalorder %s17, 0
    %p133 = por %p131, %p132
    %p134 = scmp.le.s32.totalorder 1, %s11
    %p135 = scmp.lt.s32.totalorder %s11, 3
    %p136 = pnand %p134, %p135
    %p137 = pneg %p136
    // Predicated region
    $region9: #{multi_head_unet_forward.7} parent=5 // pred_check
      _
    $region10: #{multi_head_unet_forward.7} parent=5 // pred_check_branch
      %139 = sbr.rel (%p136) target = $region12
    $region11: #{multi_head_unet_forward.7} parent=5 // pred_region
      %s140 = ssub.s32 %s11, 1
      // Predicated region
      $region13: #{multi_head_unet_forward.7} parent=11 // pred_check
        %p141 = pneg %p58
      $region14: #{multi_head_unet_forward.7} parent=11 // pred_check_branch
        %143 = sbr.rel (%p141) target = $region16
      $region15: #{multi_head_unet_forward.7} parent=11 // pred_region
        _
      $region16: #{multi_head_unet_forward.7} parent=11 // pred_fallthru
        _
      // Predicated region
      $region17: #{multi_head_unet_forward.7} parent=11 // pred_check
        %p144 = pneg %p79
      $region18: #{multi_head_unet_forward.7} parent=11 // pred_check_branch
        %146 = sbr.rel (%p144) target = $region20
      $region19: #{multi_head_unet_forward.7} parent=11 // pred_region
        _
      $region20: #{multi_head_unet_forward.7} parent=11 // pred_fallthru
        _
      // Predicated region
      $region21: #{multi_head_unet_forward.7} parent=11 // pred_check
        %p147 = pneg %p100
      $region22: #{multi_head_unet_forward.7} parent=11 // pred_check_branch
        %149 = sbr.rel (%p147) target = $region24
      $region23: #{multi_head_unet_forward.7} parent=11 // pred_region
        _
      $region24: #{multi_head_unet_forward.7} parent=11 // pred_fallthru
        _
    $region12: #{multi_head_unet_forward.7} parent=5 // pred_fallthru
      _
    %p150 = scmp.lt.s32.totalorder %s11, 2
    // Predicated region
    $region25: #{multi_head_unet_forward.7} parent=5 // pred_check
      %p151 = pneg %p150
    $region26: #{multi_head_unet_forward.7} parent=5 // pred_check_branch
      %153 = sbr.rel (%p151) target = $region28
    $region27: #{multi_head_unet_forward.7} parent=5 // pred_region
      // Predicated region
      $region29: #{multi_head_unet_forward.7} parent=27 // pred_check
        %p154 = pneg %p31
      $region30: #{multi_head_unet_forward.7} parent=27 // pred_check_branch
        %156 = sbr.rel (%p154) target = $region32
      $region31: #{multi_head_unet_forward.7} parent=27 // pred_region
        %p157 = scmp.lt.s32.totalorder %s11, 1
        %s158 = scalar_select %p157, %s11, 1
        %s159 = smul.addr %s158, 27
        %s160 = smul.addr %s159, 4
        %s161 = scalar_lea.vmem %s0, %s160
      $region32: #{multi_head_unet_forward.7} parent=27 // pred_fallthru
        _
    $region28: #{multi_head_unet_forward.7} parent=5 // pred_fallthru
      _
    %p162 = scmp.le.s32.totalorder 1, %s11
    %p163 = scmp.lt.s32.totalorder %s11, 3
    %p164 = pnand %p162, %p163
    %p165 = pneg %p164
    // Predicated region
    $region33: #{multi_head_unet_forward.7} parent=5 // pred_check
      _
    $region34: #{multi_head_unet_forward.7} parent=5 // pred_check_branch
      %167 = sbr.rel (%p164) target = $region36
    $region35: #{multi_head_unet_forward.7} parent=5 // pred_region
      %s168 = ssub.s32 %s11, 1
      %p169 = scmp.lt.s32.totalorder %s16, 1
      %s170 = scalar_select %p169, %s16, 1
      %s171 = smul.addr %s170, 27
      %s172 = smul.addr %s171, 4
      %s173 = scalar_lea.vmem %s0, %s172
      %p174 = pneg %p37
      %p175 = pneg %p34
      %p176 = pneg %p58
      %p177 = pneg %p55
      %p178 = pneg %p79
      %p179 = pneg %p76
      %p180 = pneg %p100
      %p181 = pneg %p97
      %p182 = pneg %p126
      %p183 = pneg %p123
      %p184 = scmp.lt.s32.totalorder %s16, 1
      %s185 = scalar_select %p184, %s16, 1
      %s186 = smul.addr %s185, 2
      %s187 = smul.addr %s186, 8
      %s188 = scalar_lea.vmem %s4, %s187
      %p189 = scmp.lt.s32.totalorder %s16, 1
      %s190 = scalar_select %p189, %s16, 1
      %s191 = smul.addr %s190, 27
      %s192 = smul.addr %s191, 4
      %s193 = scalar_lea.vmem %s0, %s192
      %p194 = scmp.lt.s32.totalorder %s16, 1
      %s195 = scalar_select %p194, %s16, 1
      %s196 = smul.addr %s195, 2
      %s197 = smul.addr %s196, 8
      %s198 = scalar_lea.vmem %s4, %s197
      %v200 = vld [vmem:[%s1] sm:$0xff]
      %v201 = vld [vmem:[%s1 + $0x8] sm:$0xff]
      %v202 = vld [vmem:[%s193] sm:$0xf]
      %v203 = vld [vmem:[%s193 + $0x4] sm:$0xf]
      %v204 = vld [vmem:[%s193 + $0x8] sm:$0xf]
      %v205 = vld [vmem:[%s193 + $0xc] sm:$0xf]
      %v206 = vld [vmem:[%s193 + $0x10] sm:$0xf]
      %v207 = vld [vmem:[%s193 + $0x14] sm:$0xf]
      %v208 = vld [vmem:[%s193 + $0x18] sm:$0xf]
      %v209 = vld [vmem:[%s193 + $0x1c] sm:$0xf]
      %v210 = vld [vmem:[%s193 + $0x20] sm:$0xf]
      %v211 = vld [vmem:[%s193 + $0x24] sm:$0xf]
      %v212 = vld [vmem:[%s193 + $0x28] sm:$0xf]
      %v213 = vld [vmem:[%s193 + $0x2c] sm:$0xf]
      %v214 = vld [vmem:[%s193 + $0x30] sm:$0xf]
      %v215 = vld [vmem:[%s193 + $0x34] sm:$0xf]
      %v216 = vld [vmem:[%s193 + $0x38] sm:$0xf]
      %v217 = vld [vmem:[%s193 + $0x3c] sm:$0xf]
      %v218 = vld [vmem:[%s193 + $0x40] sm:$0xf]
      %v219 = vld [vmem:[%s193 + $0x44] sm:$0xf]
      %v220 = vld [vmem:[%s193 + $0x48] sm:$0xf]
      %v221 = vld [vmem:[%s193 + $0x4c] sm:$0xf]
      %v222 = vld [vmem:[%s193 + $0x50] sm:$0xf]
      %v223 = vld [vmem:[%s193 + $0x54] sm:$0xf]
      %v224 = vld [vmem:[%s193 + $0x58] sm:$0xf]
      %v225 = vld [vmem:[%s193 + $0x5c] sm:$0xf]
      %v226 = vld [vmem:[%s193 + $0x60] sm:$0xf]
      %v227 = vld [vmem:[%s193 + $0x64] sm:$0xf]
      %v228 = vld [vmem:[%s193 + $0x68] sm:$0xf]
      %v229 = vld [vmem:[%s2] sm:$0xff]
      %v230 = vld [vmem:[%s2 + $0x8] sm:$0xff]
      %232 = vset.pattern.permute.xlu0 0
      %233 = vperm.xlu0 %232, %v229
      %v234 = vpop.permute.xlu0 %233
      %237 = vset.pattern.permute.xlu0 0
      %238 = vperm.xlu0 %237, %v230
      %v239 = vpop.permute.xlu0 %238
      %v243 = vunpack.c.l.b16 %v200
      %v244 = vunpack.c.h.b16 %v200
      %v245 = vunpack.c.l.b16 %v201
      %v246 = vunpack.c.h.b16 %v201
      %v247 = vpack.c.b16 %v245, %v243
      %v248 = vpack.c.b16 %v246, %v244
      %v277 = vunpack.c.l.b16 %v202
      %v278 = vunpack.c.l.b16 %v203
      %v279 = vunpack.c.l.b16 %v204
      %v280 = vunpack.c.l.b16 %v205
      %v281 = vunpack.c.l.b16 %v206
      %v282 = vunpack.c.l.b16 %v207
      %v283 = vunpack.c.l.b16 %v208
      %v284 = vunpack.c.l.b16 %v209
      %v285 = vunpack.c.l.b16 %v210
      %v286 = vunpack.c.l.b16 %v211
      %v287 = vunpack.c.l.b16 %v212
      %v288 = vunpack.c.l.b16 %v213
      %v289 = vunpack.c.l.b16 %v214
      %v290 = vunpack.c.l.b16 %v215
      %v291 = vunpack.c.l.b16 %v216
      %v292 = vunpack.c.l.b16 %v217
      %v293 = vunpack.c.l.b16 %v218
      %v294 = vunpack.c.l.b16 %v219
      %v295 = vunpack.c.l.b16 %v220
      %v296 = vunpack.c.l.b16 %v221
      %v297 = vunpack.c.l.b16 %v222
      %v298 = vunpack.c.l.b16 %v223
      %v299 = vunpack.c.l.b16 %v224
      %v300 = vunpack.c.l.b16 %v225
      %v301 = vunpack.c.l.b16 %v226
      %v302 = vunpack.c.l.b16 %v227
      %v303 = vunpack.c.l.b16 %v228
      %v304 = vpack.c.b16 %v278, %v277
      %v305 = vpack.c.b16 %v280, %v279
      %v306 = vpack.c.b16 %v282, %v281
      %v307 = vpack.c.b16 %v284, %v283
      %v308 = vpack.c.b16 %v286, %v285
      %v309 = vpack.c.b16 %v288, %v287
      %v310 = vpack.c.b16 %v290, %v289
      %v311 = vpack.c.b16 %v292, %v291
      %v312 = vpack.c.b16 %v294, %v293
      %v313 = vpack.c.b16 %v296, %v295
      %v314 = vpack.c.b16 %v298, %v297
      %v315 = vpack.c.b16 %v300, %v299
      %v316 = vpack.c.b16 %v302, %v301
      %v317 = vpack.c.b16 %v303, %v303
      %vm331 = vcmask 719872
      %v333 = vsel %vm331, %v248, 0
      %vm335 = vcmask 1043456
      %v337 = vsel %vm335, %v317, 0
      %339 = vmatpush.bf16.msra.mxu0 %v311
      %340 = vmatpush.bf16.msra.mxu0 %v310
      %341 = vmatpush.bf16.msra.mxu0 %v309
      %342 = vmatpush.bf16.msra.mxu0 %v308
      %343 = vmatpush.bf16.msra.mxu0 %v307
      %344 = vmatpush.bf16.msra.mxu0 %v306
      %345 = vmatpush.bf16.msra.mxu0 %v305
      %346 = vmatpush.bf16.msra.mxu0 %v304
      %347 = vmatmul.bf16.gmra.mxu0 %v247
      %v348 = vpop.f32.mrf.mxu0
      %v349 = vadd.f32 %v234, %v348
      %v350 = vpop.f32.mrf.mxu0
      %v351 = vadd.f32 %v239, %v350
      %352 = vdwg.mxu0
      %353 = vmatpush.bf16.msra.mxu0 0
      %354 = vmatpush.bf16.msra.mxu0 0
      %355 = vmatpush.bf16.msra.mxu0 %v337
      %356 = vmatpush.bf16.msra.mxu0 %v316
      %357 = vmatpush.bf16.msra.mxu0 %v315
      %358 = vmatpush.bf16.msra.mxu0 %v314
      %359 = vmatpush.bf16.msra.mxu0 %v313
      %360 = vmatpush.bf16.msra.mxu0 %v312
      %361 = vmatmul.bf16.gmra.mxu0 %v333
      %v362 = vpop.f32.mrf.mxu0
      %v363 = vadd.f32 %v349, %v362
      %v364 = vpop.f32.mrf.mxu0
      %v365 = vadd.f32 %v351, %v364
      %366 = vdwg.mxu0
      %vm367 = vcmask 64512
      %v368 = vsel %vm367, %v363, 0.0
      %369 = vadd.xlane.f32.xlu0 %v368
      %v370 = vpop.xlane.xlu0 %369
      %v371 = vsel %vm367, %v365, 0.0
      %372 = vadd.xlane.f32.xlu0 %v371
      %v373 = vpop.xlane.xlu0 %372
      %v374 = vrcp.pop 8.0
      %v375 = vmul.f32 8.0, %v374
      %v376 = vsub.f32 1.0, %v375
      %v377 = vmul.f32 %v374, %v376
      %v378 = vadd.f32 %v374, %v377
      %vm379 = vweird.f32 %v374
      %v380 = vsel %vm379, %v374, %v378
      %v381 = vmul.f32 %v370, %v380
      %v382 = vmul.f32 %v373, %v380
      %v383 = vsub.f32 %v363, %v381
      %v384 = vsub.f32 %v365, %v382
      %v385 = vmul.f32 %v383, %v383
      %v386 = vmul.f32 %v384, %v384
      %v387 = vsel %vm367, %v385, 0.0
      %388 = vadd.xlane.f32.xlu0 %v387
      %v389 = vpop.xlane.xlu0 %388
      %v390 = vsel %vm367, %v386, 0.0
      %391 = vadd.xlane.f32.xlu0 %v390
      %v392 = vpop.xlane.xlu0 %391
      %v393 = vmul.f32 %v389, %v380
      %v394 = vmul.f32 %v392, %v380
      %v395 = vadd.f32 %v393, 1e-05
      %v396 = vadd.f32 %v394, 1e-05
      %v397 = vrsqrt.pop %v395
      %v398 = vmul.f32 %v397, %v395
      %v399 = vmul.f32 %v398, %v397
      %v400 = vmul.f32 0.5, %v399
      %v401 = vsub.f32 1.5, %v400
      %v402 = vmul.f32 %v397, %v401
      %vm403 = vweird.f32 %v395
      %vm404 = vweird.f32 %v397
      %vm405 = vmor %vm403, %vm404
      %v406 = vsel %vm405, %v397, %v402
      %v407 = vrsqrt.pop %v396
      %v408 = vmul.f32 %v407, %v396
      %v409 = vmul.f32 %v408, %v407
      %v410 = vmul.f32 0.5, %v409
      %v411 = vsub.f32 1.5, %v410
      %v412 = vmul.f32 %v407, %v411
      %vm413 = vweird.f32 %v396
      %vm414 = vweird.f32 %v407
      %vm415 = vmor %vm413, %vm414
      %v416 = vsel %vm415, %v407, %v412
      %v417 = vmul.f32 %v383, %v406
      %v418 = vmul.f32 %v384, %v416
      %s419 = sld [smem:[#allocation2]]
      %vm420 = vcmp.ge.f32.partialorder %v417, 0.0
      %vm421 = vcmp.ge.f32.partialorder %v418, 0.0
      %v422 = vstv %s419
      %v423 = vmul.f32 %v422, %v417
      %v424 = vmul.f32 %v422, %v418
      %v425 = vsel %vm420, %v417, %v423
      %v426 = vsel %vm421, %v418, %v424
      %427 = vst.msk [vmem:[%s198] sm:$0xff] %vm367, %v425
      %428 = vst.msk [vmem:[%s198 + $0x8] sm:$0xff] %vm367, %v426
      %p429 = scmp.lt.s32.totalorder %s16, 1
      %s430 = scalar_select %p429, %s16, 1
      %s431 = smul.addr %s430, 2
      %s432 = smul.addr %s431, 8
      %s433 = scalar_lea.vmem %s4, %s432
      // Predicated region
      $region37: #{multi_head_unet_forward.7} parent=35 // pred_check
        %p434 = pneg %p123
      $region38: #{multi_head_unet_forward.7} parent=35 // pred_check_branch
        %436 = sbr.rel (%p434) target = $region40
      $region39: #{multi_head_unet_forward.7} parent=35 // pred_region
        _
      $region40: #{multi_head_unet_forward.7} parent=35 // pred_fallthru
        _
    $region36: #{multi_head_unet_forward.7} parent=5 // pred_fallthru
      _
    %p437 = scmp.le.s32.totalorder 2, %s11
    // Predicated region
    $region41: #{multi_head_unet_forward.7} parent=5 // pred_check
      %p438 = pneg %p437
    $region42: #{multi_head_unet_forward.7} parent=5 // pred_check_branch
      %440 = sbr.rel (%p438) target = $region44
    $region43: #{multi_head_unet_forward.7} parent=5 // pred_region
      %s441 = ssub.s32 %s11, 2
      // Predicated region
      $region45: #{multi_head_unet_forward.7} parent=43 // pred_check
        %p442 = pneg %p129
      $region46: #{multi_head_unet_forward.7} parent=43 // pred_check_branch
        %444 = sbr.rel (%p442) target = $region48
      $region47: #{multi_head_unet_forward.7} parent=43 // pred_region
        %p445 = scmp.lt.s32.totalorder %s17, 1
        %s446 = scalar_select %p445, %s17, 1
        %s447 = smul.addr %s446, 2
        %s448 = smul.addr %s447, 8
        %s449 = scalar_lea.vmem %s4, %s448
      $region48: #{multi_head_unet_forward.7} parent=43 // pred_fallthru
        _
    $region44: #{multi_head_unet_forward.7} parent=5 // pred_fallthru
      _
  $region6: #{multi_head_unet_forward.7} parent=0 // loop_footer
    %s15 = sadd.s32 1, %s11
  $region7: #{multi_head_unet_forward.7} parent=0 // loop_footer_branch
    %10 = sbr.rel target = $region3
  $region8: #{multi_head_unet_forward.7} parent=0 // loop_exit
    _

// kernel: tile.12
$region0: #{tile.12}
  #allocation0 [shape = 's32[1]{0}', space=sflag, size = 0x4, scoped, tag = 'scoped memory for tile.12']
  %s0 = inlined_call_operand.vmem [shape: f32[4], index: 0, kind: input, shape index: {}]
  %s1 = inlined_call_operand.vmem [shape: f32[8,4], index: 1, kind: output, shape index: {}]
  // Predicated region
  $region2: #{tile.12} parent=0 // pred_check
    _
  $region3: #{tile.12} parent=0 // pred_check_branch
    %3 = sbr.rel (0) target = $region5
  $region4: #{tile.12} parent=0 // pred_region
    _
  $region5: #{tile.12} parent=0 // pred_fallthru
    _
  %v4 = vld [vmem:[%s0] ss:$0 sm:$0xff]
  %5 = vst [vmem:[%s1] sm:$0xff] %v4

// kernel: tile.0
$region0: #{tile.0}
  %s0 = inlined_call_operand.vmem [shape: f32[8,4], index: 0, kind: input, shape index: {}]
  %s1 = inlined_call_operand.vmem [shape: f32[32,1], index: 1, kind: output, shape index: {}]
  %v2 = vld [vmem:[%s0] sm:$0xff]
  %vm3 = vcmask 7168
  %4 = vst.msk [vmem:[%s1] ss:$4 sm:$0xff] %vm3, %v2
  %v5 = vld [vmem:[%s0] sm:$0xff]
  %6 = vrot.lane.b32.xlu0 %v5, 127
  %v7 = vpop.permute.xlu0 %6
  %vm8 = vcmask 7168
  %s9 = scalar_lea.vmem %s1, 1
  %10 = vst.msk [vmem:[%s9] ss:$4 sm:$0xff] %vm8, %v7
  %v11 = vld [vmem:[%s0] sm:$0xff]
  %12 = vrot.lane.b32.xlu0 %v11, 126
  %v13 = vpop.permute.xlu0 %12
  %vm14 = vcmask 7168
  %s15 = scalar_lea.vmem %s1, 2
  %16 = vst.msk [vmem:[%s15] ss:$4 sm:$0xff] %vm14, %v13
  %v17 = vld [vmem:[%s0] sm:$0xff]
  %18 = vrot.lane.b32.xlu0 %v17, 125
  %v19 = vpop.permute.xlu0 %18
  %vm20 = vcmask 7168
  %s21 = scalar_lea.vmem %s1, 3
  %22 = vst.msk [vmem:[%s21] ss:$4 sm:$0xff] %vm20, %v19

// kernel: multi_head_unet_forward.8
$region0: #{multi_head_unet_forward.8}
  #allocation0 [shape = 'u32[]', space=smem, size = 0x4, offset = 0x4, fixed_abs, tag = 'smem constant byte address 0x4 - core index']
  #allocation1 [shape = 'u32[72,128]{1,0:T(1,128)}', space=vmem, size = 0x9000, scoped, tag = 'internal scratch']
  #allocation2 [shape = 'f32[1]{0:T(128)S(6)}', space=smem, size = 0x200, scoped, tag = 'scoped memory for multi_head_unet_forward.8']
  %s0 = inlined_call_operand.vmem [shape: bf16[2,192,8], index: 0, kind: input, shape index: {}]
  %s1 = inlined_call_operand.vmem [shape: bf16[32,192], index: 1, kind: input, shape index: {}]
  %s2 = inlined_call_operand.vmem [shape: f32[32,1], index: 2, kind: input, shape index: {}]
  %s3 = inlined_call_operand.<no memory space> [shape: f32[1], index: 3, kind: input, shape index: {}]
  %s4 = inlined_call_operand.vmem [shape: f32[2,32,8], index: 4, kind: output, shape index: {}]
  %s5 = sld [smem:[#allocation0]]
  $region49: #{multi_head_unet_forward.8} parent=0
    _
  %s7 = ssub.s32 1, %s5
  %s8 = scalar_select 0, %s7, %s5
  %9 = sst [smem:[#allocation2]] %s3
  loop: start=0, step=1, limit=4
  $region2: #{multi_head_unet_forward.8} parent=0 // loop_pre_header
    _
  $region3: #{multi_head_unet_forward.8} parent=0 // loop_header
    %s11 = sphi 0, %s15
    %p12 = scmp.ge.s32.totalorder %s11, 4
    %s21 = sphi 0, %s23
    %s24 = sphi 0, %s21
    %s25 = sphi 0, %s24
    %s41 = sphi 0, %s25
    %s45 = sphi 0, %s45
    %s47 = sphi 0, %s45
    %s48 = sphi 0, %s47
    %s62 = sphi 0, %s48
    %s66 = sphi 0, %s66
    %s68 = sphi 0, %s66
    %s69 = sphi 0, %s68
    %s83 = sphi 0, %s69
    %s87 = sphi 0, %s87
    %s89 = sphi 0, %s87
    %s90 = sphi 0, %s89
    %s104 = sphi 0, %s90
    %s110 = sphi 0, %s112
    %s113 = sphi 0, %s110
    %s114 = sphi 0, %s113
    %s130 = sphi 0, %s114
  $region4: #{multi_head_unet_forward.8} parent=0 // loop_header_branch
    %14 = sbr.rel (%p12) target = $region8
  $region5: #{multi_head_unet_forward.8} parent=0 // loop_body
    %s16 = ssub.s32 %s11, 1
    %s17 = ssub.s32 %s11, 2
    %s18 = sadd.s32 %s11, 1
    %s19 = ssub.s32 %s11, %s18
    %p20 = scmp.eq.s32.totalorder %s19, 0
    %s22 = sadd.s32 %s21, 1
    %s23 = scalar_select %p20, %s21, %s22
    %p26 = pneg %p20
    %p27 = scmp.eq.s32.totalorder %s11, 1
    %p28 = por %p26, %p27
    %p29 = scmp.ne.s32.totalorder %s21, %s24
    %p30 = scmp.eq.s32.totalorder %s11, 0
    %p31 = por %p29, %p30
    %p32 = scmp.ne.s32.totalorder %s21, %s24
    %p33 = scmp.eq.s32.totalorder %s16, 1
    %p34 = por %p32, %p33
    %p35 = scmp.ne.s32.totalorder %s24, %s25
    %p36 = scmp.eq.s32.totalorder %s16, 0
    %p37 = por %p35, %p36
    %p38 = scmp.ne.s32.totalorder %s24, %s25
    %p39 = scmp.eq.s32.totalorder %s17, 1
    %p40 = por %p38, %p39
    %p42 = scmp.ne.s32.totalorder %s25, %s41
    %p43 = scmp.eq.s32.totalorder %s17, 0
    %p44 = por %p42, %p43
    %s46 = sadd.s32 %s45, 1
    %p49 = scmp.eq.s32.totalorder %s11, 1
    %p50 = scmp.ne.s32.totalorder %s45, %s47
    %p51 = scmp.eq.s32.totalorder %s11, 0
    %p52 = por %p50, %p51
    %p53 = scmp.ne.s32.totalorder %s45, %s47
    %p54 = scmp.eq.s32.totalorder %s16, 1
    %p55 = por %p53, %p54
    %p56 = scmp.ne.s32.totalorder %s47, %s48
    %p57 = scmp.eq.s32.totalorder %s16, 0
    %p58 = por %p56, %p57
    %p59 = scmp.ne.s32.totalorder %s47, %s48
    %p60 = scmp.eq.s32.totalorder %s17, 1
    %p61 = por %p59, %p60
    %p63 = scmp.ne.s32.totalorder %s48, %s62
    %p64 = scmp.eq.s32.totalorder %s17, 0
    %p65 = por %p63, %p64
    %s67 = sadd.s32 %s66, 1
    %p70 = scmp.eq.s32.totalorder %s11, 1
    %p71 = scmp.ne.s32.totalorder %s66, %s68
    %p72 = scmp.eq.s32.totalorder %s11, 0
    %p73 = por %p71, %p72
    %p74 = scmp.ne.s32.totalorder %s66, %s68
    %p75 = scmp.eq.s32.totalorder %s16, 1
    %p76 = por %p74, %p75
    %p77 = scmp.ne.s32.totalorder %s68, %s69
    %p78 = scmp.eq.s32.totalorder %s16, 0
    %p79 = por %p77, %p78
    %p80 = scmp.ne.s32.totalorder %s68, %s69
    %p81 = scmp.eq.s32.totalorder %s17, 1
    %p82 = por %p80, %p81
    %p84 = scmp.ne.s32.totalorder %s69, %s83
    %p85 = scmp.eq.s32.totalorder %s17, 0
    %p86 = por %p84, %p85
    %s88 = sadd.s32 %s87, 1
    %p91 = scmp.eq.s32.totalorder %s11, 1
    %p92 = scmp.ne.s32.totalorder %s87, %s89
    %p93 = scmp.eq.s32.totalorder %s11, 0
    %p94 = por %p92, %p93
    %p95 = scmp.ne.s32.totalorder %s87, %s89
    %p96 = scmp.eq.s32.totalorder %s16, 1
    %p97 = por %p95, %p96
    %p98 = scmp.ne.s32.totalorder %s89, %s90
    %p99 = scmp.eq.s32.totalorder %s16, 0
    %p100 = por %p98, %p99
    %p101 = scmp.ne.s32.totalorder %s89, %s90
    %p102 = scmp.eq.s32.totalorder %s17, 1
    %p103 = por %p101, %p102
    %p105 = scmp.ne.s32.totalorder %s90, %s104
    %p106 = scmp.eq.s32.totalorder %s17, 0
    %p107 = por %p105, %p106
    %s108 = ssub.s32 %s11, %s18
    %p109 = scmp.eq.s32.totalorder %s108, 0
    %s111 = sadd.s32 %s110, 1
    %s112 = scalar_select %p109, %s110, %s111
    %p115 = pneg %p109
    %p116 = scmp.eq.s32.totalorder %s11, 1
    %p117 = por %p115, %p116
    %p118 = scmp.ne.s32.totalorder %s110, %s113
    %p119 = scmp.eq.s32.totalorder %s11, 0
    %p120 = por %p118, %p119
    %p121 = scmp.ne.s32.totalorder %s110, %s113
    %p122 = scmp.eq.s32.totalorder %s16, 1
    %p123 = por %p121, %p122
    %p124 = scmp.ne.s32.totalorder %s113, %s114
    %p125 = scmp.eq.s32.totalorder %s16, 0
    %p126 = por %p124, %p125
    %p127 = scmp.ne.s32.totalorder %s113, %s114
    %p128 = scmp.eq.s32.totalorder %s17, 1
    %p129 = por %p127, %p128
    %p131 = scmp.ne.s32.totalorder %s114, %s130
    %p132 = scmp.eq.s32.totalorder %s17, 0
    %p133 = por %p131, %p132
    %p134 = scmp.le.s32.totalorder 1, %s11
    %p135 = scmp.lt.s32.totalorder %s11, 3
    %p136 = pnand %p134, %p135
    %p137 = pneg %p136
    // Predicated region
    $region9: #{multi_head_unet_forward.8} parent=5 // pred_check
      _
    $region10: #{multi_head_unet_forward.8} parent=5 // pred_check_branch
      %139 = sbr.rel (%p136) target = $region12
    $region11: #{multi_head_unet_forward.8} parent=5 // pred_region
      %s140 = ssub.s32 %s11, 1
      // Predicated region
      $region13: #{multi_head_unet_forward.8} parent=11 // pred_check
        %p141 = pneg %p58
      $region14: #{multi_head_unet_forward.8} parent=11 // pred_check_branch
        %143 = sbr.rel (%p141) target = $region16
      $region15: #{multi_head_unet_forward.8} parent=11 // pred_region
        _
      $region16: #{multi_head_unet_forward.8} parent=11 // pred_fallthru
        _
      // Predicated region
      $region17: #{multi_head_unet_forward.8} parent=11 // pred_check
        %p144 = pneg %p79
      $region18: #{multi_head_unet_forward.8} parent=11 // pred_check_branch
        %146 = sbr.rel (%p144) target = $region20
      $region19: #{multi_head_unet_forward.8} parent=11 // pred_region
        _
      $region20: #{multi_head_unet_forward.8} parent=11 // pred_fallthru
        _
      // Predicated region
      $region21: #{multi_head_unet_forward.8} parent=11 // pred_check
        %p147 = pneg %p100
      $region22: #{multi_head_unet_forward.8} parent=11 // pred_check_branch
        %149 = sbr.rel (%p147) target = $region24
      $region23: #{multi_head_unet_forward.8} parent=11 // pred_region
        _
      $region24: #{multi_head_unet_forward.8} parent=11 // pred_fallthru
        _
    $region12: #{multi_head_unet_forward.8} parent=5 // pred_fallthru
      _
    %p150 = scmp.lt.s32.totalorder %s11, 2
    // Predicated region
    $region25: #{multi_head_unet_forward.8} parent=5 // pred_check
      %p151 = pneg %p150
    $region26: #{multi_head_unet_forward.8} parent=5 // pred_check_branch
      %153 = sbr.rel (%p151) target = $region28
    $region27: #{multi_head_unet_forward.8} parent=5 // pred_region
      // Predicated region
      $region29: #{multi_head_unet_forward.8} parent=27 // pred_check
        %p154 = pneg %p31
      $region30: #{multi_head_unet_forward.8} parent=27 // pred_check_branch
        %156 = sbr.rel (%p154) target = $region32
      $region31: #{multi_head_unet_forward.8} parent=27 // pred_region
        %p157 = scmp.lt.s32.totalorder %s11, 1
        %s158 = scalar_select %p157, %s11, 1
        %s159 = smul.addr %s158, 24
        %s160 = smul.addr %s159, 4
        %s161 = scalar_lea.vmem %s0, %s160
      $region32: #{multi_head_unet_forward.8} parent=27 // pred_fallthru
        _
    $region28: #{multi_head_unet_forward.8} parent=5 // pred_fallthru
      _
    %p162 = scmp.le.s32.totalorder 1, %s11
    %p163 = scmp.lt.s32.totalorder %s11, 3
    %p164 = pnand %p162, %p163
    %p165 = pneg %p164
    // Predicated region
    $region33: #{multi_head_unet_forward.8} parent=5 // pred_check
      _
    $region34: #{multi_head_unet_forward.8} parent=5 // pred_check_branch
      %167 = sbr.rel (%p164) target = $region36
    $region35: #{multi_head_unet_forward.8} parent=5 // pred_region
      %s168 = ssub.s32 %s11, 1
      %p169 = scmp.lt.s32.totalorder %s16, 1
      %s170 = scalar_select %p169, %s16, 1
      %s171 = smul.addr %s170, 24
      %s172 = smul.addr %s171, 4
      %s173 = scalar_lea.vmem %s0, %s172
      %p174 = pneg %p37
      %p175 = pneg %p34
      %p176 = pneg %p58
      %p177 = pneg %p55
      %p178 = pneg %p79
      %p179 = pneg %p76
      %p180 = pneg %p100
      %p181 = pneg %p97
      %p182 = pneg %p126
      %p183 = pneg %p123
      %p184 = scmp.lt.s32.totalorder %s16, 1
      %s185 = scalar_select %p184, %s16, 1
      %s186 = smul.addr %s185, 4
      %s187 = smul.addr %s186, 8
      %s188 = scalar_lea.vmem %s4, %s187
      %p189 = scmp.lt.s32.totalorder %s16, 1
      %s190 = scalar_select %p189, %s16, 1
      %s191 = smul.addr %s190, 24
      %s192 = smul.addr %s191, 4
      %s193 = scalar_lea.vmem %s0, %s192
      %p194 = scmp.lt.s32.totalorder %s16, 1
      %s195 = scalar_select %p194, %s16, 1
      %s196 = smul.addr %s195, 4
      %s197 = smul.addr %s196, 8
      %s198 = scalar_lea.vmem %s4, %s197
      %v200 = vld [vmem:[%s1] sm:$0xff]
      %v201 = vld [vmem:[%s1 + $0x8] sm:$0xff]
      %v202 = vld [vmem:[%s1 + $0x10] sm:$0xff]
      %v203 = vld [vmem:[%s1 + $0x18] sm:$0xff]
      %v204 = vld [vmem:[%s193] sm:$0xf]
      %v205 = vld [vmem:[%s193 + $0x4] sm:$0xf]
      %v206 = vld [vmem:[%s193 + $0x8] sm:$0xf]
      %v207 = vld [vmem:[%s193 + $0xc] sm:$0xf]
      %v208 = vld [vmem:[%s193 + $0x10] sm:$0xf]
      %v209 = vld [vmem:[%s193 + $0x14] sm:$0xf]
      %v210 = vld [vmem:[%s193 + $0x18] sm:$0xf]
      %v211 = vld [vmem:[%s193 + $0x1c] sm:$0xf]
      %v212 = vld [vmem:[%s193 + $0x20] sm:$0xf]
      %v213 = vld [vmem:[%s193 + $0x24] sm:$0xf]
      %v214 = vld [vmem:[%s193 + $0x28] sm:$0xf]
      %v215 = vld [vmem:[%s193 + $0x2c] sm:$0xf]
      %v216 = vld [vmem:[%s193 + $0x30] sm:$0xf]
      %v217 = vld [vmem:[%s193 + $0x34] sm:$0xf]
      %v218 = vld [vmem:[%s193 + $0x38] sm:$0xf]
      %v219 = vld [vmem:[%s193 + $0x3c] sm:$0xf]
      %v220 = vld [vmem:[%s193 + $0x40] sm:$0xf]
      %v221 = vld [vmem:[%s193 + $0x44] sm:$0xf]
      %v222 = vld [vmem:[%s193 + $0x48] sm:$0xf]
      %v223 = vld [vmem:[%s193 + $0x4c] sm:$0xf]
      %v224 = vld [vmem:[%s193 + $0x50] sm:$0xf]
      %v225 = vld [vmem:[%s193 + $0x54] sm:$0xf]
      %v226 = vld [vmem:[%s193 + $0x58] sm:$0xf]
      %v227 = vld [vmem:[%s193 + $0x5c] sm:$0xf]
      %v228 = vld [vmem:[%s2] sm:$0xff]
      %v229 = vld [vmem:[%s2 + $0x8] sm:$0xff]
      %v230 = vld [vmem:[%s2 + $0x10] sm:$0xff]
      %v231 = vld [vmem:[%s2 + $0x18] sm:$0xff]
      %233 = vset.pattern.permute.xlu0 0
      %234 = vperm.xlu0 %233, %v228
      %v235 = vpop.permute.xlu0 %234
      %238 = vset.pattern.permute.xlu0 0
      %239 = vperm.xlu0 %238, %v229
      %v240 = vpop.permute.xlu0 %239
      %243 = vset.pattern.permute.xlu0 0
      %244 = vperm.xlu0 %243, %v230
      %v245 = vpop.permute.xlu0 %244
      %248 = vset.pattern.permute.xlu0 0
      %249 = vperm.xlu0 %248, %v231
      %v250 = vpop.permute.xlu0 %249
      %v256 = vunpack.c.l.b16 %v200
      %v257 = vunpack.c.h.b16 %v200
      %v258 = vunpack.c.l.b16 %v201
      %v259 = vunpack.c.h.b16 %v201
      %v260 = vunpack.c.l.b16 %v202
      %v261 = vunpack.c.h.b16 %v202
      %v262 = vunpack.c.l.b16 %v203
      %v263 = vunpack.c.h.b16 %v203
      %v264 = vpack.c.b16 %v258, %v256
      %v265 = vpack.c.b16 %v259, %v257
      %v266 = vpack.c.b16 %v262, %v260
      %v267 = vpack.c.b16 %v263, %v261
      %v294 = vunpack.c.l.b16 %v204
      %v295 = vunpack.c.l.b16 %v205
      %v296 = vunpack.c.l.b16 %v206
      %v297 = vunpack.c.l.b16 %v207
      %v298 = vunpack.c.l.b16 %v208
      %v299 = vunpack.c.l.b16 %v209
      %v300 = vunpack.c.l.b16 %v210
      %v301 = vunpack.c.l.b16 %v211
      %v302 = vunpack.c.l.b16 %v212
      %v303 = vunpack.c.l.b16 %v213
      %v304 = vunpack.c.l.b16 %v214
      %v305 = vunpack.c.l.b16 %v215
      %v306 = vunpack.c.l.b16 %v216
      %v307 = vunpack.c.l.b16 %v217
      %v308 = vunpack.c.l.b16 %v218
      %v309 = vunpack.c.l.b16 %v219
      %v310 = vunpack.c.l.b16 %v220
      %v311 = vunpack.c.l.b16 %v221
      %v312 = vunpack.c.l.b16 %v222
      %v313 = vunpack.c.l.b16 %v223
      %v314 = vunpack.c.l.b16 %v224
      %v315 = vunpack.c.l.b16 %v225
      %v316 = vunpack.c.l.b16 %v226
      %v317 = vunpack.c.l.b16 %v227
      %v318 = vpack.c.b16 %v295, %v294
      %v319 = vpack.c.b16 %v297, %v296
      %v320 = vpack.c.b16 %v299, %v298
      %v321 = vpack.c.b16 %v301, %v300
      %v322 = vpack.c.b16 %v303, %v302
      %v323 = vpack.c.b16 %v305, %v304
      %v324 = vpack.c.b16 %v307, %v306
      %v325 = vpack.c.b16 %v309, %v308
      %v326 = vpack.c.b16 %v311, %v310
      %v327 = vpack.c.b16 %v313, %v312
      %v328 = vpack.c.b16 %v315, %v314
      %v329 = vpack.c.b16 %v317, %v316
      %vm342 = vcmask 523264
      %v344 = vsel %vm342, %v265, 0
      %v347 = vsel %vm342, %v267, 0
      %349 = vmatpush.bf16.msra.mxu0 %v325
      %350 = vmatpush.bf16.msra.mxu0 %v324
      %351 = vmatpush.bf16.msra.mxu0 %v323
      %352 = vmatpush.bf16.msra.mxu0 %v322
      %353 = vmatpush.bf16.msra.mxu0 %v321
      %354 = vmatpush.bf16.msra.mxu0 %v320
      %355 = vmatpush.bf16.msra.mxu0 %v319
      %356 = vmatpush.bf16.msra.mxu0 %v318
      %357 = vmatmul.bf16.gmra.mxu0 %v264
      %v358 = vpop.f32.mrf.mxu0
      %v359 = vadd.f32 %v235, %v358
      %v360 = vpop.f32.mrf.mxu0
      %v361 = vadd.f32 %v240, %v360
      %362 = vmatmul.bf16.gmra.mxu0 %v266
      %v363 = vpop.f32.mrf.mxu0
      %v364 = vadd.f32 %v245, %v363
      %v365 = vpop.f32.mrf.mxu0
      %v366 = vadd.f32 %v250, %v365
      %367 = vdwg.mxu0
      %368 = vmatpush.bf16.msra.mxu0 0
      %369 = vmatpush.bf16.msra.mxu0 0
      %370 = vmatpush.bf16.msra.mxu0 0
      %371 = vmatpush.bf16.msra.mxu0 0
      %372 = vmatpush.bf16.msra.mxu0 %v329
      %373 = vmatpush.bf16.msra.mxu0 %v328
      %374 = vmatpush.bf16.msra.mxu0 %v327
      %375 = vmatpush.bf16.msra.mxu0 %v326
      %376 = vmatmul.bf16.gmra.mxu0 %v344
      %v377 = vpop.f32.mrf.mxu0
      %v378 = vadd.f32 %v359, %v377
      %v379 = vpop.f32.mrf.mxu0
      %v380 = vadd.f32 %v361, %v379
      %381 = vmatmul.bf16.gmra.mxu0 %v347
      %v382 = vpop.f32.mrf.mxu0
      %v383 = vadd.f32 %v364, %v382
      %v384 = vpop.f32.mrf.mxu0
      %v385 = vadd.f32 %v366, %v384
      %386 = vdwg.mxu0
      %v387 = vlaneseq
      %v388 = vshrl.u32 %v387, 7
      %v389 = vadd.s32 %v388, 8
      %v390 = vadd.s32 %v388, 16
      %v391 = vadd.s32 %v388, 24
      %v392 = vlaneseq
      %v393 = vand.u32 %v392, 127
      %vm394 = vcmp.lt.s32.totalorder %v388, 0
      %v395 = vsub.s32 0, %v388
      %v396 = vsel %vm394, %v395, %v388
      %v397 = vshrl.u32 %v396, 2
      %v398 = vand.u32 %v396, 3
      %v399 = vsub.s32 0, %v398
      %v400 = vsel %vm394, %v399, %v398
      %vm401 = vcmp.lt.s32.totalorder %v389, 0
      %v402 = vsub.s32 0, %v389
      %v403 = vsel %vm401, %v402, %v389
      %v404 = vshrl.u32 %v403, 2
      %v405 = vand.u32 %v403, 3
      %v406 = vsub.s32 0, %v405
      %v407 = vsel %vm401, %v406, %v405
      %vm408 = vcmp.lt.s32.totalorder %v390, 0
      %v409 = vsub.s32 0, %v390
      %v410 = vsel %vm408, %v409, %v390
      %v411 = vshrl.u32 %v410, 2
      %v412 = vand.u32 %v410, 3
      %v413 = vsub.s32 0, %v412
      %v414 = vsel %vm408, %v413, %v412
      %vm415 = vcmp.lt.s32.totalorder %v391, 0
      %v416 = vsub.s32 0, %v391
      %v417 = vsel %vm415, %v416, %v391
      %v418 = vshrl.u32 %v417, 2
      %v419 = vand.u32 %v417, 3
      %v420 = vsub.s32 0, %v419
      %v421 = vsel %vm415, %v420, %v419
      %vm422 = vcmp.ne.s32.totalorder %v400, 0
      %vm423 = vcmp.ne.s32.totalorder %v407, 0
      %vm424 = vcmp.ne.s32.totalorder %v414, 0
      %vm425 = vcmp.ne.s32.totalorder %v421, 0
      %vm426 = vcmp.lt.s32.totalorder %v400, 0
      %vm427 = vcmp.lt.s32.totalorder %v407, 0
      %vm428 = vcmp.lt.s32.totalorder %v414, 0
      %vm429 = vcmp.lt.s32.totalorder %v421, 0
      %vm430 = vmand %vm426, %vm422
      %vm431 = vmand %vm427, %vm423
      %vm432 = vmand %vm428, %vm424
      %vm433 = vmand %vm429, %vm425
      %v434 = vadd.s32 %v400, 4
      %v435 = vadd.s32 %v407, 4
      %v436 = vadd.s32 %v414, 4
      %v437 = vadd.s32 %v421, 4
      %v438 = vsel %vm430, %v434, %v400
      %v439 = vsel %vm431, %v435, %v407
      %v440 = vsel %vm432, %v436, %v414
      %v441 = vsel %vm433, %v437, %v421
      %vm442 = vcmp.lt.s32.totalorder %v393, 0
      %v443 = vsub.s32 0, %v393
      %v444 = vsel %vm442, %v443, %v393
      %v445 = vshrl.u32 %v444, 2
      %v446 = vand.u32 %v444, 3
      %v447 = vsub.s32 0, %v446
      %v448 = vsel %vm442, %v447, %v446
      %vm449 = vcmp.ne.s32.totalorder %v448, 0
      %vm450 = vcmp.lt.s32.totalorder %v448, 0
      %vm451 = vmand %vm450, %vm449
      %v452 = vadd.s32 %v448, 4
      %v453 = vsel %vm451, %v452, %v448
      %vm454 = vcmp.eq.s32.totalorder %v438, %v453
      %vm455 = vcmp.eq.s32.totalorder %v439, %v453
      %vm456 = vcmp.eq.s32.totalorder %v440, %v453
      %vm457 = vcmp.eq.s32.totalorder %v441, %v453
      %v458 = vsel %vm454, 1, 0
      %v459 = vsel %vm455, 1, 0
      %v460 = vsel %vm456, 1, 0
      %v461 = vsel %vm457, 1, 0
      %v462 = vcvt.s32.f32 %v458
      %v463 = vcvt.s32.f32 %v459
      %v464 = vcvt.s32.f32 %v460
      %v465 = vcvt.s32.f32 %v461
      %vm466 = vcmask 64512
      %v467 = vsel %vm466, %v378, 0.0
      %468 = vadd.xlane.f32.xlu0 %v467
      %v469 = vpop.xlane.xlu0 %468
      %v470 = vsel %vm466, %v380, 0.0
      %471 = vadd.xlane.f32.xlu0 %v470
      %v472 = vpop.xlane.xlu0 %471
      %v473 = vsel %vm466, %v383, 0.0
      %474 = vadd.xlane.f32.xlu0 %v473
      %v475 = vpop.xlane.xlu0 %474
      %v476 = vsel %vm466, %v385, 0.0
      %477 = vadd.xlane.f32.xlu0 %v476
      %v478 = vpop.xlane.xlu0 %477
      %vm479 = vcmask 261120
      %v481 = vsel %vm479, %v462, 0
      %v484 = vsel %vm479, %v463, 0
      %v487 = vsel %vm479, %v464, 0
      %v490 = vsel %vm479, %v465, 0
      %492 = vmatpush.msra.mxu0 0.0
      %493 = vmatpush.msra.mxu0 0.0
      %494 = vmatpush.msra.mxu0 0.0
      %495 = vmatpush.msra.mxu0 0.0
      %496 = vmatpush.msra.mxu0 0.0
      %497 = vmatpush.msra.mxu0 0.0
      %498 = vmatpush.msra.mxu0 0.0
      %499 = vmatpush.msra.mxu0 0.0
      %500 = vmatpush.msra.mxu0 0.0
      %501 = vmatpush.msra.mxu0 0.0
      %502 = vmatpush.msra.mxu0 0.0
      %503 = vmatpush.msra.mxu0 0.0
      %504 = vmatpush.msra.mxu0 %v478
      %505 = vmatpush.msra.mxu0 %v475
      %506 = vmatpush.msra.mxu0 %v472
      %507 = vmatpush.msra.mxu0 %v469
      %508 = vmatmul.f32.gmra.mxu0 %v481
      %v509 = vpop.f32.mrf.mxu0
      %v510 = vadd.f32 0.0, %v509
      %511 = vmatmul.f32.gmra.mxu0 %v484
      %v512 = vpop.f32.mrf.mxu0
      %v513 = vadd.f32 0.0, %v512
      %514 = vmatmul.f32.gmra.mxu0 %v487
      %v515 = vpop.f32.mrf.mxu0
      %v516 = vadd.f32 0.0, %v515
      %517 = vmatmul.f32.gmra.mxu0 %v490
      %v518 = vpop.f32.mrf.mxu0
      %v519 = vadd.f32 0.0, %v518
      %520 = vdwg.mxu0
      %v521 = vmul.f32 %v510, 0.015625
      %v522 = vmul.f32 %v513, 0.015625
      %v523 = vmul.f32 %v516, 0.015625
      %v524 = vmul.f32 %v519, 0.015625
      %526 = vset.pattern.permute.xlu0 0
      %527 = vperm.xlu0 %526, %v521
      %v528 = vpop.permute.xlu0 %527
      %531 = vset.pattern.permute.xlu0 0
      %532 = vperm.xlu0 %531, %v522
      %v533 = vpop.permute.xlu0 %532
      %536 = vset.pattern.permute.xlu0 0
      %537 = vperm.xlu0 %536, %v523
      %v538 = vpop.permute.xlu0 %537
      %541 = vset.pattern.permute.xlu0 0
      %542 = vperm.xlu0 %541, %v524
      %v543 = vpop.permute.xlu0 %542
      %v545 = vsub.f32 %v378, %v528
      %v546 = vsub.f32 %v380, %v533
      %v547 = vsub.f32 %v383, %v538
      %v548 = vsub.f32 %v385, %v543
      %v549 = vmul.f32 %v545, %v545
      %v550 = vmul.f32 %v546, %v546
      %v551 = vmul.f32 %v547, %v547
      %v552 = vmul.f32 %v548, %v548
      %v553 = vsel %vm466, %v549, 0.0
      %554 = vadd.xlane.f32.xlu0 %v553
      %v555 = vpop.xlane.xlu0 %554
      %v556 = vsel %vm466, %v550, 0.0
      %557 = vadd.xlane.f32.xlu0 %v556
      %v558 = vpop.xlane.xlu0 %557
      %v559 = vsel %vm466, %v551, 0.0
      %560 = vadd.xlane.f32.xlu0 %v559
      %v561 = vpop.xlane.xlu0 %560
      %v562 = vsel %vm466, %v552, 0.0
      %563 = vadd.xlane.f32.xlu0 %v562
      %v564 = vpop.xlane.xlu0 %563
      %565 = vmatpush.msra.mxu0 0.0
      %566 = vmatpush.msra.mxu0 0.0
      %567 = vmatpush.msra.mxu0 0.0
      %568 = vmatpush.msra.mxu0 0.0
      %569 = vmatpush.msra.mxu0 0.0
      %570 = vmatpush.msra.mxu0 0.0
      %571 = vmatpush.msra.mxu0 0.0
      %572 = vmatpush.msra.mxu0 0.0
      %573 = vmatpush.msra.mxu0 0.0
      %574 = vmatpush.msra.mxu0 0.0
      %575 = vmatpush.msra.mxu0 0.0
      %576 = vmatpush.msra.mxu0 0.0
      %577 = vmatpush.msra.mxu0 %v564
      %578 = vmatpush.msra.mxu0 %v561
      %579 = vmatpush.msra.mxu0 %v558
      %580 = vmatpush.msra.mxu0 %v555
      %581 = vmatmul.f32.gmra.mxu0 %v481
      %v582 = vpop.f32.mrf.mxu0
      %v583 = vadd.f32 0.0, %v582
      %584 = vmatmul.f32.gmra.mxu0 %v484
      %v585 = vpop.f32.mrf.mxu0
      %v586 = vadd.f32 0.0, %v585
      %587 = vmatmul.f32.gmra.mxu0 %v487
      %v588 = vpop.f32.mrf.mxu0
      %v589 = vadd.f32 0.0, %v588
      %590 = vmatmul.f32.gmra.mxu0 %v490
      %v591 = vpop.f32.mrf.mxu0
      %v592 = vadd.f32 0.0, %v591
      %593 = vdwg.mxu0
      %v594 = vmul.f32 %v583, 0.015625
      %v595 = vmul.f32 %v586, 0.015625
      %v596 = vmul.f32 %v589, 0.015625
      %v597 = vmul.f32 %v592, 0.015625
      %v598 = vadd.f32 %v594, 1e-05
      %v599 = vadd.f32 %v595, 1e-05
      %v600 = vadd.f32 %v596, 1e-05
      %v601 = vadd.f32 %v597, 1e-05
      %v602 = vrsqrt.pop %v598
      %v603 = vmul.f32 %v602, %v598
      %v604 = vmul.f32 %v603, %v602
      %v605 = vmul.f32 0.5, %v604
      %v606 = vsub.f32 1.5, %v605
      %v607 = vmul.f32 %v602, %v606
      %vm608 = vweird.f32 %v598
      %vm609 = vweird.f32 %v602
      %vm610 = vmor %vm608, %vm609
      %v611 = vsel %vm610, %v602, %v607
      %v612 = vrsqrt.pop %v599
      %v613 = vmul.f32 %v612, %v599
      %v614 = vmul.f32 %v613, %v612
      %v615 = vmul.f32 0.5, %v614
      %v616 = vsub.f32 1.5, %v615
      %v617 = vmul.f32 %v612, %v616
      %vm618 = vweird.f32 %v599
      %vm619 = vweird.f32 %v612
      %vm620 = vmor %vm618, %vm619
      %v621 = vsel %vm620, %v612, %v617
      %v622 = vrsqrt.pop %v600
      %v623 = vmul.f32 %v622, %v600
      %v624 = vmul.f32 %v623, %v622
      %v625 = vmul.f32 0.5, %v624
      %v626 = vsub.f32 1.5, %v625
      %v627 = vmul.f32 %v622, %v626
      %vm628 = vweird.f32 %v600
      %vm629 = vweird.f32 %v622
      %vm630 = vmor %vm628, %vm629
      %v631 = vsel %vm630, %v622, %v627
      %v632 = vrsqrt.pop %v601
      %v633 = vmul.f32 %v632, %v601
      %v634 = vmul.f32 %v633, %v632
      %v635 = vmul.f32 0.5, %v634
      %v636 = vsub.f32 1.5, %v635
      %v637 = vmul.f32 %v632, %v636
      %vm638 = vweird.f32 %v601
      %vm639 = vweird.f32 %v632
      %vm640 = vmor %vm638, %vm639
      %v641 = vsel %vm640, %v632, %v637
      %643 = vset.pattern.permute.xlu0 0
      %644 = vperm.xlu0 %643, %v611
      %v645 = vpop.permute.xlu0 %644
      %648 = vset.pattern.permute.xlu0 0
      %649 = vperm.xlu0 %648, %v621
      %v650 = vpop.permute.xlu0 %649
      %653 = vset.pattern.permute.xlu0 0
      %654 = vperm.xlu0 %653, %v631
      %v655 = vpop.permute.xlu0 %654
      %658 = vset.pattern.permute.xlu0 0
      %659 = vperm.xlu0 %658, %v641
      %v660 = vpop.permute.xlu0 %659
      %v662 = vmul.f32 %v545, %v645
      %v663 = vmul.f32 %v546, %v650
      %v664 = vmul.f32 %v547, %v655
      %v665 = vmul.f32 %v548, %v660
      %s666 = sld [smem:[#allocation2]]
      %vm667 = vcmp.ge.f32.partialorder %v662, 0.0
      %vm668 = vcmp.ge.f32.partialorder %v663, 0.0
      %vm669 = vcmp.ge.f32.partialorder %v664, 0.0
      %vm670 = vcmp.ge.f32.partialorder %v665, 0.0
      %v671 = vstv %s666
      %v672 = vmul.f32 %v671, %v662
      %v673 = vmul.f32 %v671, %v663
      %v674 = vmul.f32 %v671, %v664
      %v675 = vmul.f32 %v671, %v665
      %v676 = vsel %vm667, %v662, %v672
      %v677 = vsel %vm668, %v663, %v673
      %v678 = vsel %vm669, %v664, %v674
      %v679 = vsel %vm670, %v665, %v675
      %680 = vst.msk [vmem:[%s198] sm:$0xff] %vm466, %v676
      %681 = vst.msk [vmem:[%s198 + $0x8] sm:$0xff] %vm466, %v677
      %682 = vst.msk [vmem:[%s198 + $0x10] sm:$0xff] %vm466, %v678
      %683 = vst.msk [vmem:[%s198 + $0x18] sm:$0xff] %vm466, %v679
      %p684 = scmp.lt.s32.totalorder %s16, 1
      %s685 = scalar_select %p684, %s16, 1
      %s686 = smul.addr %s685, 4
      %s687 = smul.addr %s686, 8
      %s688 = scalar_lea.vmem %s4, %s687
      // Predicated region
      $region37: #{multi_head_unet_forward.8} parent=35 // pred_check
        %p689 = pneg %p123
      $region38: #{multi_head_unet_forward.8} parent=35 // pred_check_branch
        %691 = sbr.rel (%p689) target = $region40
      $region39: #{multi_head_unet_forward.8} parent=35 // pred_region
        _
      $region40: #{multi_head_unet_forward.8} parent=35 // pred_fallthru
        _
    $region36: #{multi_head_unet_forward.8} parent=5 // pred_fallthru
      _
    %p692 = scmp.le.s32.totalorder 2, %s11
    // Predicated region
    $region41: #{multi_head_unet_forward.8} parent=5 // pred_check
      %p693 = pneg %p692
    $region42: #{multi_head_unet_forward.8} parent=5 // pred_check_branch
      %695 = sbr.rel (%p693) target = $region44
    $region43: #{multi_head_unet_forward.8} parent=5 // pred_region
      %s696 = ssub.s32 %s11, 2
      // Predicated region
      $region45: #{multi_head_unet_forward.8} parent=43 // pred_check
        %p697 = pneg %p129
      $region46: #{multi_head_unet_forward.8} parent=43 // pred_check_branch
        %699 = sbr.rel (%p697) target = $region48
      $region47: #{multi_head_unet_forward.8} parent=43 // pred_region
        %p700 = scmp.lt.s32.totalorder %s17, 1
        %s701 = scalar_select %p700, %s17, 1
        %s702 = smul.addr %s701, 4
        %s703 = smul.addr %s702, 8
        %s704 = scalar_lea.vmem %s4, %s703
      $region48: #{multi_head_unet_forward.8} parent=43 // pred_fallthru
        _
    $region44: #{multi_head_unet_forward.8} parent=5 // pred_fallthru
      _
  $region6: #{multi_head_unet_forward.8} parent=0 // loop_footer
    %s15 = sadd.s32 1, %s11
  $region7: #{multi_head_unet_forward.8} parent=0 // loop_footer_branch
    %10 = sbr.rel target = $region3
  $region8: #{multi_head_unet_forward.8} parent=0 // loop_exit
    _

// kernel: multi_head_unet_forward.9
$region0: #{multi_head_unet_forward.9}
  #allocation0 [shape = 'u32[]', space=smem, size = 0x4, offset = 0x4, fixed_abs, tag = 'smem constant byte address 0x4 - core index']
  #allocation1 [shape = 'u32[72,128]{1,0:T(1,128)}', space=vmem, size = 0x9000, scoped, tag = 'internal scratch']
  #allocation2 [shape = 'f32[1]{0:T(128)S(6)}', space=smem, size = 0x200, scoped, tag = 'scoped memory for multi_head_unet_forward.9']
  %s0 = inlined_call_operand.vmem [shape: bf16[2,64,64], index: 0, kind: input, shape index: {}]
  %s1 = inlined_call_operand.vmem [shape: bf16[32,64], index: 1, kind: input, shape index: {}]
  %s2 = inlined_call_operand.vmem [shape: f32[32,1], index: 2, kind: input, shape index: {}]
  %s3 = inlined_call_operand.<no memory space> [shape: f32[1], index: 3, kind: input, shape index: {}]
  %s4 = inlined_call_operand.vmem [shape: f32[2,32,64], index: 4, kind: output, shape index: {}]
  %s5 = sld [smem:[#allocation0]]
  $region49: #{multi_head_unet_forward.9} parent=0
    _
  %s7 = ssub.s32 1, %s5
  %s8 = scalar_select 0, %s7, %s5
  %9 = sst [smem:[#allocation2]] %s3
  loop: start=0, step=1, limit=4
  $region2: #{multi_head_unet_forward.9} parent=0 // loop_pre_header
    _
  $region3: #{multi_head_unet_forward.9} parent=0 // loop_header
    %s11 = sphi 0, %s15
    %p12 = scmp.ge.s32.totalorder %s11, 4
    %s21 = sphi 0, %s23
    %s24 = sphi 0, %s21
    %s25 = sphi 0, %s24
    %s41 = sphi 0, %s25
    %s45 = sphi 0, %s45
    %s47 = sphi 0, %s45
    %s48 = sphi 0, %s47
    %s62 = sphi 0, %s48
    %s66 = sphi 0, %s66
    %s68 = sphi 0, %s66
    %s69 = sphi 0, %s68
    %s83 = sphi 0, %s69
    %s87 = sphi 0, %s87
    %s89 = sphi 0, %s87
    %s90 = sphi 0, %s89
    %s104 = sphi 0, %s90
    %s110 = sphi 0, %s112
    %s113 = sphi 0, %s110
    %s114 = sphi 0, %s113
    %s130 = sphi 0, %s114
  $region4: #{multi_head_unet_forward.9} parent=0 // loop_header_branch
    %14 = sbr.rel (%p12) target = $region8
  $region5: #{multi_head_unet_forward.9} parent=0 // loop_body
    %s16 = ssub.s32 %s11, 1
    %s17 = ssub.s32 %s11, 2
    %s18 = sadd.s32 %s11, 1
    %s19 = ssub.s32 %s11, %s18
    %p20 = scmp.eq.s32.totalorder %s19, 0
    %s22 = sadd.s32 %s21, 1
    %s23 = scalar_select %p20, %s21, %s22
    %p26 = pneg %p20
    %p27 = scmp.eq.s32.totalorder %s11, 1
    %p28 = por %p26, %p27
    %p29 = scmp.ne.s32.totalorder %s21, %s24
    %p30 = scmp.eq.s32.totalorder %s11, 0
    %p31 = por %p29, %p30
    %p32 = scmp.ne.s32.totalorder %s21, %s24
    %p33 = scmp.eq.s32.totalorder %s16, 1
    %p34 = por %p32, %p33
    %p35 = scmp.ne.s32.totalorder %s24, %s25
    %p36 = scmp.eq.s32.totalorder %s16, 0
    %p37 = por %p35, %p36
    %p38 = scmp.ne.s32.totalorder %s24, %s25
    %p39 = scmp.eq.s32.totalorder %s17, 1
    %p40 = por %p38, %p39
    %p42 = scmp.ne.s32.totalorder %s25, %s41
    %p43 = scmp.eq.s32.totalorder %s17, 0
    %p44 = por %p42, %p43
    %s46 = sadd.s32 %s45, 1
    %p49 = scmp.eq.s32.totalorder %s11, 1
    %p50 = scmp.ne.s32.totalorder %s45, %s47
    %p51 = scmp.eq.s32.totalorder %s11, 0
    %p52 = por %p50, %p51
    %p53 = scmp.ne.s32.totalorder %s45, %s47
    %p54 = scmp.eq.s32.totalorder %s16, 1
    %p55 = por %p53, %p54
    %p56 = scmp.ne.s32.totalorder %s47, %s48
    %p57 = scmp.eq.s32.totalorder %s16, 0
    %p58 = por %p56, %p57
    %p59 = scmp.ne.s32.totalorder %s47, %s48
    %p60 = scmp.eq.s32.totalorder %s17, 1
    %p61 = por %p59, %p60
    %p63 = scmp.ne.s32.totalorder %s48, %s62
    %p64 = scmp.eq.s32.totalorder %s17, 0
    %p65 = por %p63, %p64
    %s67 = sadd.s32 %s66, 1
    %p70 = scmp.eq.s32.totalorder %s11, 1
    %p71 = scmp.ne.s32.totalorder %s66, %s68
    %p72 = scmp.eq.s32.totalorder %s11, 0
    %p73 = por %p71, %p72
    %p74 = scmp.ne.s32.totalorder %s66, %s68
    %p75 = scmp.eq.s32.totalorder %s16, 1
    %p76 = por %p74, %p75
    %p77 = scmp.ne.s32.totalorder %s68, %s69
    %p78 = scmp.eq.s32.totalorder %s16, 0
    %p79 = por %p77, %p78
    %p80 = scmp.ne.s32.totalorder %s68, %s69
    %p81 = scmp.eq.s32.totalorder %s17, 1
    %p82 = por %p80, %p81
    %p84 = scmp.ne.s32.totalorder %s69, %s83
    %p85 = scmp.eq.s32.totalorder %s17, 0
    %p86 = por %p84, %p85
    %s88 = sadd.s32 %s87, 1
    %p91 = scmp.eq.s32.totalorder %s11, 1
    %p92 = scmp.ne.s32.totalorder %s87, %s89
    %p93 = scmp.eq.s32.totalorder %s11, 0
    %p94 = por %p92, %p93
    %p95 = scmp.ne.s32.totalorder %s87, %s89
    %p96 = scmp.eq.s32.totalorder %s16, 1
    %p97 = por %p95, %p96
    %p98 = scmp.ne.s32.totalorder %s89, %s90
    %p99 = scmp.eq.s32.totalorder %s16, 0
    %p100 = por %p98, %p99
    %p101 = scmp.ne.s32.totalorder %s89, %s90
    %p102 = scmp.eq.s32.totalorder %s17, 1
    %p103 = por %p101, %p102
    %p105 = scmp.ne.s32.totalorder %s90, %s104
    %p106 = scmp.eq.s32.totalorder %s17, 0
    %p107 = por %p105, %p106
    %s108 = ssub.s32 %s11, %s18
    %p109 = scmp.eq.s32.totalorder %s108, 0
    %s111 = sadd.s32 %s110, 1
    %s112 = scalar_select %p109, %s110, %s111
    %p115 = pneg %p109
    %p116 = scmp.eq.s32.totalorder %s11, 1
    %p117 = por %p115, %p116
    %p118 = scmp.ne.s32.totalorder %s110, %s113
    %p119 = scmp.eq.s32.totalorder %s11, 0
    %p120 = por %p118, %p119
    %p121 = scmp.ne.s32.totalorder %s110, %s113
    %p122 = scmp.eq.s32.totalorder %s16, 1
    %p123 = por %p121, %p122
    %p124 = scmp.ne.s32.totalorder %s113, %s114
    %p125 = scmp.eq.s32.totalorder %s16, 0
    %p126 = por %p124, %p125
    %p127 = scmp.ne.s32.totalorder %s113, %s114
    %p128 = scmp.eq.s32.totalorder %s17, 1
    %p129 = por %p127, %p128
    %p131 = scmp.ne.s32.totalorder %s114, %s130
    %p132 = scmp.eq.s32.totalorder %s17, 0
    %p133 = por %p131, %p132
    %p134 = scmp.le.s32.totalorder 1, %s11
    %p135 = scmp.lt.s32.totalorder %s11, 3
    %p136 = pnand %p134, %p135
    %p137 = pneg %p136
    // Predicated region
    $region9: #{multi_head_unet_forward.9} parent=5 // pred_check
      _
    $region10: #{multi_head_unet_forward.9} parent=5 // pred_check_branch
      %139 = sbr.rel (%p136) target = $region12
    $region11: #{multi_head_unet_forward.9} parent=5 // pred_region
      %s140 = ssub.s32 %s11, 1
      // Predicated region
      $region13: #{multi_head_unet_forward.9} parent=11 // pred_check
        %p141 = pneg %p58
      $region14: #{multi_head_unet_forward.9} parent=11 // pred_check_branch
        %143 = sbr.rel (%p141) target = $region16
      $region15: #{multi_head_unet_forward.9} parent=11 // pred_region
        _
      $region16: #{multi_head_unet_forward.9} parent=11 // pred_fallthru
        _
      // Predicated region
      $region17: #{multi_head_unet_forward.9} parent=11 // pred_check
        %p144 = pneg %p79
      $region18: #{multi_head_unet_forward.9} parent=11 // pred_check_branch
        %146 = sbr.rel (%p144) target = $region20
      $region19: #{multi_head_unet_forward.9} parent=11 // pred_region
        _
      $region20: #{multi_head_unet_forward.9} parent=11 // pred_fallthru
        _
      // Predicated region
      $region21: #{multi_head_unet_forward.9} parent=11 // pred_check
        %p147 = pneg %p100
      $region22: #{multi_head_unet_forward.9} parent=11 // pred_check_branch
        %149 = sbr.rel (%p147) target = $region24
      $region23: #{multi_head_unet_forward.9} parent=11 // pred_region
        _
      $region24: #{multi_head_unet_forward.9} parent=11 // pred_fallthru
        _
    $region12: #{multi_head_unet_forward.9} parent=5 // pred_fallthru
      _
    %p150 = scmp.lt.s32.totalorder %s11, 2
    // Predicated region
    $region25: #{multi_head_unet_forward.9} parent=5 // pred_check
      %p151 = pneg %p150
    $region26: #{multi_head_unet_forward.9} parent=5 // pred_check_branch
      %153 = sbr.rel (%p151) target = $region28
    $region27: #{multi_head_unet_forward.9} parent=5 // pred_region
      // Predicated region
      $region29: #{multi_head_unet_forward.9} parent=27 // pred_check
        %p154 = pneg %p31
      $region30: #{multi_head_unet_forward.9} parent=27 // pred_check_branch
        %156 = sbr.rel (%p154) target = $region32
      $region31: #{multi_head_unet_forward.9} parent=27 // pred_region
        %p157 = scmp.lt.s32.totalorder %s11, 1
        %s158 = scalar_select %p157, %s11, 1
        %s159 = smul.addr %s158, 8
        %s160 = smul.addr %s159, 4
        %s161 = scalar_lea.vmem %s0, %s160
      $region32: #{multi_head_unet_forward.9} parent=27 // pred_fallthru
        _
    $region28: #{multi_head_unet_forward.9} parent=5 // pred_fallthru
      _
    %p162 = scmp.le.s32.totalorder 1, %s11
    %p163 = scmp.lt.s32.totalorder %s11, 3
    %p164 = pnand %p162, %p163
    %p165 = pneg %p164
    // Predicated region
    $region33: #{multi_head_unet_forward.9} parent=5 // pred_check
      _
    $region34: #{multi_head_unet_forward.9} parent=5 // pred_check_branch
      %167 = sbr.rel (%p164) target = $region36
    $region35: #{multi_head_unet_forward.9} parent=5 // pred_region
      %s168 = ssub.s32 %s11, 1
      %p169 = scmp.lt.s32.totalorder %s16, 1
      %s170 = scalar_select %p169, %s16, 1
      %s171 = smul.addr %s170, 8
      %s172 = smul.addr %s171, 4
      %s173 = scalar_lea.vmem %s0, %s172
      %p174 = pneg %p37
      %p175 = pneg %p34
      %p176 = pneg %p58
      %p177 = pneg %p55
      %p178 = pneg %p79
      %p179 = pneg %p76
      %p180 = pneg %p100
      %p181 = pneg %p97
      %p182 = pneg %p126
      %p183 = pneg %p123
      %p184 = scmp.lt.s32.totalorder %s16, 1
      %s185 = scalar_select %p184, %s16, 1
      %s186 = smul.addr %s185, 4
      %s187 = smul.addr %s186, 8
      %s188 = scalar_lea.vmem %s4, %s187
      %p189 = scmp.lt.s32.totalorder %s16, 1
      %s190 = scalar_select %p189, %s16, 1
      %s191 = smul.addr %s190, 8
      %s192 = smul.addr %s191, 4
      %s193 = scalar_lea.vmem %s0, %s192
      %p194 = scmp.lt.s32.totalorder %s16, 1
      %s195 = scalar_select %p194, %s16, 1
      %s196 = smul.addr %s195, 4
      %s197 = smul.addr %s196, 8
      %s198 = scalar_lea.vmem %s4, %s197
      %v200 = vld [vmem:[%s1] sm:$0xf]
      %v201 = vld [vmem:[%s1 + $0x4] sm:$0xf]
      %v202 = vld [vmem:[%s1 + $0x8] sm:$0xf]
      %v203 = vld [vmem:[%s1 + $0xc] sm:$0xf]
      %v204 = vld [vmem:[%s193] sm:$0xf]
      %v205 = vld [vmem:[%s193 + $0x4] sm:$0xf]
      %v206 = vld [vmem:[%s193 + $0x8] sm:$0xf]
      %v207 = vld [vmem:[%s193 + $0xc] sm:$0xf]
      %v208 = vld [vmem:[%s193 + $0x10] sm:$0xf]
      %v209 = vld [vmem:[%s193 + $0x14] sm:$0xf]
      %v210 = vld [vmem:[%s193 + $0x18] sm:$0xf]
      %v211 = vld [vmem:[%s193 + $0x1c] sm:$0xf]
      %v212 = vld [vmem:[%s2] sm:$0xff]
      %v213 = vld [vmem:[%s2 + $0x8] sm:$0xff]
      %v214 = vld [vmem:[%s2 + $0x10] sm:$0xff]
      %v215 = vld [vmem:[%s2 + $0x18] sm:$0xff]
      %217 = vset.pattern.permute.xlu0 0
      %218 = vperm.xlu0 %217, %v212
      %v219 = vpop.permute.xlu0 %218
      %222 = vset.pattern.permute.xlu0 0
      %223 = vperm.xlu0 %222, %v213
      %v224 = vpop.permute.xlu0 %223
      %227 = vset.pattern.permute.xlu0 0
      %228 = vperm.xlu0 %227, %v214
      %v229 = vpop.permute.xlu0 %228
      %232 = vset.pattern.permute.xlu0 0
      %233 = vperm.xlu0 %232, %v215
      %v234 = vpop.permute.xlu0 %233
      %v240 = vunpack.c.l.b16 %v200
      %v241 = vunpack.c.l.b16 %v201
      %v242 = vunpack.c.l.b16 %v202
      %v243 = vunpack.c.l.b16 %v203
      %v244 = vpack.c.b16 %v241, %v240
      %v245 = vpack.c.b16 %v243, %v242
      %v254 = vunpack.c.l.b16 %v204
      %v255 = vunpack.c.l.b16 %v205
      %v256 = vunpack.c.l.b16 %v206
      %v257 = vunpack.c.l.b16 %v207
      %v258 = vunpack.c.l.b16 %v208
      %v259 = vunpack.c.l.b16 %v209
      %v260 = vunpack.c.l.b16 %v210
      %v261 = vunpack.c.l.b16 %v211
      %v262 = vpack.c.b16 %v255, %v254
      %v263 = vpack.c.b16 %v257, %v256
      %v264 = vpack.c.b16 %v259, %v258
      %v265 = vpack.c.b16 %v261, %v260
      %vm270 = vcmask 523264
      %v272 = vsel %vm270, %v244, 0
      %v275 = vsel %vm270, %v245, 0
      %277 = vmatpush.bf16.msra.mxu0 0
      %278 = vmatpush.bf16.msra.mxu0 0
      %279 = vmatpush.bf16.msra.mxu0 0
      %280 = vmatpush.bf16.msra.mxu0 0
      %281 = vmatpush.bf16.msra.mxu0 %v265
      %282 = vmatpush.bf16.msra.mxu0 %v264
      %283 = vmatpush.bf16.msra.mxu0 %v263
      %284 = vmatpush.bf16.msra.mxu0 %v262
      %285 = vmatmul.bf16.gmra.mxu0 %v272
      %v286 = vpop.f32.mrf.mxu0
      %v287 = vadd.f32 %v219, %v286
      %v288 = vpop.f32.mrf.mxu0
      %v289 = vadd.f32 %v224, %v288
      %290 = vmatmul.bf16.gmra.mxu0 %v275
      %v291 = vpop.f32.mrf.mxu0
      %v292 = vadd.f32 %v229, %v291
      %v293 = vpop.f32.mrf.mxu0
      %v294 = vadd.f32 %v234, %v293
      %295 = vdwg.mxu0
      %296 = vst.msk [vmem:[%s198] sm:$0xff] %vm270, %v287
      %297 = vst.msk [vmem:[%s198 + $0x8] sm:$0xff] %vm270, %v289
      %298 = vst.msk [vmem:[%s198 + $0x10] sm:$0xff] %vm270, %v292
      %299 = vst.msk [vmem:[%s198 + $0x18] sm:$0xff] %vm270, %v294
      %p300 = scmp.lt.s32.totalorder %s16, 1
      %s301 = scalar_select %p300, %s16, 1
      %s302 = smul.addr %s301, 4
      %s303 = smul.addr %s302, 8
      %s304 = scalar_lea.vmem %s4, %s303
      // Predicated region
      $region37: #{multi_head_unet_forward.9} parent=35 // pred_check
        %p305 = pneg %p123
      $region38: #{multi_head_unet_forward.9} parent=35 // pred_check_branch
        %307 = sbr.rel (%p305) target = $region40
      $region39: #{multi_head_unet_forward.9} parent=35 // pred_region
        _
      $region40: #{multi_head_unet_forward.9} parent=35 // pred_fallthru
        _
    $region36: #{multi_head_unet_forward.9} parent=5 // pred_fallthru
      _
    %p308 = scmp.le.s32.totalorder 2, %s11
    // Predicated region
    $region41: #{multi_head_unet_forward.9} parent=5 // pred_check
      %p309 = pneg %p308
    $region42: #{multi_head_unet_forward.9} parent=5 // pred_check_branch
      %311 = sbr.rel (%p309) target = $region44
    $region43: #{multi_head_unet_forward.9} parent=5 // pred_region
      %s312 = ssub.s32 %s11, 2
      // Predicated region
      $region45: #{multi_head_unet_forward.9} parent=43 // pred_check
        %p313 = pneg %p129
      $region46: #{multi_head_unet_forward.9} parent=43 // pred_check_branch
        %315 = sbr.rel (%p313) target = $region48
      $region47: #{multi_head_unet_forward.9} parent=43 // pred_region
        %p316 = scmp.lt.s32.totalorder %s17, 1
        %s317 = scalar_select %p316, %s17, 1
        %s318 = smul.addr %s317, 4
        %s319 = smul.addr %s318, 8
        %s320 = scalar_lea.vmem %s4, %s319
      $region48: #{multi_head_unet_forward.9} parent=43 // pred_fallthru
        _
    $region44: #{multi_head_unet_forward.9} parent=5 // pred_fallthru
      _
  $region6: #{multi_head_unet_forward.9} parent=0 // loop_footer
    %s15 = sadd.s32 1, %s11
  $region7: #{multi_head_unet_forward.9} parent=0 // loop_footer_branch
    %10 = sbr.rel target = $region3
  $region8: #{multi_head_unet_forward.9} parent=0 // loop_exit
    _

// kernel: squeeze.2
$region0: #{squeeze.2}
  %s0 = inlined_call_operand.vmem [shape: f32[1,2,2,4,2,4,2,4,2], index: 0, kind: input, shape index: {}]
  %s1 = inlined_call_operand.hbm [shape: f32[2,2,8,8,8], index: 1, kind: output, shape index: {}]
  $region1: #{squeeze.2} parent=0
    #allocation0 [shape = 'u8[131072]{0}', space=vmem, size = 0x20000, scoped, tag = 'operand span for operand 1']
    #allocation1 [shape = 's32[1]{0}', space=sflag, size = 0x4, scoped, tag = 'scoped memory for squeeze.2']
    #allocation2 [shape = 'u8[1048576]{0}', space=vmem, size = 0x100000, scoped, tag = 'scoped mem for input reshape']
    %2 = vsyncpa [#allocation1], 0
    %s4 = ssub.s32 16, 1
    %s5 = scalar_lea.vmem %s0, 1020
    %v6 = vld [vmem:[%s5] sm:%s4]
    %s7 = scalar_lea.vmem [#allocation2], 2040
    %8 = vst [vmem:[%s7] sm:%s4] %v6
    %s9 = scalar_lea.vmem %s0, 1016
    %v10 = vld [vmem:[%s9] sm:%s4]
    %s11 = scalar_lea.vmem [#allocation2], 2032
    %12 = vst [vmem:[%s11] sm:%s4] %v10
    %s13 = scalar_lea.vmem %s0, 1012
    %v14 = vld [vmem:[%s13] sm:%s4]
    %s15 = scalar_lea.vmem [#allocation2], 2024
    %16 = vst [vmem:[%s15] sm:%s4] %v14
    %s17 = scalar_lea.vmem %s0, 1008
    %v18 = vld [vmem:[%s17] sm:%s4]
    %s19 = scalar_lea.vmem [#allocation2], 2016
    %20 = vst [vmem:[%s19] sm:%s4] %v18
    %s21 = scalar_lea.vmem %s0, 1004
    %v22 = vld [vmem:[%s21] sm:%s4]
    %s23 = scalar_lea.vmem [#allocation2], 2008
    %24 = vst [vmem:[%s23] sm:%s4] %v22
    %s25 = scalar_lea.vmem %s0, 1000
    %v26 = vld [vmem:[%s25] sm:%s4]
    %s27 = scalar_lea.vmem [#allocation2], 2000
    %28 = vst [vmem:[%s27] sm:%s4] %v26
    %s29 = scalar_lea.vmem %s0, 996
    %v30 = vld [vmem:[%s29] sm:%s4]
    %s31 = scalar_lea.vmem [#allocation2], 1992
    %32 = vst [vmem:[%s31] sm:%s4] %v30
    %s33 = scalar_lea.vmem %s0, 992
    %v34 = vld [vmem:[%s33] sm:%s4]
    %s35 = scalar_lea.vmem [#allocation2], 1984
    %36 = vst [vmem:[%s35] sm:%s4] %v34
    %s37 = scalar_lea.vmem %s0, 988
    %v38 = vld [vmem:[%s37] sm:%s4]
    %s39 = scalar_lea.vmem [#allocation2], 1976
    %40 = vst [vmem:[%s39] sm:%s4] %v38
    %s41 = scalar_lea.vmem %s0, 984
    %v42 = vld [vmem:[%s41] sm:%s4]
    %s43 = scalar_lea.vmem [#allocation2], 1968
    %44 = vst [vmem:[%s43] sm:%s4] %v42
    %s45 = scalar_lea.vmem %s0, 980
    %v46 = vld [vmem:[%s45] sm:%s4]
    %s47 = scalar_lea.vmem [#allocation2], 1960
    %48 = vst [vmem:[%s47] sm:%s4] %v46
    %s49 = scalar_lea.vmem %s0, 976
    %v50 = vld [vmem:[%s49] sm:%s4]
    %s51 = scalar_lea.vmem [#allocation2], 1952
    %52 = vst [vmem:[%s51] sm:%s4] %v50
    %s53 = scalar_lea.vmem %s0, 972
    %v54 = vld [vmem:[%s53] sm:%s4]
    %s55 = scalar_lea.vmem [#allocation2], 1944
    %56 = vst [vmem:[%s55] sm:%s4] %v54
    %s57 = scalar_lea.vmem %s0, 968
    %v58 = vld [vmem:[%s57] sm:%s4]
    %s59 = scalar_lea.vmem [#allocation2], 1936
    %60 = vst [vmem:[%s59] sm:%s4] %v58
    %s61 = scalar_lea.vmem %s0, 964
    %v62 = vld [vmem:[%s61] sm:%s4]
    %s63 = scalar_lea.vmem [#allocation2], 1928
    %64 = vst [vmem:[%s63] sm:%s4] %v62
    %s65 = scalar_lea.vmem %s0, 960
    %v66 = vld [vmem:[%s65] sm:%s4]
    %s67 = scalar_lea.vmem [#allocation2], 1920
    %68 = vst [vmem:[%s67] sm:%s4] %v66
    %s69 = scalar_lea.vmem %s0, 956
    %v70 = vld [vmem:[%s69] sm:%s4]
    %s71 = scalar_lea.vmem [#allocation2], 1912
    %72 = vst [vmem:[%s71] sm:%s4] %v70
    %s73 = scalar_lea.vmem %s0, 952
    %v74 = vld [vmem:[%s73] sm:%s4]
    %s75 = scalar_lea.vmem [#allocation2], 1904
    %76 = vst [vmem:[%s75] sm:%s4] %v74
    %s77 = scalar_lea.vmem %s0, 948
    %v78 = vld [vmem:[%s77] sm:%s4]
    %s79 = scalar_lea.vmem [#allocation2], 1896
    %80 = vst [vmem:[%s79] sm:%s4] %v78
    %s81 = scalar_lea.vmem %s0, 944
    %v82 = vld [vmem:[%s81] sm:%s4]
    %s83 = scalar_lea.vmem [#allocation2], 1888
    %84 = vst [vmem:[%s83] sm:%s4] %v82
    %s85 = scalar_lea.vmem %s0, 940
    %v86 = vld [vmem:[%s85] sm:%s4]
    %s87 = scalar_lea.vmem [#allocation2], 1880
    %88 = vst [vmem:[%s87] sm:%s4] %v86
    %s89 = scalar_lea.vmem %s0, 936
    %v90 = vld [vmem:[%s89] sm:%s4]
    %s91 = scalar_lea.vmem [#allocation2], 1872
    %92 = vst [vmem:[%s91] sm:%s4] %v90
    %s93 = scalar_lea.vmem %s0, 932
    %v94 = vld [vmem:[%s93] sm:%s4]
    %s95 = scalar_lea.vmem [#allocation2], 1864
    %96 = vst [vmem:[%s95] sm:%s4] %v94
    %s97 = scalar_lea.vmem %s0, 928
    %v98 = vld [vmem:[%s97] sm:%s4]
    %s99 = scalar_lea.vmem [#allocation2], 1856
    %100 = vst [vmem:[%s99] sm:%s4] %v98
    %s101 = scalar_lea.vmem %s0, 924
    %v102 = vld [vmem:[%s101] sm:%s4]
    %s103 = scalar_lea.vmem [#allocation2], 1848
    %104 = vst [vmem:[%s103] sm:%s4] %v102
    %s105 = scalar_lea.vmem %s0, 920
    %v106 = vld [vmem:[%s105] sm:%s4]
    %s107 = scalar_lea.vmem [#allocation2], 1840
    %108 = vst [vmem:[%s107] sm:%s4] %v106
    %s109 = scalar_lea.vmem %s0, 916
    %v110 = vld [vmem:[%s109] sm:%s4]
    %s111 = scalar_lea.vmem [#allocation2], 1832
    %112 = vst [vmem:[%s111] sm:%s4] %v110
    %s113 = scalar_lea.vmem %s0, 912
    %v114 = vld [vmem:[%s113] sm:%s4]
    %s115 = scalar_lea.vmem [#allocation2], 1824
    %116 = vst [vmem:[%s115] sm:%s4] %v114
    %s117 = scalar_lea.vmem %s0, 908
    %v118 = vld [vmem:[%s117] sm:%s4]
    %s119 = scalar_lea.vmem [#allocation2], 1816
    %120 = vst [vmem:[%s119] sm:%s4] %v118
    %s121 = scalar_lea.vmem %s0, 904
    %v122 = vld [vmem:[%s121] sm:%s4]
    %s123 = scalar_lea.vmem [#allocation2], 1808
    %124 = vst [vmem:[%s123] sm:%s4] %v122
    %s125 = scalar_lea.vmem %s0, 900
    %v126 = vld [vmem:[%s125] sm:%s4]
    %s127 = scalar_lea.vmem [#allocation2], 1800
    %128 = vst [vmem:[%s127] sm:%s4] %v126
    %s129 = scalar_lea.vmem %s0, 896
    %v130 = vld [vmem:[%s129] sm:%s4]
    %s131 = scalar_lea.vmem [#allocation2], 1792
    %132 = vst [vmem:[%s131] sm:%s4] %v130
    %s133 = scalar_lea.vmem %s0, 892
    %v134 = vld [vmem:[%s133] sm:%s4]
    %s135 = scalar_lea.vmem [#allocation2], 1784
    %136 = vst [vmem:[%s135] sm:%s4] %v134
    %s137 = scalar_lea.vmem %s0, 888
    %v138 = vld [vmem:[%s137] sm:%s4]
    %s139 = scalar_lea.vmem [#allocation2], 1776
    %140 = vst [vmem:[%s139] sm:%s4] %v138
    %s141 = scalar_lea.vmem %s0, 884
    %v142 = vld [vmem:[%s141] sm:%s4]
    %s143 = scalar_lea.vmem [#allocation2], 1768
    %144 = vst [vmem:[%s143] sm:%s4] %v142
    %s145 = scalar_lea.vmem %s0, 880
    %v146 = vld [vmem:[%s145] sm:%s4]
    %s147 = scalar_lea.vmem [#allocation2], 1760
    %148 = vst [vmem:[%s147] sm:%s4] %v146
    %s149 = scalar_lea.vmem %s0, 876
    %v150 = vld [vmem:[%s149] sm:%s4]
    %s151 = scalar_lea.vmem [#allocation2], 1752
    %152 = vst [vmem:[%s151] sm:%s4] %v150
    %s153 = scalar_lea.vmem %s0, 872
    %v154 = vld [vmem:[%s153] sm:%s4]
    %s155 = scalar_lea.vmem [#allocation2], 1744
    %156 = vst [vmem:[%s155] sm:%s4] %v154
    %s157 = scalar_lea.vmem %s0, 868
    %v158 = vld [vmem:[%s157] sm:%s4]
    %s159 = scalar_lea.vmem [#allocation2], 1736
    %160 = vst [vmem:[%s159] sm:%s4] %v158
    %s161 = scalar_lea.vmem %s0, 864
    %v162 = vld [vmem:[%s161] sm:%s4]
    %s163 = scalar_lea.vmem [#allocation2], 1728
    %164 = vst [vmem:[%s163] sm:%s4] %v162
    %s165 = scalar_lea.vmem %s0, 860
    %v166 = vld [vmem:[%s165] sm:%s4]
    %s167 = scalar_lea.vmem [#allocation2], 1720
    %168 = vst [vmem:[%s167] sm:%s4] %v166
    %s169 = scalar_lea.vmem %s0, 856
    %v170 = vld [vmem:[%s169] sm:%s4]
    %s171 = scalar_lea.vmem [#allocation2], 1712
    %172 = vst [vmem:[%s171] sm:%s4] %v170
    %s173 = scalar_lea.vmem %s0, 852
    %v174 = vld [vmem:[%s173] sm:%s4]
    %s175 = scalar_lea.vmem [#allocation2], 1704
    %176 = vst [vmem:[%s175] sm:%s4] %v174
    %s177 = scalar_lea.vmem %s0, 848
    %v178 = vld [vmem:[%s177] sm:%s4]
    %s179 = scalar_lea.vmem [#allocation2], 1696
    %180 = vst [vmem:[%s179] sm:%s4] %v178
    %s181 = scalar_lea.vmem %s0, 844
    %v182 = vld [vmem:[%s181] sm:%s4]
    %s183 = scalar_lea.vmem [#allocation2], 1688
    %184 = vst [vmem:[%s183] sm:%s4] %v182
    %s185 = scalar_lea.vmem %s0, 840
    %v186 = vld [vmem:[%s185] sm:%s4]
    %s187 = scalar_lea.vmem [#allocation2], 1680
    %188 = vst [vmem:[%s187] sm:%s4] %v186
    %s189 = scalar_lea.vmem %s0, 836
    %v190 = vld [vmem:[%s189] sm:%s4]
    %s191 = scalar_lea.vmem [#allocation2], 1672
    %192 = vst [vmem:[%s191] sm:%s4] %v190
    %s193 = scalar_lea.vmem %s0, 832
    %v194 = vld [vmem:[%s193] sm:%s4]
    %s195 = scalar_lea.vmem [#allocation2], 1664
    %196 = vst [vmem:[%s195] sm:%s4] %v194
    %s197 = scalar_lea.vmem %s0, 828
    %v198 = vld [vmem:[%s197] sm:%s4]
    %s199 = scalar_lea.vmem [#allocation2], 1656
    %200 = vst [vmem:[%s199] sm:%s4] %v198
    %s201 = scalar_lea.vmem %s0, 824
    %v202 = vld [vmem:[%s201] sm:%s4]
    %s203 = scalar_lea.vmem [#allocation2], 1648
    %204 = vst [vmem:[%s203] sm:%s4] %v202
    %s205 = scalar_lea.vmem %s0, 820
    %v206 = vld [vmem:[%s205] sm:%s4]
    %s207 = scalar_lea.vmem [#allocation2], 1640
    %208 = vst [vmem:[%s207] sm:%s4] %v206
    %s209 = scalar_lea.vmem %s0, 816
    %v210 = vld [vmem:[%s209] sm:%s4]
    %s211 = scalar_lea.vmem [#allocation2], 1632
    %212 = vst [vmem:[%s211] sm:%s4] %v210
    %s213 = scalar_lea.vmem %s0, 812
    %v214 = vld [vmem:[%s213] sm:%s4]
    %s215 = scalar_lea.vmem [#allocation2], 1624
    %216 = vst [vmem:[%s215] sm:%s4] %v214
    %s217 = scalar_lea.vmem %s0, 808
    %v218 = vld [vmem:[%s217] sm:%s4]
    %s219 = scalar_lea.vmem [#allocation2], 1616
    %220 = vst [vmem:[%s219] sm:%s4] %v218
    %s221 = scalar_lea.vmem %s0, 804
    %v222 = vld [vmem:[%s221] sm:%s4]
    %s223 = scalar_lea.vmem [#allocation2], 1608
    %224 = vst [vmem:[%s223] sm:%s4] %v222
    %s225 = scalar_lea.vmem %s0, 800
    %v226 = vld [vmem:[%s225] sm:%s4]
    %s227 = scalar_lea.vmem [#allocation2], 1600
    %228 = vst [vmem:[%s227] sm:%s4] %v226
    %s229 = scalar_lea.vmem %s0, 796
    %v230 = vld [vmem:[%s229] sm:%s4]
    %s231 = scalar_lea.vmem [#allocation2], 1592
    %232 = vst [vmem:[%s231] sm:%s4] %v230
    %s233 = scalar_lea.vmem %s0, 792
    %v234 = vld [vmem:[%s233] sm:%s4]
    %s235 = scalar_lea.vmem [#allocation2], 1584
    %236 = vst [vmem:[%s235] sm:%s4] %v234
    %s237 = scalar_lea.vmem %s0, 788
    %v238 = vld [vmem:[%s237] sm:%s4]
    %s239 = scalar_lea.vmem [#allocation2], 1576
    %240 = vst [vmem:[%s239] sm:%s4] %v238
    %s241 = scalar_lea.vmem %s0, 784
    %v242 = vld [vmem:[%s241] sm:%s4]
    %s243 = scalar_lea.vmem [#allocation2], 1568
    %244 = vst [vmem:[%s243] sm:%s4] %v242
    %s245 = scalar_lea.vmem %s0, 780
    %v246 = vld [vmem:[%s245] sm:%s4]
    %s247 = scalar_lea.vmem [#allocation2], 1560
    %248 = vst [vmem:[%s247] sm:%s4] %v246
    %s249 = scalar_lea.vmem %s0, 776
    %v250 = vld [vmem:[%s249] sm:%s4]
    %s251 = scalar_lea.vmem [#allocation2], 1552
    %252 = vst [vmem:[%s251] sm:%s4] %v250
    %s253 = scalar_lea.vmem %s0, 772
    %v254 = vld [vmem:[%s253] sm:%s4]
    %s255 = scalar_lea.vmem [#allocation2], 1544
    %256 = vst [vmem:[%s255] sm:%s4] %v254
    %s257 = scalar_lea.vmem %s0, 768
    %v258 = vld [vmem:[%s257] sm:%s4]
    %s259 = scalar_lea.vmem [#allocation2], 1536
    %260 = vst [vmem:[%s259] sm:%s4] %v258
    %s261 = scalar_lea.vmem %s0, 764
    %v262 = vld [vmem:[%s261] sm:%s4]
    %s263 = scalar_lea.vmem [#allocation2], 1528
    %264 = vst [vmem:[%s263] sm:%s4] %v262
    %s265 = scalar_lea.vmem %s0, 760
    %v266 = vld [vmem:[%s265] sm:%s4]
    %s267 = scalar_lea.vmem [#allocation2], 1520
    %268 = vst [vmem:[%s267] sm:%s4] %v266
    %s269 = scalar_lea.vmem %s0, 756
    %v270 = vld [vmem:[%s269] sm:%s4]
    %s271 = scalar_lea.vmem [#allocation2], 1512
    %272 = vst [vmem:[%s271] sm:%s4] %v270
    %s273 = scalar_lea.vmem %s0, 752
    %v274 = vld [vmem:[%s273] sm:%s4]
    %s275 = scalar_lea.vmem [#allocation2], 1504
    %276 = vst [vmem:[%s275] sm:%s4] %v274
    %s277 = scalar_lea.vmem %s0, 748
    %v278 = vld [vmem:[%s277] sm:%s4]
    %s279 = scalar_lea.vmem [#allocation2], 1496
    %280 = vst [vmem:[%s279] sm:%s4] %v278
    %s281 = scalar_lea.vmem %s0, 744
    %v282 = vld [vmem:[%s281] sm:%s4]
    %s283 = scalar_lea.vmem [#allocation2], 1488
    %284 = vst [vmem:[%s283] sm:%s4] %v282
    %s285 = scalar_lea.vmem %s0, 740
    %v286 = vld [vmem:[%s285] sm:%s4]
    %s287 = scalar_lea.vmem [#allocation2], 1480
    %288 = vst [vmem:[%s287] sm:%s4] %v286
    %s289 = scalar_lea.vmem %s0, 736
    %v290 = vld [vmem:[%s289] sm:%s4]
    %s291 = scalar_lea.vmem [#allocation2], 1472
    %292 = vst [vmem:[%s291] sm:%s4] %v290
    %s293 = scalar_lea.vmem %s0, 732
    %v294 = vld [vmem:[%s293] sm:%s4]
    %s295 = scalar_lea.vmem [#allocation2], 1464
    %296 = vst [vmem:[%s295] sm:%s4] %v294
    %s297 = scalar_lea.vmem %s0, 728
    %v298 = vld [vmem:[%s297] sm:%s4]
    %s299 = scalar_lea.vmem [#allocation2], 1456
    %300 = vst [vmem:[%s299] sm:%s4] %v298
    %s301 = scalar_lea.vmem %s0, 724
    %v302 = vld [vmem:[%s301] sm:%s4]
    %s303 = scalar_lea.vmem [#allocation2], 1448
    %304 = vst [vmem:[%s303] sm:%s4] %v302
    %s305 = scalar_lea.vmem %s0, 720
    %v306 = vld [vmem:[%s305] sm:%s4]
    %s307 = scalar_lea.vmem [#allocation2], 1440
    %308 = vst [vmem:[%s307] sm:%s4] %v306
    %s309 = scalar_lea.vmem %s0, 716
    %v310 = vld [vmem:[%s309] sm:%s4]
    %s311 = scalar_lea.vmem [#allocation2], 1432
    %312 = vst [vmem:[%s311] sm:%s4] %v310
    %s313 = scalar_lea.vmem %s0, 712
    %v314 = vld [vmem:[%s313] sm:%s4]
    %s315 = scalar_lea.vmem [#allocation2], 1424
    %316 = vst [vmem:[%s315] sm:%s4] %v314
    %s317 = scalar_lea.vmem %s0, 708
    %v318 = vld [vmem:[%s317] sm:%s4]
    %s319 = scalar_lea.vmem [#allocation2], 1416
    %320 = vst [vmem:[%s319] sm:%s4] %v318
    %s321 = scalar_lea.vmem %s0, 704
    %v322 = vld [vmem:[%s321] sm:%s4]
    %s323 = scalar_lea.vmem [#allocation2], 1408
    %324 = vst [vmem:[%s323] sm:%s4] %v322
    %s325 = scalar_lea.vmem %s0, 700
    %v326 = vld [vmem:[%s325] sm:%s4]
    %s327 = scalar_lea.vmem [#allocation2], 1400
    %328 = vst [vmem:[%s327] sm:%s4] %v326
    %s329 = scalar_lea.vmem %s0, 696
    %v330 = vld [vmem:[%s329] sm:%s4]
    %s331 = scalar_lea.vmem [#allocation2], 1392
    %332 = vst [vmem:[%s331] sm:%s4] %v330
    %s333 = scalar_lea.vmem %s0, 692
    %v334 = vld [vmem:[%s333] sm:%s4]
    %s335 = scalar_lea.vmem [#allocation2], 1384
    %336 = vst [vmem:[%s335] sm:%s4] %v334
    %s337 = scalar_lea.vmem %s0, 688
    %v338 = vld [vmem:[%s337] sm:%s4]
    %s339 = scalar_lea.vmem [#allocation2], 1376
    %340 = vst [vmem:[%s339] sm:%s4] %v338
    %s341 = scalar_lea.vmem %s0, 684
    %v342 = vld [vmem:[%s341] sm:%s4]
    %s343 = scalar_lea.vmem [#allocation2], 1368
    %344 = vst [vmem:[%s343] sm:%s4] %v342
    %s345 = scalar_lea.vmem %s0, 680
    %v346 = vld [vmem:[%s345] sm:%s4]
    %s347 = scalar_lea.vmem [#allocation2], 1360
    %348 = vst [vmem:[%s347] sm:%s4] %v346
    %s349 = scalar_lea.vmem %s0, 676
    %v350 = vld [vmem:[%s349] sm:%s4]
    %s351 = scalar_lea.vmem [#allocation2], 1352
    %352 = vst [vmem:[%s351] sm:%s4] %v350
    %s353 = scalar_lea.vmem %s0, 672
    %v354 = vld [vmem:[%s353] sm:%s4]
    %s355 = scalar_lea.vmem [#allocation2], 1344
    %356 = vst [vmem:[%s355] sm:%s4] %v354
    %s357 = scalar_lea.vmem %s0, 668
    %v358 = vld [vmem:[%s357] sm:%s4]
    %s359 = scalar_lea.vmem [#allocation2], 1336
    %360 = vst [vmem:[%s359] sm:%s4] %v358
    %s361 = scalar_lea.vmem %s0, 664
    %v362 = vld [vmem:[%s361] sm:%s4]
    %s363 = scalar_lea.vmem [#allocation2], 1328
    %364 = vst [vmem:[%s363] sm:%s4] %v362
    %s365 = scalar_lea.vmem %s0, 660
    %v366 = vld [vmem:[%s365] sm:%s4]
    %s367 = scalar_lea.vmem [#allocation2], 1320
    %368 = vst [vmem:[%s367] sm:%s4] %v366
    %s369 = scalar_lea.vmem %s0, 656
    %v370 = vld [vmem:[%s369] sm:%s4]
    %s371 = scalar_lea.vmem [#allocation2], 1312
    %372 = vst [vmem:[%s371] sm:%s4] %v370
    %s373 = scalar_lea.vmem %s0, 652
    %v374 = vld [vmem:[%s373] sm:%s4]
    %s375 = scalar_lea.vmem [#allocation2], 1304
    %376 = vst [vmem:[%s375] sm:%s4] %v374
    %s377 = scalar_lea.vmem %s0, 648
    %v378 = vld [vmem:[%s377] sm:%s4]
    %s379 = scalar_lea.vmem [#allocation2], 1296
    %380 = vst [vmem:[%s379] sm:%s4] %v378
    %s381 = scalar_lea.vmem %s0, 644
    %v382 = vld [vmem:[%s381] sm:%s4]
    %s383 = scalar_lea.vmem [#allocation2], 1288
    %384 = vst [vmem:[%s383] sm:%s4] %v382
    %s385 = scalar_lea.vmem %s0, 640
    %v386 = vld [vmem:[%s385] sm:%s4]
    %s387 = scalar_lea.vmem [#allocation2], 1280
    %388 = vst [vmem:[%s387] sm:%s4] %v386
    %s389 = scalar_lea.vmem %s0, 636
    %v390 = vld [vmem:[%s389] sm:%s4]
    %s391 = scalar_lea.vmem [#allocation2], 1272
    %392 = vst [vmem:[%s391] sm:%s4] %v390
    %s393 = scalar_lea.vmem %s0, 632
    %v394 = vld [vmem:[%s393] sm:%s4]
    %s395 = scalar_lea.vmem [#allocation2], 1264
    %396 = vst [vmem:[%s395] sm:%s4] %v394
    %s397 = scalar_lea.vmem %s0, 628
    %v398 = vld [vmem:[%s397] sm:%s4]
    %s399 = scalar_lea.vmem [#allocation2], 1256
    %400 = vst [vmem:[%s399] sm:%s4] %v398
    %s401 = scalar_lea.vmem %s0, 624
    %v402 = vld [vmem:[%s401] sm:%s4]
    %s403 = scalar_lea.vmem [#allocation2], 1248
    %404 = vst [vmem:[%s403] sm:%s4] %v402
    %s405 = scalar_lea.vmem %s0, 620
    %v406 = vld [vmem:[%s405] sm:%s4]
    %s407 = scalar_lea.vmem [#allocation2], 1240
    %408 = vst [vmem:[%s407] sm:%s4] %v406
    %s409 = scalar_lea.vmem %s0, 616
    %v410 = vld [vmem:[%s409] sm:%s4]
    %s411 = scalar_lea.vmem [#allocation2], 1232
    %412 = vst [vmem:[%s411] sm:%s4] %v410
    %s413 = scalar_lea.vmem %s0, 612
    %v414 = vld [vmem:[%s413] sm:%s4]
    %s415 = scalar_lea.vmem [#allocation2], 1224
    %416 = vst [vmem:[%s415] sm:%s4] %v414
    %s417 = scalar_lea.vmem %s0, 608
    %v418 = vld [vmem:[%s417] sm:%s4]
    %s419 = scalar_lea.vmem [#allocation2], 1216
    %420 = vst [vmem:[%s419] sm:%s4] %v418
    %s421 = scalar_lea.vmem %s0, 604
    %v422 = vld [vmem:[%s421] sm:%s4]
    %s423 = scalar_lea.vmem [#allocation2], 1208
    %424 = vst [vmem:[%s423] sm:%s4] %v422
    %s425 = scalar_lea.vmem %s0, 600
    %v426 = vld [vmem:[%s425] sm:%s4]
    %s427 = scalar_lea.vmem [#allocation2], 1200
    %428 = vst [vmem:[%s427] sm:%s4] %v426
    %s429 = scalar_lea.vmem %s0, 596
    %v430 = vld [vmem:[%s429] sm:%s4]
    %s431 = scalar_lea.vmem [#allocation2], 1192
    %432 = vst [vmem:[%s431] sm:%s4] %v430
    %s433 = scalar_lea.vmem %s0, 592
    %v434 = vld [vmem:[%s433] sm:%s4]
    %s435 = scalar_lea.vmem [#allocation2], 1184
    %436 = vst [vmem:[%s435] sm:%s4] %v434
    %s437 = scalar_lea.vmem %s0, 588
    %v438 = vld [vmem:[%s437] sm:%s4]
    %s439 = scalar_lea.vmem [#allocation2], 1176
    %440 = vst [vmem:[%s439] sm:%s4] %v438
    %s441 = scalar_lea.vmem %s0, 584
    %v442 = vld [vmem:[%s441] sm:%s4]
    %s443 = scalar_lea.vmem [#allocation2], 1168
    %444 = vst [vmem:[%s443] sm:%s4] %v442
    %s445 = scalar_lea.vmem %s0, 580
    %v446 = vld [vmem:[%s445] sm:%s4]
    %s447 = scalar_lea.vmem [#allocation2], 1160
    %448 = vst [vmem:[%s447] sm:%s4] %v446
    %s449 = scalar_lea.vmem %s0, 576
    %v450 = vld [vmem:[%s449] sm:%s4]
    %s451 = scalar_lea.vmem [#allocation2], 1152
    %452 = vst [vmem:[%s451] sm:%s4] %v450
    %s453 = scalar_lea.vmem %s0, 572
    %v454 = vld [vmem:[%s453] sm:%s4]
    %s455 = scalar_lea.vmem [#allocation2], 1144
    %456 = vst [vmem:[%s455] sm:%s4] %v454
    %s457 = scalar_lea.vmem %s0, 568
    %v458 = vld [vmem:[%s457] sm:%s4]
    %s459 = scalar_lea.vmem [#allocation2], 1136
    %460 = vst [vmem:[%s459] sm:%s4] %v458
    %s461 = scalar_lea.vmem %s0, 564
    %v462 = vld [vmem:[%s461] sm:%s4]
    %s463 = scalar_lea.vmem [#allocation2], 1128
    %464 = vst [vmem:[%s463] sm:%s4] %v462
    %s465 = scalar_lea.vmem %s0, 560
    %v466 = vld [vmem:[%s465] sm:%s4]
    %s467 = scalar_lea.vmem [#allocation2], 1120
    %468 = vst [vmem:[%s467] sm:%s4] %v466
    %s469 = scalar_lea.vmem %s0, 556
    %v470 = vld [vmem:[%s469] sm:%s4]
    %s471 = scalar_lea.vmem [#allocation2], 1112
    %472 = vst [vmem:[%s471] sm:%s4] %v470
    %s473 = scalar_lea.vmem %s0, 552
    %v474 = vld [vmem:[%s473] sm:%s4]
    %s475 = scalar_lea.vmem [#allocation2], 1104
    %476 = vst [vmem:[%s475] sm:%s4] %v474
    %s477 = scalar_lea.vmem %s0, 548
    %v478 = vld [vmem:[%s477] sm:%s4]
    %s479 = scalar_lea.vmem [#allocation2], 1096
    %480 = vst [vmem:[%s479] sm:%s4] %v478
    %s481 = scalar_lea.vmem %s0, 544
    %v482 = vld [vmem:[%s481] sm:%s4]
    %s483 = scalar_lea.vmem [#allocation2], 1088
    %484 = vst [vmem:[%s483] sm:%s4] %v482
    %s485 = scalar_lea.vmem %s0, 540
    %v486 = vld [vmem:[%s485] sm:%s4]
    %s487 = scalar_lea.vmem [#allocation2], 1080
    %488 = vst [vmem:[%s487] sm:%s4] %v486
    %s489 = scalar_lea.vmem %s0, 536
    %v490 = vld [vmem:[%s489] sm:%s4]
    %s491 = scalar_lea.vmem [#allocation2], 1072
    %492 = vst [vmem:[%s491] sm:%s4] %v490
    %s493 = scalar_lea.vmem %s0, 532
    %v494 = vld [vmem:[%s493] sm:%s4]
    %s495 = scalar_lea.vmem [#allocation2], 1064
    %496 = vst [vmem:[%s495] sm:%s4] %v494
    %s497 = scalar_lea.vmem %s0, 528
    %v498 = vld [vmem:[%s497] sm:%s4]
    %s499 = scalar_lea.vmem [#allocation2], 1056
    %500 = vst [vmem:[%s499] sm:%s4] %v498
    %s501 = scalar_lea.vmem %s0, 524
    %v502 = vld [vmem:[%s501] sm:%s4]
    %s503 = scalar_lea.vmem [#allocation2], 1048
    %504 = vst [vmem:[%s503] sm:%s4] %v502
    %s505 = scalar_lea.vmem %s0, 520
    %v506 = vld [vmem:[%s505] sm:%s4]
    %s507 = scalar_lea.vmem [#allocation2], 1040
    %508 = vst [vmem:[%s507] sm:%s4] %v506
    %s509 = scalar_lea.vmem %s0, 516
    %v510 = vld [vmem:[%s509] sm:%s4]
    %s511 = scalar_lea.vmem [#allocation2], 1032
    %512 = vst [vmem:[%s511] sm:%s4] %v510
    %s513 = scalar_lea.vmem %s0, 512
    %v514 = vld [vmem:[%s513] sm:%s4]
    %s515 = scalar_lea.vmem [#allocation2], 1024
    %516 = vst [vmem:[%s515] sm:%s4] %v514
    %s517 = scalar_lea.vmem %s0, 508
    %v518 = vld [vmem:[%s517] sm:%s4]
    %s519 = scalar_lea.vmem [#allocation2], 1016
    %520 = vst [vmem:[%s519] sm:%s4] %v518
    %s521 = scalar_lea.vmem %s0, 504
    %v522 = vld [vmem:[%s521] sm:%s4]
    %s523 = scalar_lea.vmem [#allocation2], 1008
    %524 = vst [vmem:[%s523] sm:%s4] %v522
    %s525 = scalar_lea.vmem %s0, 500
    %v526 = vld [vmem:[%s525] sm:%s4]
    %s527 = scalar_lea.vmem [#allocation2], 1000
    %528 = vst [vmem:[%s527] sm:%s4] %v526
    %s529 = scalar_lea.vmem %s0, 496
    %v530 = vld [vmem:[%s529] sm:%s4]
    %s531 = scalar_lea.vmem [#allocation2], 992
    %532 = vst [vmem:[%s531] sm:%s4] %v530
    %s533 = scalar_lea.vmem %s0, 492
    %v534 = vld [vmem:[%s533] sm:%s4]
    %s535 = scalar_lea.vmem [#allocation2], 984
    %536 = vst [vmem:[%s535] sm:%s4] %v534
    %s537 = scalar_lea.vmem %s0, 488
    %v538 = vld [vmem:[%s537] sm:%s4]
    %s539 = scalar_lea.vmem [#allocation2], 976
    %540 = vst [vmem:[%s539] sm:%s4] %v538
    %s541 = scalar_lea.vmem %s0, 484
    %v542 = vld [vmem:[%s541] sm:%s4]
    %s543 = scalar_lea.vmem [#allocation2], 968
    %544 = vst [vmem:[%s543] sm:%s4] %v542
    %s545 = scalar_lea.vmem %s0, 480
    %v546 = vld [vmem:[%s545] sm:%s4]
    %s547 = scalar_lea.vmem [#allocation2], 960
    %548 = vst [vmem:[%s547] sm:%s4] %v546
    %s549 = scalar_lea.vmem %s0, 476
    %v550 = vld [vmem:[%s549] sm:%s4]
    %s551 = scalar_lea.vmem [#allocation2], 952
    %552 = vst [vmem:[%s551] sm:%s4] %v550
    %s553 = scalar_lea.vmem %s0, 472
    %v554 = vld [vmem:[%s553] sm:%s4]
    %s555 = scalar_lea.vmem [#allocation2], 944
    %556 = vst [vmem:[%s555] sm:%s4] %v554
    %s557 = scalar_lea.vmem %s0, 468
    %v558 = vld [vmem:[%s557] sm:%s4]
    %s559 = scalar_lea.vmem [#allocation2], 936
    %560 = vst [vmem:[%s559] sm:%s4] %v558
    %s561 = scalar_lea.vmem %s0, 464
    %v562 = vld [vmem:[%s561] sm:%s4]
    %s563 = scalar_lea.vmem [#allocation2], 928
    %564 = vst [vmem:[%s563] sm:%s4] %v562
    %s565 = scalar_lea.vmem %s0, 460
    %v566 = vld [vmem:[%s565] sm:%s4]
    %s567 = scalar_lea.vmem [#allocation2], 920
    %568 = vst [vmem:[%s567] sm:%s4] %v566
    %s569 = scalar_lea.vmem %s0, 456
    %v570 = vld [vmem:[%s569] sm:%s4]
    %s571 = scalar_lea.vmem [#allocation2], 912
    %572 = vst [vmem:[%s571] sm:%s4] %v570
    %s573 = scalar_lea.vmem %s0, 452
    %v574 = vld [vmem:[%s573] sm:%s4]
    %s575 = scalar_lea.vmem [#allocation2], 904
    %576 = vst [vmem:[%s575] sm:%s4] %v574
    %s577 = scalar_lea.vmem %s0, 448
    %v578 = vld [vmem:[%s577] sm:%s4]
    %s579 = scalar_lea.vmem [#allocation2], 896
    %580 = vst [vmem:[%s579] sm:%s4] %v578
    %s581 = scalar_lea.vmem %s0, 444
    %v582 = vld [vmem:[%s581] sm:%s4]
    %s583 = scalar_lea.vmem [#allocation2], 888
    %584 = vst [vmem:[%s583] sm:%s4] %v582
    %s585 = scalar_lea.vmem %s0, 440
    %v586 = vld [vmem:[%s585] sm:%s4]
    %s587 = scalar_lea.vmem [#allocation2], 880
    %588 = vst [vmem:[%s587] sm:%s4] %v586
    %s589 = scalar_lea.vmem %s0, 436
    %v590 = vld [vmem:[%s589] sm:%s4]
    %s591 = scalar_lea.vmem [#allocation2], 872
    %592 = vst [vmem:[%s591] sm:%s4] %v590
    %s593 = scalar_lea.vmem %s0, 432
    %v594 = vld [vmem:[%s593] sm:%s4]
    %s595 = scalar_lea.vmem [#allocation2], 864
    %596 = vst [vmem:[%s595] sm:%s4] %v594
    %s597 = scalar_lea.vmem %s0, 428
    %v598 = vld [vmem:[%s597] sm:%s4]
    %s599 = scalar_lea.vmem [#allocation2], 856
    %600 = vst [vmem:[%s599] sm:%s4] %v598
    %s601 = scalar_lea.vmem %s0, 424
    %v602 = vld [vmem:[%s601] sm:%s4]
    %s603 = scalar_lea.vmem [#allocation2], 848
    %604 = vst [vmem:[%s603] sm:%s4] %v602
    %s605 = scalar_lea.vmem %s0, 420
    %v606 = vld [vmem:[%s605] sm:%s4]
    %s607 = scalar_lea.vmem [#allocation2], 840
    %608 = vst [vmem:[%s607] sm:%s4] %v606
    %s609 = scalar_lea.vmem %s0, 416
    %v610 = vld [vmem:[%s609] sm:%s4]
    %s611 = scalar_lea.vmem [#allocation2], 832
    %612 = vst [vmem:[%s611] sm:%s4] %v610
    %s613 = scalar_lea.vmem %s0, 412
    %v614 = vld [vmem:[%s613] sm:%s4]
    %s615 = scalar_lea.vmem [#allocation2], 824
    %616 = vst [vmem:[%s615] sm:%s4] %v614
    %s617 = scalar_lea.vmem %s0, 408
    %v618 = vld [vmem:[%s617] sm:%s4]
    %s619 = scalar_lea.vmem [#allocation2], 816
    %620 = vst [vmem:[%s619] sm:%s4] %v618
    %s621 = scalar_lea.vmem %s0, 404
    %v622 = vld [vmem:[%s621] sm:%s4]
    %s623 = scalar_lea.vmem [#allocation2], 808
    %624 = vst [vmem:[%s623] sm:%s4] %v622
    %s625 = scalar_lea.vmem %s0, 400
    %v626 = vld [vmem:[%s625] sm:%s4]
    %s627 = scalar_lea.vmem [#allocation2], 800
    %628 = vst [vmem:[%s627] sm:%s4] %v626
    %s629 = scalar_lea.vmem %s0, 396
    %v630 = vld [vmem:[%s629] sm:%s4]
    %s631 = scalar_lea.vmem [#allocation2], 792
    %632 = vst [vmem:[%s631] sm:%s4] %v630
    %s633 = scalar_lea.vmem %s0, 392
    %v634 = vld [vmem:[%s633] sm:%s4]
    %s635 = scalar_lea.vmem [#allocation2], 784
    %636 = vst [vmem:[%s635] sm:%s4] %v634
    %s637 = scalar_lea.vmem %s0, 388
    %v638 = vld [vmem:[%s637] sm:%s4]
    %s639 = scalar_lea.vmem [#allocation2], 776
    %640 = vst [vmem:[%s639] sm:%s4] %v638
    %s641 = scalar_lea.vmem %s0, 384
    %v642 = vld [vmem:[%s641] sm:%s4]
    %s643 = scalar_lea.vmem [#allocation2], 768
    %644 = vst [vmem:[%s643] sm:%s4] %v642
    %s645 = scalar_lea.vmem %s0, 380
    %v646 = vld [vmem:[%s645] sm:%s4]
    %s647 = scalar_lea.vmem [#allocation2], 760
    %648 = vst [vmem:[%s647] sm:%s4] %v646
    %s649 = scalar_lea.vmem %s0, 376
    %v650 = vld [vmem:[%s649] sm:%s4]
    %s651 = scalar_lea.vmem [#allocation2], 752
    %652 = vst [vmem:[%s651] sm:%s4] %v650
    %s653 = scalar_lea.vmem %s0, 372
    %v654 = vld [vmem:[%s653] sm:%s4]
    %s655 = scalar_lea.vmem [#allocation2], 744
    %656 = vst [vmem:[%s655] sm:%s4] %v654
    %s657 = scalar_lea.vmem %s0, 368
    %v658 = vld [vmem:[%s657] sm:%s4]
    %s659 = scalar_lea.vmem [#allocation2], 736
    %660 = vst [vmem:[%s659] sm:%s4] %v658
    %s661 = scalar_lea.vmem %s0, 364
    %v662 = vld [vmem:[%s661] sm:%s4]
    %s663 = scalar_lea.vmem [#allocation2], 728
    %664 = vst [vmem:[%s663] sm:%s4] %v662
    %s665 = scalar_lea.vmem %s0, 360
    %v666 = vld [vmem:[%s665] sm:%s4]
    %s667 = scalar_lea.vmem [#allocation2], 720
    %668 = vst [vmem:[%s667] sm:%s4] %v666
    %s669 = scalar_lea.vmem %s0, 356
    %v670 = vld [vmem:[%s669] sm:%s4]
    %s671 = scalar_lea.vmem [#allocation2], 712
    %672 = vst [vmem:[%s671] sm:%s4] %v670
    %s673 = scalar_lea.vmem %s0, 352
    %v674 = vld [vmem:[%s673] sm:%s4]
    %s675 = scalar_lea.vmem [#allocation2], 704
    %676 = vst [vmem:[%s675] sm:%s4] %v674
    %s677 = scalar_lea.vmem %s0, 348
    %v678 = vld [vmem:[%s677] sm:%s4]
    %s679 = scalar_lea.vmem [#allocation2], 696
    %680 = vst [vmem:[%s679] sm:%s4] %v678
    %s681 = scalar_lea.vmem %s0, 344
    %v682 = vld [vmem:[%s681] sm:%s4]
    %s683 = scalar_lea.vmem [#allocation2], 688
    %684 = vst [vmem:[%s683] sm:%s4] %v682
    %s685 = scalar_lea.vmem %s0, 340
    %v686 = vld [vmem:[%s685] sm:%s4]
    %s687 = scalar_lea.vmem [#allocation2], 680
    %688 = vst [vmem:[%s687] sm:%s4] %v686
    %s689 = scalar_lea.vmem %s0, 336
    %v690 = vld [vmem:[%s689] sm:%s4]
    %s691 = scalar_lea.vmem [#allocation2], 672
    %692 = vst [vmem:[%s691] sm:%s4] %v690
    %s693 = scalar_lea.vmem %s0, 332
    %v694 = vld [vmem:[%s693] sm:%s4]
    %s695 = scalar_lea.vmem [#allocation2], 664
    %696 = vst [vmem:[%s695] sm:%s4] %v694
    %s697 = scalar_lea.vmem %s0, 328
    %v698 = vld [vmem:[%s697] sm:%s4]
    %s699 = scalar_lea.vmem [#allocation2], 656
    %700 = vst [vmem:[%s699] sm:%s4] %v698
    %s701 = scalar_lea.vmem %s0, 324
    %v702 = vld [vmem:[%s701] sm:%s4]
    %s703 = scalar_lea.vmem [#allocation2], 648
    %704 = vst [vmem:[%s703] sm:%s4] %v702
    %s705 = scalar_lea.vmem %s0, 320
    %v706 = vld [vmem:[%s705] sm:%s4]
    %s707 = scalar_lea.vmem [#allocation2], 640
    %708 = vst [vmem:[%s707] sm:%s4] %v706
    %s709 = scalar_lea.vmem %s0, 316
    %v710 = vld [vmem:[%s709] sm:%s4]
    %s711 = scalar_lea.vmem [#allocation2], 632
    %712 = vst [vmem:[%s711] sm:%s4] %v710
    %s713 = scalar_lea.vmem %s0, 312
    %v714 = vld [vmem:[%s713] sm:%s4]
    %s715 = scalar_lea.vmem [#allocation2], 624
    %716 = vst [vmem:[%s715] sm:%s4] %v714
    %s717 = scalar_lea.vmem %s0, 308
    %v718 = vld [vmem:[%s717] sm:%s4]
    %s719 = scalar_lea.vmem [#allocation2], 616
    %720 = vst [vmem:[%s719] sm:%s4] %v718
    %s721 = scalar_lea.vmem %s0, 304
    %v722 = vld [vmem:[%s721] sm:%s4]
    %s723 = scalar_lea.vmem [#allocation2], 608
    %724 = vst [vmem:[%s723] sm:%s4] %v722
    %s725 = scalar_lea.vmem %s0, 300
    %v726 = vld [vmem:[%s725] sm:%s4]
    %s727 = scalar_lea.vmem [#allocation2], 600
    %728 = vst [vmem:[%s727] sm:%s4] %v726
    %s729 = scalar_lea.vmem %s0, 296
    %v730 = vld [vmem:[%s729] sm:%s4]
    %s731 = scalar_lea.vmem [#allocation2], 592
    %732 = vst [vmem:[%s731] sm:%s4] %v730
    %s733 = scalar_lea.vmem %s0, 292
    %v734 = vld [vmem:[%s733] sm:%s4]
    %s735 = scalar_lea.vmem [#allocation2], 584
    %736 = vst [vmem:[%s735] sm:%s4] %v734
    %s737 = scalar_lea.vmem %s0, 288
    %v738 = vld [vmem:[%s737] sm:%s4]
    %s739 = scalar_lea.vmem [#allocation2], 576
    %740 = vst [vmem:[%s739] sm:%s4] %v738
    %s741 = scalar_lea.vmem %s0, 284
    %v742 = vld [vmem:[%s741] sm:%s4]
    %s743 = scalar_lea.vmem [#allocation2], 568
    %744 = vst [vmem:[%s743] sm:%s4] %v742
    %s745 = scalar_lea.vmem %s0, 280
    %v746 = vld [vmem:[%s745] sm:%s4]
    %s747 = scalar_lea.vmem [#allocation2], 560
    %748 = vst [vmem:[%s747] sm:%s4] %v746
    %s749 = scalar_lea.vmem %s0, 276
    %v750 = vld [vmem:[%s749] sm:%s4]
    %s751 = scalar_lea.vmem [#allocation2], 552
    %752 = vst [vmem:[%s751] sm:%s4] %v750
    %s753 = scalar_lea.vmem %s0, 272
    %v754 = vld [vmem:[%s753] sm:%s4]
    %s755 = scalar_lea.vmem [#allocation2], 544
    %756 = vst [vmem:[%s755] sm:%s4] %v754
    %s757 = scalar_lea.vmem %s0, 268
    %v758 = vld [vmem:[%s757] sm:%s4]
    %s759 = scalar_lea.vmem [#allocation2], 536
    %760 = vst [vmem:[%s759] sm:%s4] %v758
    %s761 = scalar_lea.vmem %s0, 264
    %v762 = vld [vmem:[%s761] sm:%s4]
    %s763 = scalar_lea.vmem [#allocation2], 528
    %764 = vst [vmem:[%s763] sm:%s4] %v762
    %s765 = scalar_lea.vmem %s0, 260
    %v766 = vld [vmem:[%s765] sm:%s4]
    %s767 = scalar_lea.vmem [#allocation2], 520
    %768 = vst [vmem:[%s767] sm:%s4] %v766
    %s769 = scalar_lea.vmem %s0, 256
    %v770 = vld [vmem:[%s769] sm:%s4]
    %s771 = scalar_lea.vmem [#allocation2], 512
    %772 = vst [vmem:[%s771] sm:%s4] %v770
    %s773 = scalar_lea.vmem %s0, 252
    %v774 = vld [vmem:[%s773] sm:%s4]
    %s775 = scalar_lea.vmem [#allocation2], 504
    %776 = vst [vmem:[%s775] sm:%s4] %v774
    %s777 = scalar_lea.vmem %s0, 248
    %v778 = vld [vmem:[%s777] sm:%s4]
    %s779 = scalar_lea.vmem [#allocation2], 496
    %780 = vst [vmem:[%s779] sm:%s4] %v778
    %s781 = scalar_lea.vmem %s0, 244
    %v782 = vld [vmem:[%s781] sm:%s4]
    %s783 = scalar_lea.vmem [#allocation2], 488
    %784 = vst [vmem:[%s783] sm:%s4] %v782
    %s785 = scalar_lea.vmem %s0, 240
    %v786 = vld [vmem:[%s785] sm:%s4]
    %s787 = scalar_lea.vmem [#allocation2], 480
    %788 = vst [vmem:[%s787] sm:%s4] %v786
    %s789 = scalar_lea.vmem %s0, 236
    %v790 = vld [vmem:[%s789] sm:%s4]
    %s791 = scalar_lea.vmem [#allocation2], 472
    %792 = vst [vmem:[%s791] sm:%s4] %v790
    %s793 = scalar_lea.vmem %s0, 232
    %v794 = vld [vmem:[%s793] sm:%s4]
    %s795 = scalar_lea.vmem [#allocation2], 464
    %796 = vst [vmem:[%s795] sm:%s4] %v794
    %s797 = scalar_lea.vmem %s0, 228
    %v798 = vld [vmem:[%s797] sm:%s4]
    %s799 = scalar_lea.vmem [#allocation2], 456
    %800 = vst [vmem:[%s799] sm:%s4] %v798
    %s801 = scalar_lea.vmem %s0, 224
    %v802 = vld [vmem:[%s801] sm:%s4]
    %s803 = scalar_lea.vmem [#allocation2], 448
    %804 = vst [vmem:[%s803] sm:%s4] %v802
    %s805 = scalar_lea.vmem %s0, 220
    %v806 = vld [vmem:[%s805] sm:%s4]
    %s807 = scalar_lea.vmem [#allocation2], 440
    %808 = vst [vmem:[%s807] sm:%s4] %v806
    %s809 = scalar_lea.vmem %s0, 216
    %v810 = vld [vmem:[%s809] sm:%s4]
    %s811 = scalar_lea.vmem [#allocation2], 432
    %812 = vst [vmem:[%s811] sm:%s4] %v810
    %s813 = scalar_lea.vmem %s0, 212
    %v814 = vld [vmem:[%s813] sm:%s4]
    %s815 = scalar_lea.vmem [#allocation2], 424
    %816 = vst [vmem:[%s815] sm:%s4] %v814
    %s817 = scalar_lea.vmem %s0, 208
    %v818 = vld [vmem:[%s817] sm:%s4]
    %s819 = scalar_lea.vmem [#allocation2], 416
    %820 = vst [vmem:[%s819] sm:%s4] %v818
    %s821 = scalar_lea.vmem %s0, 204
    %v822 = vld [vmem:[%s821] sm:%s4]
    %s823 = scalar_lea.vmem [#allocation2], 408
    %824 = vst [vmem:[%s823] sm:%s4] %v822
    %s825 = scalar_lea.vmem %s0, 200
    %v826 = vld [vmem:[%s825] sm:%s4]
    %s827 = scalar_lea.vmem [#allocation2], 400
    %828 = vst [vmem:[%s827] sm:%s4] %v826
    %s829 = scalar_lea.vmem %s0, 196
    %v830 = vld [vmem:[%s829] sm:%s4]
    %s831 = scalar_lea.vmem [#allocation2], 392
    %832 = vst [vmem:[%s831] sm:%s4] %v830
    %s833 = scalar_lea.vmem %s0, 192
    %v834 = vld [vmem:[%s833] sm:%s4]
    %s835 = scalar_lea.vmem [#allocation2], 384
    %836 = vst [vmem:[%s835] sm:%s4] %v834
    %s837 = scalar_lea.vmem %s0, 188
    %v838 = vld [vmem:[%s837] sm:%s4]
    %s839 = scalar_lea.vmem [#allocation2], 376
    %840 = vst [vmem:[%s839] sm:%s4] %v838
    %s841 = scalar_lea.vmem %s0, 184
    %v842 = vld [vmem:[%s841] sm:%s4]
    %s843 = scalar_lea.vmem [#allocation2], 368
    %844 = vst [vmem:[%s843] sm:%s4] %v842
    %s845 = scalar_lea.vmem %s0, 180
    %v846 = vld [vmem:[%s845] sm:%s4]
    %s847 = scalar_lea.vmem [#allocation2], 360
    %848 = vst [vmem:[%s847] sm:%s4] %v846
    %s849 = scalar_lea.vmem %s0, 176
    %v850 = vld [vmem:[%s849] sm:%s4]
    %s851 = scalar_lea.vmem [#allocation2], 352
    %852 = vst [vmem:[%s851] sm:%s4] %v850
    %s853 = scalar_lea.vmem %s0, 172
    %v854 = vld [vmem:[%s853] sm:%s4]
    %s855 = scalar_lea.vmem [#allocation2], 344
    %856 = vst [vmem:[%s855] sm:%s4] %v854
    %s857 = scalar_lea.vmem %s0, 168
    %v858 = vld [vmem:[%s857] sm:%s4]
    %s859 = scalar_lea.vmem [#allocation2], 336
    %860 = vst [vmem:[%s859] sm:%s4] %v858
    %s861 = scalar_lea.vmem %s0, 164
    %v862 = vld [vmem:[%s861] sm:%s4]
    %s863 = scalar_lea.vmem [#allocation2], 328
    %864 = vst [vmem:[%s863] sm:%s4] %v862
    %s865 = scalar_lea.vmem %s0, 160
    %v866 = vld [vmem:[%s865] sm:%s4]
    %s867 = scalar_lea.vmem [#allocation2], 320
    %868 = vst [vmem:[%s867] sm:%s4] %v866
    %s869 = scalar_lea.vmem %s0, 156
    %v870 = vld [vmem:[%s869] sm:%s4]
    %s871 = scalar_lea.vmem [#allocation2], 312
    %872 = vst [vmem:[%s871] sm:%s4] %v870
    %s873 = scalar_lea.vmem %s0, 152
    %v874 = vld [vmem:[%s873] sm:%s4]
    %s875 = scalar_lea.vmem [#allocation2], 304
    %876 = vst [vmem:[%s875] sm:%s4] %v874
    %s877 = scalar_lea.vmem %s0, 148
    %v878 = vld [vmem:[%s877] sm:%s4]
    %s879 = scalar_lea.vmem [#allocation2], 296
    %880 = vst [vmem:[%s879] sm:%s4] %v878
    %s881 = scalar_lea.vmem %s0, 144
    %v882 = vld [vmem:[%s881] sm:%s4]
    %s883 = scalar_lea.vmem [#allocation2], 288
    %884 = vst [vmem:[%s883] sm:%s4] %v882
    %s885 = scalar_lea.vmem %s0, 140
    %v886 = vld [vmem:[%s885] sm:%s4]
    %s887 = scalar_lea.vmem [#allocation2], 280
    %888 = vst [vmem:[%s887] sm:%s4] %v886
    %s889 = scalar_lea.vmem %s0, 136
    %v890 = vld [vmem:[%s889] sm:%s4]
    %s891 = scalar_lea.vmem [#allocation2], 272
    %892 = vst [vmem:[%s891] sm:%s4] %v890
    %s893 = scalar_lea.vmem %s0, 132
    %v894 = vld [vmem:[%s893] sm:%s4]
    %s895 = scalar_lea.vmem [#allocation2], 264
    %896 = vst [vmem:[%s895] sm:%s4] %v894
    %s897 = scalar_lea.vmem %s0, 128
    %v898 = vld [vmem:[%s897] sm:%s4]
    %s899 = scalar_lea.vmem [#allocation2], 256
    %900 = vst [vmem:[%s899] sm:%s4] %v898
    %s901 = scalar_lea.vmem %s0, 124
    %v902 = vld [vmem:[%s901] sm:%s4]
    %s903 = scalar_lea.vmem [#allocation2], 248
    %904 = vst [vmem:[%s903] sm:%s4] %v902
    %s905 = scalar_lea.vmem %s0, 120
    %v906 = vld [vmem:[%s905] sm:%s4]
    %s907 = scalar_lea.vmem [#allocation2], 240
    %908 = vst [vmem:[%s907] sm:%s4] %v906
    %s909 = scalar_lea.vmem %s0, 116
    %v910 = vld [vmem:[%s909] sm:%s4]
    %s911 = scalar_lea.vmem [#allocation2], 232
    %912 = vst [vmem:[%s911] sm:%s4] %v910
    %s913 = scalar_lea.vmem %s0, 112
    %v914 = vld [vmem:[%s913] sm:%s4]
    %s915 = scalar_lea.vmem [#allocation2], 224
    %916 = vst [vmem:[%s915] sm:%s4] %v914
    %s917 = scalar_lea.vmem %s0, 108
    %v918 = vld [vmem:[%s917] sm:%s4]
    %s919 = scalar_lea.vmem [#allocation2], 216
    %920 = vst [vmem:[%s919] sm:%s4] %v918
    %s921 = scalar_lea.vmem %s0, 104
    %v922 = vld [vmem:[%s921] sm:%s4]
    %s923 = scalar_lea.vmem [#allocation2], 208
    %924 = vst [vmem:[%s923] sm:%s4] %v922
    %s925 = scalar_lea.vmem %s0, 100
    %v926 = vld [vmem:[%s925] sm:%s4]
    %s927 = scalar_lea.vmem [#allocation2], 200
    %928 = vst [vmem:[%s927] sm:%s4] %v926
    %s929 = scalar_lea.vmem %s0, 96
    %v930 = vld [vmem:[%s929] sm:%s4]
    %s931 = scalar_lea.vmem [#allocation2], 192
    %932 = vst [vmem:[%s931] sm:%s4] %v930
    %s933 = scalar_lea.vmem %s0, 92
    %v934 = vld [vmem:[%s933] sm:%s4]
    %s935 = scalar_lea.vmem [#allocation2], 184
    %936 = vst [vmem:[%s935] sm:%s4] %v934
    %s937 = scalar_lea.vmem %s0, 88
    %v938 = vld [vmem:[%s937] sm:%s4]
    %s939 = scalar_lea.vmem [#allocation2], 176
    %940 = vst [vmem:[%s939] sm:%s4] %v938
    %s941 = scalar_lea.vmem %s0, 84
    %v942 = vld [vmem:[%s941] sm:%s4]
    %s943 = scalar_lea.vmem [#allocation2], 168
    %944 = vst [vmem:[%s943] sm:%s4] %v942
    %s945 = scalar_lea.vmem %s0, 80
    %v946 = vld [vmem:[%s945] sm:%s4]
    %s947 = scalar_lea.vmem [#allocation2], 160
    %948 = vst [vmem:[%s947] sm:%s4] %v946
    %s949 = scalar_lea.vmem %s0, 76
    %v950 = vld [vmem:[%s949] sm:%s4]
    %s951 = scalar_lea.vmem [#allocation2], 152
    %952 = vst [vmem:[%s951] sm:%s4] %v950
    %s953 = scalar_lea.vmem %s0, 72
    %v954 = vld [vmem:[%s953] sm:%s4]
    %s955 = scalar_lea.vmem [#allocation2], 144
    %956 = vst [vmem:[%s955] sm:%s4] %v954
    %s957 = scalar_lea.vmem %s0, 68
    %v958 = vld [vmem:[%s957] sm:%s4]
    %s959 = scalar_lea.vmem [#allocation2], 136
    %960 = vst [vmem:[%s959] sm:%s4] %v958
    %s961 = scalar_lea.vmem %s0, 64
    %v962 = vld [vmem:[%s961] sm:%s4]
    %s963 = scalar_lea.vmem [#allocation2], 128
    %964 = vst [vmem:[%s963] sm:%s4] %v962
    %s965 = scalar_lea.vmem %s0, 60
    %v966 = vld [vmem:[%s965] sm:%s4]
    %s967 = scalar_lea.vmem [#allocation2], 120
    %968 = vst [vmem:[%s967] sm:%s4] %v966
    %s969 = scalar_lea.vmem %s0, 56
    %v970 = vld [vmem:[%s969] sm:%s4]
    %s971 = scalar_lea.vmem [#allocation2], 112
    %972 = vst [vmem:[%s971] sm:%s4] %v970
    %s973 = scalar_lea.vmem %s0, 52
    %v974 = vld [vmem:[%s973] sm:%s4]
    %s975 = scalar_lea.vmem [#allocation2], 104
    %976 = vst [vmem:[%s975] sm:%s4] %v974
    %s977 = scalar_lea.vmem %s0, 48
    %v978 = vld [vmem:[%s977] sm:%s4]
    %s979 = scalar_lea.vmem [#allocation2], 96
    %980 = vst [vmem:[%s979] sm:%s4] %v978
    %s981 = scalar_lea.vmem %s0, 44
    %v982 = vld [vmem:[%s981] sm:%s4]
    %s983 = scalar_lea.vmem [#allocation2], 88
    %984 = vst [vmem:[%s983] sm:%s4] %v982
    %s985 = scalar_lea.vmem %s0, 40
    %v986 = vld [vmem:[%s985] sm:%s4]
    %s987 = scalar_lea.vmem [#allocation2], 80
    %988 = vst [vmem:[%s987] sm:%s4] %v986
    %s989 = scalar_lea.vmem %s0, 36
    %v990 = vld [vmem:[%s989] sm:%s4]
    %s991 = scalar_lea.vmem [#allocation2], 72
    %992 = vst [vmem:[%s991] sm:%s4] %v990
    %s993 = scalar_lea.vmem %s0, 32
    %v994 = vld [vmem:[%s993] sm:%s4]
    %s995 = scalar_lea.vmem [#allocation2], 64
    %996 = vst [vmem:[%s995] sm:%s4] %v994
    %s997 = scalar_lea.vmem %s0, 28
    %v998 = vld [vmem:[%s997] sm:%s4]
    %s999 = scalar_lea.vmem [#allocation2], 56
    %1000 = vst [vmem:[%s999] sm:%s4] %v998
    %s1001 = scalar_lea.vmem %s0, 24
    %v1002 = vld [vmem:[%s1001] sm:%s4]
    %s1003 = scalar_lea.vmem [#allocation2], 48
    %1004 = vst [vmem:[%s1003] sm:%s4] %v1002
    %s1005 = scalar_lea.vmem %s0, 20
    %v1006 = vld [vmem:[%s1005] sm:%s4]
    %s1007 = scalar_lea.vmem [#allocation2], 40
    %1008 = vst [vmem:[%s1007] sm:%s4] %v1006
    %s1009 = scalar_lea.vmem %s0, 16
    %v1010 = vld [vmem:[%s1009] sm:%s4]
    %s1011 = scalar_lea.vmem [#allocation2], 32
    %1012 = vst [vmem:[%s1011] sm:%s4] %v1010
    %s1013 = scalar_lea.vmem %s0, 12
    %v1014 = vld [vmem:[%s1013] sm:%s4]
    %s1015 = scalar_lea.vmem [#allocation2], 24
    %1016 = vst [vmem:[%s1015] sm:%s4] %v1014
    %s1017 = scalar_lea.vmem %s0, 8
    %v1018 = vld [vmem:[%s1017] sm:%s4]
    %s1019 = scalar_lea.vmem [#allocation2], 16
    %1020 = vst [vmem:[%s1019] sm:%s4] %v1018
    %s1021 = scalar_lea.vmem %s0, 4
    %v1022 = vld [vmem:[%s1021] sm:%s4]
    %s1023 = scalar_lea.vmem [#allocation2], 8
    %1024 = vst [vmem:[%s1023] sm:%s4] %v1022
    %v1025 = vld [vmem:[%s0] sm:%s4]
    %1026 = vst [vmem:[#allocation2] sm:%s4] %v1025
    %v1027 = vld [vmem:[#allocation2] ss:$8 sm:$0xf]
    %v1028 = vld [vmem:[#allocation2] ss:$8 sm:$0xf0]
    %vm1029 = vcmask 1047556
    %v1030 = vsel %vm1029, %v1028, %v1027
    %vm1031 = vcmask 15360
    %1032 = vst.msk [vmem:[#allocation0] sm:$0xff] %vm1031, %v1030
    %s1033 = scalar_lea.vmem [#allocation2], 64
    %v1034 = vld [vmem:[%s1033] ss:$8 sm:$0xf]
    %s1035 = scalar_lea.vmem [#allocation2], 64
    %v1036 = vld [vmem:[%s1035] ss:$8 sm:$0xf0]
    %vm1037 = vcmask 1047556
    %v1038 = vsel %vm1037, %v1036, %v1034
    %vm1039 = vcmask 15360
    %s1040 = scalar_lea.vmem [#allocation0], 8
    %1041 = vst.msk [vmem:[%s1040] sm:$0xff] %vm1039, %v1038
    %s1042 = scalar_lea.vmem [#allocation2], 128
    %v1043 = vld [vmem:[%s1042] ss:$8 sm:$0xf]
    %s1044 = scalar_lea.vmem [#allocation2], 128
    %v1045 = vld [vmem:[%s1044] ss:$8 sm:$0xf0]
    %vm1046 = vcmask 1047556
    %v1047 = vsel %vm1046, %v1045, %v1043
    %vm1048 = vcmask 15360
    %s1049 = scalar_lea.vmem [#allocation0], 16
    %1050 = vst.msk [vmem:[%s1049] sm:$0xff] %vm1048, %v1047
    %s1051 = scalar_lea.vmem [#allocation2], 192
    %v1052 = vld [vmem:[%s1051] ss:$8 sm:$0xf]
    %s1053 = scalar_lea.vmem [#allocation2], 192
    %v1054 = vld [vmem:[%s1053] ss:$8 sm:$0xf0]
    %vm1055 = vcmask 1047556
    %v1056 = vsel %vm1055, %v1054, %v1052
    %vm1057 = vcmask 15360
    %s1058 = scalar_lea.vmem [#allocation0], 24
    %1059 = vst.msk [vmem:[%s1058] sm:$0xff] %vm1057, %v1056
    %s1060 = scalar_lea.vmem [#allocation2], 256
    %v1061 = vld [vmem:[%s1060] ss:$8 sm:$0xf]
    %s1062 = scalar_lea.vmem [#allocation2], 256
    %v1063 = vld [vmem:[%s1062] ss:$8 sm:$0xf0]
    %vm1064 = vcmask 1047556
    %v1065 = vsel %vm1064, %v1063, %v1061
    %vm1066 = vcmask 15360
    %s1067 = scalar_lea.vmem [#allocation0], 32
    %1068 = vst.msk [vmem:[%s1067] sm:$0xff] %vm1066, %v1065
    %s1069 = scalar_lea.vmem [#allocation2], 320
    %v1070 = vld [vmem:[%s1069] ss:$8 sm:$0xf]
    %s1071 = scalar_lea.vmem [#allocation2], 320
    %v1072 = vld [vmem:[%s1071] ss:$8 sm:$0xf0]
    %vm1073 = vcmask 1047556
    %v1074 = vsel %vm1073, %v1072, %v1070
    %vm1075 = vcmask 15360
    %s1076 = scalar_lea.vmem [#allocation0], 40
    %1077 = vst.msk [vmem:[%s1076] sm:$0xff] %vm1075, %v1074
    %s1078 = scalar_lea.vmem [#allocation2], 384
    %v1079 = vld [vmem:[%s1078] ss:$8 sm:$0xf]
    %s1080 = scalar_lea.vmem [#allocation2], 384
    %v1081 = vld [vmem:[%s1080] ss:$8 sm:$0xf0]
    %vm1082 = vcmask 1047556
    %v1083 = vsel %vm1082, %v1081, %v1079
    %vm1084 = vcmask 15360
    %s1085 = scalar_lea.vmem [#allocation0], 48
    %1086 = vst.msk [vmem:[%s1085] sm:$0xff] %vm1084, %v1083
    %s1087 = scalar_lea.vmem [#allocation2], 448
    %v1088 = vld [vmem:[%s1087] ss:$8 sm:$0xf]
    %s1089 = scalar_lea.vmem [#allocation2], 448
    %v1090 = vld [vmem:[%s1089] ss:$8 sm:$0xf0]
    %vm1091 = vcmask 1047556
    %v1092 = vsel %vm1091, %v1090, %v1088
    %vm1093 = vcmask 15360
    %s1094 = scalar_lea.vmem [#allocation0], 56
    %1095 = vst.msk [vmem:[%s1094] sm:$0xff] %vm1093, %v1092
    %s1096 = scalar_lea.vmem [#allocation2], 512
    %v1097 = vld [vmem:[%s1096] ss:$8 sm:$0xf]
    %s1098 = scalar_lea.vmem [#allocation2], 512
    %v1099 = vld [vmem:[%s1098] ss:$8 sm:$0xf0]
    %vm1100 = vcmask 1047556
    %v1101 = vsel %vm1100, %v1099, %v1097
    %vm1102 = vcmask 15360
    %s1103 = scalar_lea.vmem [#allocation0], 64
    %1104 = vst.msk [vmem:[%s1103] sm:$0xff] %vm1102, %v1101
    %s1105 = scalar_lea.vmem [#allocation2], 576
    %v1106 = vld [vmem:[%s1105] ss:$8 sm:$0xf]
    %s1107 = scalar_lea.vmem [#allocation2], 576
    %v1108 = vld [vmem:[%s1107] ss:$8 sm:$0xf0]
    %vm1109 = vcmask 1047556
    %v1110 = vsel %vm1109, %v1108, %v1106
    %vm1111 = vcmask 15360
    %s1112 = scalar_lea.vmem [#allocation0], 72
    %1113 = vst.msk [vmem:[%s1112] sm:$0xff] %vm1111, %v1110
    %s1114 = scalar_lea.vmem [#allocation2], 640
    %v1115 = vld [vmem:[%s1114] ss:$8 sm:$0xf]
    %s1116 = scalar_lea.vmem [#allocation2], 640
    %v1117 = vld [vmem:[%s1116] ss:$8 sm:$0xf0]
    %vm1118 = vcmask 1047556
    %v1119 = vsel %vm1118, %v1117, %v1115
    %vm1120 = vcmask 15360
    %s1121 = scalar_lea.vmem [#allocation0], 80
    %1122 = vst.msk [vmem:[%s1121] sm:$0xff] %vm1120, %v1119
    %s1123 = scalar_lea.vmem [#allocation2], 704
    %v1124 = vld [vmem:[%s1123] ss:$8 sm:$0xf]
    %s1125 = scalar_lea.vmem [#allocation2], 704
    %v1126 = vld [vmem:[%s1125] ss:$8 sm:$0xf0]
    %vm1127 = vcmask 1047556
    %v1128 = vsel %vm1127, %v1126, %v1124
    %vm1129 = vcmask 15360
    %s1130 = scalar_lea.vmem [#allocation0], 88
    %1131 = vst.msk [vmem:[%s1130] sm:$0xff] %vm1129, %v1128
    %s1132 = scalar_lea.vmem [#allocation2], 768
    %v1133 = vld [vmem:[%s1132] ss:$8 sm:$0xf]
    %s1134 = scalar_lea.vmem [#allocation2], 768
    %v1135 = vld [vmem:[%s1134] ss:$8 sm:$0xf0]
    %vm1136 = vcmask 1047556
    %v1137 = vsel %vm1136, %v1135, %v1133
    %vm1138 = vcmask 15360
    %s1139 = scalar_lea.vmem [#allocation0], 96
    %1140 = vst.msk [vmem:[%s1139] sm:$0xff] %vm1138, %v1137
    %s1141 = scalar_lea.vmem [#allocation2], 832
    %v1142 = vld [vmem:[%s1141] ss:$8 sm:$0xf]
    %s1143 = scalar_lea.vmem [#allocation2], 832
    %v1144 = vld [vmem:[%s1143] ss:$8 sm:$0xf0]
    %vm1145 = vcmask 1047556
    %v1146 = vsel %vm1145, %v1144, %v1142
    %vm1147 = vcmask 15360
    %s1148 = scalar_lea.vmem [#allocation0], 104
    %1149 = vst.msk [vmem:[%s1148] sm:$0xff] %vm1147, %v1146
    %s1150 = scalar_lea.vmem [#allocation2], 896
    %v1151 = vld [vmem:[%s1150] ss:$8 sm:$0xf]
    %s1152 = scalar_lea.vmem [#allocation2], 896
    %v1153 = vld [vmem:[%s1152] ss:$8 sm:$0xf0]
    %vm1154 = vcmask 1047556
    %v1155 = vsel %vm1154, %v1153, %v1151
    %vm1156 = vcmask 15360
    %s1157 = scalar_lea.vmem [#allocation0], 112
    %1158 = vst.msk [vmem:[%s1157] sm:$0xff] %vm1156, %v1155
    %s1159 = scalar_lea.vmem [#allocation2], 960
    %v1160 = vld [vmem:[%s1159] ss:$8 sm:$0xf]
    %s1161 = scalar_lea.vmem [#allocation2], 960
    %v1162 = vld [vmem:[%s1161] ss:$8 sm:$0xf0]
    %vm1163 = vcmask 1047556
    %v1164 = vsel %vm1163, %v1162, %v1160
    %vm1165 = vcmask 15360
    %s1166 = scalar_lea.vmem [#allocation0], 120
    %1167 = vst.msk [vmem:[%s1166] sm:$0xff] %vm1165, %v1164
    %s1168 = scalar_lea.vmem [#allocation2], 1024
    %v1169 = vld [vmem:[%s1168] ss:$8 sm:$0xf]
    %s1170 = scalar_lea.vmem [#allocation2], 1024
    %v1171 = vld [vmem:[%s1170] ss:$8 sm:$0xf0]
    %vm1172 = vcmask 1047556
    %v1173 = vsel %vm1172, %v1171, %v1169
    %vm1174 = vcmask 15360
    %s1175 = scalar_lea.vmem [#allocation0], 128
    %1176 = vst.msk [vmem:[%s1175] sm:$0xff] %vm1174, %v1173
    %s1177 = scalar_lea.vmem [#allocation2], 1088
    %v1178 = vld [vmem:[%s1177] ss:$8 sm:$0xf]
    %s1179 = scalar_lea.vmem [#allocation2], 1088
    %v1180 = vld [vmem:[%s1179] ss:$8 sm:$0xf0]
    %vm1181 = vcmask 1047556
    %v1182 = vsel %vm1181, %v1180, %v1178
    %vm1183 = vcmask 15360
    %s1184 = scalar_lea.vmem [#allocation0], 136
    %1185 = vst.msk [vmem:[%s1184] sm:$0xff] %vm1183, %v1182
    %s1186 = scalar_lea.vmem [#allocation2], 1152
    %v1187 = vld [vmem:[%s1186] ss:$8 sm:$0xf]
    %s1188 = scalar_lea.vmem [#allocation2], 1152
    %v1189 = vld [vmem:[%s1188] ss:$8 sm:$0xf0]
    %vm1190 = vcmask 1047556
    %v1191 = vsel %vm1190, %v1189, %v1187
    %vm1192 = vcmask 15360
    %s1193 = scalar_lea.vmem [#allocation0], 144
    %1194 = vst.msk [vmem:[%s1193] sm:$0xff] %vm1192, %v1191
    %s1195 = scalar_lea.vmem [#allocation2], 1216
    %v1196 = vld [vmem:[%s1195] ss:$8 sm:$0xf]
    %s1197 = scalar_lea.vmem [#allocation2], 1216
    %v1198 = vld [vmem:[%s1197] ss:$8 sm:$0xf0]
    %vm1199 = vcmask 1047556
    %v1200 = vsel %vm1199, %v1198, %v1196
    %vm1201 = vcmask 15360
    %s1202 = scalar_lea.vmem [#allocation0], 152
    %1203 = vst.msk [vmem:[%s1202] sm:$0xff] %vm1201, %v1200
    %s1204 = scalar_lea.vmem [#allocation2], 1280
    %v1205 = vld [vmem:[%s1204] ss:$8 sm:$0xf]
    %s1206 = scalar_lea.vmem [#allocation2], 1280
    %v1207 = vld [vmem:[%s1206] ss:$8 sm:$0xf0]
    %vm1208 = vcmask 1047556
    %v1209 = vsel %vm1208, %v1207, %v1205
    %vm1210 = vcmask 15360
    %s1211 = scalar_lea.vmem [#allocation0], 160
    %1212 = vst.msk [vmem:[%s1211] sm:$0xff] %vm1210, %v1209
    %s1213 = scalar_lea.vmem [#allocation2], 1344
    %v1214 = vld [vmem:[%s1213] ss:$8 sm:$0xf]
    %s1215 = scalar_lea.vmem [#allocation2], 1344
    %v1216 = vld [vmem:[%s1215] ss:$8 sm:$0xf0]
    %vm1217 = vcmask 1047556
    %v1218 = vsel %vm1217, %v1216, %v1214
    %vm1219 = vcmask 15360
    %s1220 = scalar_lea.vmem [#allocation0], 168
    %1221 = vst.msk [vmem:[%s1220] sm:$0xff] %vm1219, %v1218
    %s1222 = scalar_lea.vmem [#allocation2], 1408
    %v1223 = vld [vmem:[%s1222] ss:$8 sm:$0xf]
    %s1224 = scalar_lea.vmem [#allocation2], 1408
    %v1225 = vld [vmem:[%s1224] ss:$8 sm:$0xf0]
    %vm1226 = vcmask 1047556
    %v1227 = vsel %vm1226, %v1225, %v1223
    %vm1228 = vcmask 15360
    %s1229 = scalar_lea.vmem [#allocation0], 176
    %1230 = vst.msk [vmem:[%s1229] sm:$0xff] %vm1228, %v1227
    %s1231 = scalar_lea.vmem [#allocation2], 1472
    %v1232 = vld [vmem:[%s1231] ss:$8 sm:$0xf]
    %s1233 = scalar_lea.vmem [#allocation2], 1472
    %v1234 = vld [vmem:[%s1233] ss:$8 sm:$0xf0]
    %vm1235 = vcmask 1047556
    %v1236 = vsel %vm1235, %v1234, %v1232
    %vm1237 = vcmask 15360
    %s1238 = scalar_lea.vmem [#allocation0], 184
    %1239 = vst.msk [vmem:[%s1238] sm:$0xff] %vm1237, %v1236
    %s1240 = scalar_lea.vmem [#allocation2], 1536
    %v1241 = vld [vmem:[%s1240] ss:$8 sm:$0xf]
    %s1242 = scalar_lea.vmem [#allocation2], 1536
    %v1243 = vld [vmem:[%s1242] ss:$8 sm:$0xf0]
    %vm1244 = vcmask 1047556
    %v1245 = vsel %vm1244, %v1243, %v1241
    %vm1246 = vcmask 15360
    %s1247 = scalar_lea.vmem [#allocation0], 192
    %1248 = vst.msk [vmem:[%s1247] sm:$0xff] %vm1246, %v1245
    %s1249 = scalar_lea.vmem [#allocation2], 1600
    %v1250 = vld [vmem:[%s1249] ss:$8 sm:$0xf]
    %s1251 = scalar_lea.vmem [#allocation2], 1600
    %v1252 = vld [vmem:[%s1251] ss:$8 sm:$0xf0]
    %vm1253 = vcmask 1047556
    %v1254 = vsel %vm1253, %v1252, %v1250
    %vm1255 = vcmask 15360
    %s1256 = scalar_lea.vmem [#allocation0], 200
    %1257 = vst.msk [vmem:[%s1256] sm:$0xff] %vm1255, %v1254
    %s1258 = scalar_lea.vmem [#allocation2], 1664
    %v1259 = vld [vmem:[%s1258] ss:$8 sm:$0xf]
    %s1260 = scalar_lea.vmem [#allocation2], 1664
    %v1261 = vld [vmem:[%s1260] ss:$8 sm:$0xf0]
    %vm1262 = vcmask 1047556
    %v1263 = vsel %vm1262, %v1261, %v1259
    %vm1264 = vcmask 15360
    %s1265 = scalar_lea.vmem [#allocation0], 208
    %1266 = vst.msk [vmem:[%s1265] sm:$0xff] %vm1264, %v1263
    %s1267 = scalar_lea.vmem [#allocation2], 1728
    %v1268 = vld [vmem:[%s1267] ss:$8 sm:$0xf]
    %s1269 = scalar_lea.vmem [#allocation2], 1728
    %v1270 = vld [vmem:[%s1269] ss:$8 sm:$0xf0]
    %vm1271 = vcmask 1047556
    %v1272 = vsel %vm1271, %v1270, %v1268
    %vm1273 = vcmask 15360
    %s1274 = scalar_lea.vmem [#allocation0], 216
    %1275 = vst.msk [vmem:[%s1274] sm:$0xff] %vm1273, %v1272
    %s1276 = scalar_lea.vmem [#allocation2], 1792
    %v1277 = vld [vmem:[%s1276] ss:$8 sm:$0xf]
    %s1278 = scalar_lea.vmem [#allocation2], 1792
    %v1279 = vld [vmem:[%s1278] ss:$8 sm:$0xf0]
    %vm1280 = vcmask 1047556
    %v1281 = vsel %vm1280, %v1279, %v1277
    %vm1282 = vcmask 15360
    %s1283 = scalar_lea.vmem [#allocation0], 224
    %1284 = vst.msk [vmem:[%s1283] sm:$0xff] %vm1282, %v1281
    %s1285 = scalar_lea.vmem [#allocation2], 1856
    %v1286 = vld [vmem:[%s1285] ss:$8 sm:$0xf]
    %s1287 = scalar_lea.vmem [#allocation2], 1856
    %v1288 = vld [vmem:[%s1287] ss:$8 sm:$0xf0]
    %vm1289 = vcmask 1047556
    %v1290 = vsel %vm1289, %v1288, %v1286
    %vm1291 = vcmask 15360
    %s1292 = scalar_lea.vmem [#allocation0], 232
    %1293 = vst.msk [vmem:[%s1292] sm:$0xff] %vm1291, %v1290
    %s1294 = scalar_lea.vmem [#allocation2], 1920
    %v1295 = vld [vmem:[%s1294] ss:$8 sm:$0xf]
    %s1296 = scalar_lea.vmem [#allocation2], 1920
    %v1297 = vld [vmem:[%s1296] ss:$8 sm:$0xf0]
    %vm1298 = vcmask 1047556
    %v1299 = vsel %vm1298, %v1297, %v1295
    %vm1300 = vcmask 15360
    %s1301 = scalar_lea.vmem [#allocation0], 240
    %1302 = vst.msk [vmem:[%s1301] sm:$0xff] %vm1300, %v1299
    %s1303 = scalar_lea.vmem [#allocation2], 1984
    %v1304 = vld [vmem:[%s1303] ss:$8 sm:$0xf]
    %s1305 = scalar_lea.vmem [#allocation2], 1984
    %v1306 = vld [vmem:[%s1305] ss:$8 sm:$0xf0]
    %vm1307 = vcmask 1047556
    %v1308 = vsel %vm1307, %v1306, %v1304
    %vm1309 = vcmask 15360
    %s1310 = scalar_lea.vmem [#allocation0], 248
    %1311 = vst.msk [vmem:[%s1310] sm:$0xff] %vm1309, %v1308
    %s1312 = scalar_lea.vmem [#allocation2], 3
    %v1313 = vld [vmem:[%s1312] ss:$8 sm:$0xf]
    %s1314 = scalar_lea.vmem [#allocation2], 3
    %v1315 = vld [vmem:[%s1314] ss:$8 sm:$0xf0]
    %vm1316 = vcmask 1047556
    %v1317 = vsel %vm1316, %v1315, %v1313
    %1318 = vrot.lane.b32.xlu0 %v1317, 6
    %v1319 = vpop.permute.xlu0 %1318
    %vm1320 = vcmask 64560
    %1321 = vst.msk [vmem:[#allocation0] sm:$0xff] %vm1320, %v1319
    %s1322 = scalar_lea.vmem [#allocation2], 259
    %v1323 = vld [vmem:[%s1322] ss:$8 sm:$0xf]
    %s1324 = scalar_lea.vmem [#allocation2], 259
    %v1325 = vld [vmem:[%s1324] ss:$8 sm:$0xf0]
    %vm1326 = vcmask 1047556
    %v1327 = vsel %vm1326, %v1325, %v1323
    %1328 = vrot.lane.b32.xlu0 %v1327, 6
    %v1329 = vpop.permute.xlu0 %1328
    %vm1330 = vcmask 64560
    %s1331 = scalar_lea.vmem [#allocation0], 32
    %1332 = vst.msk [vmem:[%s1331] sm:$0xff] %vm1330, %v1329
    %s1333 = scalar_lea.vmem [#allocation2], 515
    %v1334 = vld [vmem:[%s1333] ss:$8 sm:$0xf]
    %s1335 = scalar_lea.vmem [#allocation2], 515
    %v1336 = vld [vmem:[%s1335] ss:$8 sm:$0xf0]
    %vm1337 = vcmask 1047556
    %v1338 = vsel %vm1337, %v1336, %v1334
    %1339 = vrot.lane.b32.xlu0 %v1338, 6
    %v1340 = vpop.permute.xlu0 %1339
    %vm1341 = vcmask 64560
    %s1342 = scalar_lea.vmem [#allocation0], 64
    %1343 = vst.msk [vmem:[%s1342] sm:$0xff] %vm1341, %v1340
    %s1344 = scalar_lea.vmem [#allocation2], 771
    %v1345 = vld [vmem:[%s1344] ss:$8 sm:$0xf]
    %s1346 = scalar_lea.vmem [#allocation2], 771
    %v1347 = vld [vmem:[%s1346] ss:$8 sm:$0xf0]
    %vm1348 = vcmask 1047556
    %v1349 = vsel %vm1348, %v1347, %v1345
    %1350 = vrot.lane.b32.xlu0 %v1349, 6
    %v1351 = vpop.permute.xlu0 %1350
    %vm1352 = vcmask 64560
    %s1353 = scalar_lea.vmem [#allocation0], 96
    %1354 = vst.msk [vmem:[%s1353] sm:$0xff] %vm1352, %v1351
    %s1355 = scalar_lea.vmem [#allocation2], 1027
    %v1356 = vld [vmem:[%s1355] ss:$8 sm:$0xf]
    %s1357 = scalar_lea.vmem [#allocation2], 1027
    %v1358 = vld [vmem:[%s1357] ss:$8 sm:$0xf0]
    %vm1359 = vcmask 1047556
    %v1360 = vsel %vm1359, %v1358, %v1356
    %1361 = vrot.lane.b32.xlu0 %v1360, 6
    %v1362 = vpop.permute.xlu0 %1361
    %vm1363 = vcmask 64560
    %s1364 = scalar_lea.vmem [#allocation0], 128
    %1365 = vst.msk [vmem:[%s1364] sm:$0xff] %vm1363, %v1362
    %s1366 = scalar_lea.vmem [#allocation2], 1283
    %v1367 = vld [vmem:[%s1366] ss:$8 sm:$0xf]
    %s1368 = scalar_lea.vmem [#allocation2], 1283
    %v1369 = vld [vmem:[%s1368] ss:$8 sm:$0xf0]
    %vm1370 = vcmask 1047556
    %v1371 = vsel %vm1370, %v1369, %v1367
    %1372 = vrot.lane.b32.xlu0 %v1371, 6
    %v1373 = vpop.permute.xlu0 %1372
    %vm1374 = vcmask 64560
    %s1375 = scalar_lea.vmem [#allocation0], 160
    %1376 = vst.msk [vmem:[%s1375] sm:$0xff] %vm1374, %v1373
    %s1377 = scalar_lea.vmem [#allocation2], 1539
    %v1378 = vld [vmem:[%s1377] ss:$8 sm:$0xf]
    %s1379 = scalar_lea.vmem [#allocation2], 1539
    %v1380 = vld [vmem:[%s1379] ss:$8 sm:$0xf0]
    %vm1381 = vcmask 1047556
    %v1382 = vsel %vm1381, %v1380, %v1378
    %1383 = vrot.lane.b32.xlu0 %v1382, 6
    %v1384 = vpop.permute.xlu0 %1383
    %vm1385 = vcmask 64560
    %s1386 = scalar_lea.vmem [#allocation0], 192
    %1387 = vst.msk [vmem:[%s1386] sm:$0xff] %vm1385, %v1384
    %s1388 = scalar_lea.vmem [#allocation2], 1795
    %v1389 = vld [vmem:[%s1388] ss:$8 sm:$0xf]
    %s1390 = scalar_lea.vmem [#allocation2], 1795
    %v1391 = vld [vmem:[%s1390] ss:$8 sm:$0xf0]
    %vm1392 = vcmask 1047556
    %v1393 = vsel %vm1392, %v1391, %v1389
    %1394 = vrot.lane.b32.xlu0 %v1393, 6
    %v1395 = vpop.permute.xlu0 %1394
    %vm1396 = vcmask 64560
    %s1397 = scalar_lea.vmem [#allocation0], 224
    %1398 = vst.msk [vmem:[%s1397] sm:$0xff] %vm1396, %v1395
    %s1399 = scalar_lea.vmem [#allocation2], 67
    %v1400 = vld [vmem:[%s1399] ss:$8 sm:$0xf]
    %s1401 = scalar_lea.vmem [#allocation2], 67
    %v1402 = vld [vmem:[%s1401] ss:$8 sm:$0xf0]
    %vm1403 = vcmask 1047556
    %v1404 = vsel %vm1403, %v1402, %v1400
    %1405 = vrot.lane.b32.xlu0 %v1404, 6
    %v1406 = vpop.permute.xlu0 %1405
    %vm1407 = vcmask 64560
    %s1408 = scalar_lea.vmem [#allocation0], 8
    %1409 = vst.msk [vmem:[%s1408] sm:$0xff] %vm1407, %v1406
    %s1410 = scalar_lea.vmem [#allocation2], 323
    %v1411 = vld [vmem:[%s1410] ss:$8 sm:$0xf]
    %s1412 = scalar_lea.vmem [#allocation2], 323
    %v1413 = vld [vmem:[%s1412] ss:$8 sm:$0xf0]
    %vm1414 = vcmask 1047556
    %v1415 = vsel %vm1414, %v1413, %v1411
    %1416 = vrot.lane.b32.xlu0 %v1415, 6
    %v1417 = vpop.permute.xlu0 %1416
    %vm1418 = vcmask 64560
    %s1419 = scalar_lea.vmem [#allocation0], 40
    %1420 = vst.msk [vmem:[%s1419] sm:$0xff] %vm1418, %v1417
    %s1421 = scalar_lea.vmem [#allocation2], 579
    %v1422 = vld [vmem:[%s1421] ss:$8 sm:$0xf]
    %s1423 = scalar_lea.vmem [#allocation2], 579
    %v1424 = vld [vmem:[%s1423] ss:$8 sm:$0xf0]
    %vm1425 = vcmask 1047556
    %v1426 = vsel %vm1425, %v1424, %v1422
    %1427 = vrot.lane.b32.xlu0 %v1426, 6
    %v1428 = vpop.permute.xlu0 %1427
    %vm1429 = vcmask 64560
    %s1430 = scalar_lea.vmem [#allocation0], 72
    %1431 = vst.msk [vmem:[%s1430] sm:$0xff] %vm1429, %v1428
    %s1432 = scalar_lea.vmem [#allocation2], 835
    %v1433 = vld [vmem:[%s1432] ss:$8 sm:$0xf]
    %s1434 = scalar_lea.vmem [#allocation2], 835
    %v1435 = vld [vmem:[%s1434] ss:$8 sm:$0xf0]
    %vm1436 = vcmask 1047556
    %v1437 = vsel %vm1436, %v1435, %v1433
    %1438 = vrot.lane.b32.xlu0 %v1437, 6
    %v1439 = vpop.permute.xlu0 %1438
    %vm1440 = vcmask 64560
    %s1441 = scalar_lea.vmem [#allocation0], 104
    %1442 = vst.msk [vmem:[%s1441] sm:$0xff] %vm1440, %v1439
    %s1443 = scalar_lea.vmem [#allocation2], 1091
    %v1444 = vld [vmem:[%s1443] ss:$8 sm:$0xf]
    %s1445 = scalar_lea.vmem [#allocation2], 1091
    %v1446 = vld [vmem:[%s1445] ss:$8 sm:$0xf0]
    %vm1447 = vcmask 1047556
    %v1448 = vsel %vm1447, %v1446, %v1444
    %1449 = vrot.lane.b32.xlu0 %v1448, 6
    %v1450 = vpop.permute.xlu0 %1449
    %vm1451 = vcmask 64560
    %s1452 = scalar_lea.vmem [#allocation0], 136
    %1453 = vst.msk [vmem:[%s1452] sm:$0xff] %vm1451, %v1450
    %s1454 = scalar_lea.vmem [#allocation2], 1347
    %v1455 = vld [vmem:[%s1454] ss:$8 sm:$0xf]
    %s1456 = scalar_lea.vmem [#allocation2], 1347
    %v1457 = vld [vmem:[%s1456] ss:$8 sm:$0xf0]
    %vm1458 = vcmask 1047556
    %v1459 = vsel %vm1458, %v1457, %v1455
    %1460 = vrot.lane.b32.xlu0 %v1459, 6
    %v1461 = vpop.permute.xlu0 %1460
    %vm1462 = vcmask 64560
    %s1463 = scalar_lea.vmem [#allocation0], 168
    %1464 = vst.msk [vmem:[%s1463] sm:$0xff] %vm1462, %v1461
    %s1465 = scalar_lea.vmem [#allocation2], 1603
    %v1466 = vld [vmem:[%s1465] ss:$8 sm:$0xf]
    %s1467 = scalar_lea.vmem [#allocation2], 1603
    %v1468 = vld [vmem:[%s1467] ss:$8 sm:$0xf0]
    %vm1469 = vcmask 1047556
    %v1470 = vsel %vm1469, %v1468, %v1466
    %1471 = vrot.lane.b32.xlu0 %v1470, 6
    %v1472 = vpop.permute.xlu0 %1471
    %vm1473 = vcmask 64560
    %s1474 = scalar_lea.vmem [#allocation0], 200
    %1475 = vst.msk [vmem:[%s1474] sm:$0xff] %vm1473, %v1472
    %s1476 = scalar_lea.vmem [#allocation2], 1859
    %v1477 = vld [vmem:[%s1476] ss:$8 sm:$0xf]
    %s1478 = scalar_lea.vmem [#allocation2], 1859
    %v1479 = vld [vmem:[%s1478] ss:$8 sm:$0xf0]
    %vm1480 = vcmask 1047556
    %v1481 = vsel %vm1480, %v1479, %v1477
    %1482 = vrot.lane.b32.xlu0 %v1481, 6
    %v1483 = vpop.permute.xlu0 %1482
    %vm1484 = vcmask 64560
    %s1485 = scalar_lea.vmem [#allocation0], 232
    %1486 = vst.msk [vmem:[%s1485] sm:$0xff] %vm1484, %v1483
    %s1487 = scalar_lea.vmem [#allocation2], 131
    %v1488 = vld [vmem:[%s1487] ss:$8 sm:$0xf]
    %s1489 = scalar_lea.vmem [#allocation2], 131
    %v1490 = vld [vmem:[%s1489] ss:$8 sm:$0xf0]
    %vm1491 = vcmask 1047556
    %v1492 = vsel %vm1491, %v1490, %v1488
    %1493 = vrot.lane.b32.xlu0 %v1492, 6
    %v1494 = vpop.permute.xlu0 %1493
    %vm1495 = vcmask 64560
    %s1496 = scalar_lea.vmem [#allocation0], 16
    %1497 = vst.msk [vmem:[%s1496] sm:$0xff] %vm1495, %v1494
    %s1498 = scalar_lea.vmem [#allocation2], 387
    %v1499 = vld [vmem:[%s1498] ss:$8 sm:$0xf]
    %s1500 = scalar_lea.vmem [#allocation2], 387
    %v1501 = vld [vmem:[%s1500] ss:$8 sm:$0xf0]
    %vm1502 = vcmask 1047556
    %v1503 = vsel %vm1502, %v1501, %v1499
    %1504 = vrot.lane.b32.xlu0 %v1503, 6
    %v1505 = vpop.permute.xlu0 %1504
    %vm1506 = vcmask 64560
    %s1507 = scalar_lea.vmem [#allocation0], 48
    %1508 = vst.msk [vmem:[%s1507] sm:$0xff] %vm1506, %v1505
    %s1509 = scalar_lea.vmem [#allocation2], 643
    %v1510 = vld [vmem:[%s1509] ss:$8 sm:$0xf]
    %s1511 = scalar_lea.vmem [#allocation2], 643
    %v1512 = vld [vmem:[%s1511] ss:$8 sm:$0xf0]
    %vm1513 = vcmask 1047556
    %v1514 = vsel %vm1513, %v1512, %v1510
    %1515 = vrot.lane.b32.xlu0 %v1514, 6
    %v1516 = vpop.permute.xlu0 %1515
    %vm1517 = vcmask 64560
    %s1518 = scalar_lea.vmem [#allocation0], 80
    %1519 = vst.msk [vmem:[%s1518] sm:$0xff] %vm1517, %v1516
    %s1520 = scalar_lea.vmem [#allocation2], 899
    %v1521 = vld [vmem:[%s1520] ss:$8 sm:$0xf]
    %s1522 = scalar_lea.vmem [#allocation2], 899
    %v1523 = vld [vmem:[%s1522] ss:$8 sm:$0xf0]
    %vm1524 = vcmask 1047556
    %v1525 = vsel %vm1524, %v1523, %v1521
    %1526 = vrot.lane.b32.xlu0 %v1525, 6
    %v1527 = vpop.permute.xlu0 %1526
    %vm1528 = vcmask 64560
    %s1529 = scalar_lea.vmem [#allocation0], 112
    %1530 = vst.msk [vmem:[%s1529] sm:$0xff] %vm1528, %v1527
    %s1531 = scalar_lea.vmem [#allocation2], 1155
    %v1532 = vld [vmem:[%s1531] ss:$8 sm:$0xf]
    %s1533 = scalar_lea.vmem [#allocation2], 1155
    %v1534 = vld [vmem:[%s1533] ss:$8 sm:$0xf0]
    %vm1535 = vcmask 1047556
    %v1536 = vsel %vm1535, %v1534, %v1532
    %1537 = vrot.lane.b32.xlu0 %v1536, 6
    %v1538 = vpop.permute.xlu0 %1537
    %vm1539 = vcmask 64560
    %s1540 = scalar_lea.vmem [#allocation0], 144
    %1541 = vst.msk [vmem:[%s1540] sm:$0xff] %vm1539, %v1538
    %s1542 = scalar_lea.vmem [#allocation2], 1411
    %v1543 = vld [vmem:[%s1542] ss:$8 sm:$0xf]
    %s1544 = scalar_lea.vmem [#allocation2], 1411
    %v1545 = vld [vmem:[%s1544] ss:$8 sm:$0xf0]
    %vm1546 = vcmask 1047556
    %v1547 = vsel %vm1546, %v1545, %v1543
    %1548 = vrot.lane.b32.xlu0 %v1547, 6
    %v1549 = vpop.permute.xlu0 %1548
    %vm1550 = vcmask 64560
    %s1551 = scalar_lea.vmem [#allocation0], 176
    %1552 = vst.msk [vmem:[%s1551] sm:$0xff] %vm1550, %v1549
    %s1553 = scalar_lea.vmem [#allocation2], 1667
    %v1554 = vld [vmem:[%s1553] ss:$8 sm:$0xf]
    %s1555 = scalar_lea.vmem [#allocation2], 1667
    %v1556 = vld [vmem:[%s1555] ss:$8 sm:$0xf0]
    %vm1557 = vcmask 1047556
    %v1558 = vsel %vm1557, %v1556, %v1554
    %1559 = vrot.lane.b32.xlu0 %v1558, 6
    %v1560 = vpop.permute.xlu0 %1559
    %vm1561 = vcmask 64560
    %s1562 = scalar_lea.vmem [#allocation0], 208
    %1563 = vst.msk [vmem:[%s1562] sm:$0xff] %vm1561, %v1560
    %s1564 = scalar_lea.vmem [#allocation2], 1923
    %v1565 = vld [vmem:[%s1564] ss:$8 sm:$0xf]
    %s1566 = scalar_lea.vmem [#allocation2], 1923
    %v1567 = vld [vmem:[%s1566] ss:$8 sm:$0xf0]
    %vm1568 = vcmask 1047556
    %v1569 = vsel %vm1568, %v1567, %v1565
    %1570 = vrot.lane.b32.xlu0 %v1569, 6
    %v1571 = vpop.permute.xlu0 %1570
    %vm1572 = vcmask 64560
    %s1573 = scalar_lea.vmem [#allocation0], 240
    %1574 = vst.msk [vmem:[%s1573] sm:$0xff] %vm1572, %v1571
    %s1575 = scalar_lea.vmem [#allocation2], 195
    %v1576 = vld [vmem:[%s1575] ss:$8 sm:$0xf]
    %s1577 = scalar_lea.vmem [#allocation2], 195
    %v1578 = vld [vmem:[%s1577] ss:$8 sm:$0xf0]
    %vm1579 = vcmask 1047556
    %v1580 = vsel %vm1579, %v1578, %v1576
    %1581 = vrot.lane.b32.xlu0 %v1580, 6
    %v1582 = vpop.permute.xlu0 %1581
    %vm1583 = vcmask 64560
    %s1584 = scalar_lea.vmem [#allocation0], 24
    %1585 = vst.msk [vmem:[%s1584] sm:$0xff] %vm1583, %v1582
    %s1586 = scalar_lea.vmem [#allocation2], 451
    %v1587 = vld [vmem:[%s1586] ss:$8 sm:$0xf]
    %s1588 = scalar_lea.vmem [#allocation2], 451
    %v1589 = vld [vmem:[%s1588] ss:$8 sm:$0xf0]
    %vm1590 = vcmask 1047556
    %v1591 = vsel %vm1590, %v1589, %v1587
    %1592 = vrot.lane.b32.xlu0 %v1591, 6
    %v1593 = vpop.permute.xlu0 %1592
    %vm1594 = vcmask 64560
    %s1595 = scalar_lea.vmem [#allocation0], 56
    %1596 = vst.msk [vmem:[%s1595] sm:$0xff] %vm1594, %v1593
    %s1597 = scalar_lea.vmem [#allocation2], 707
    %v1598 = vld [vmem:[%s1597] ss:$8 sm:$0xf]
    %s1599 = scalar_lea.vmem [#allocation2], 707
    %v1600 = vld [vmem:[%s1599] ss:$8 sm:$0xf0]
    %vm1601 = vcmask 1047556
    %v1602 = vsel %vm1601, %v1600, %v1598
    %1603 = vrot.lane.b32.xlu0 %v1602, 6
    %v1604 = vpop.permute.xlu0 %1603
    %vm1605 = vcmask 64560
    %s1606 = scalar_lea.vmem [#allocation0], 88
    %1607 = vst.msk [vmem:[%s1606] sm:$0xff] %vm1605, %v1604
    %s1608 = scalar_lea.vmem [#allocation2], 963
    %v1609 = vld [vmem:[%s1608] ss:$8 sm:$0xf]
    %s1610 = scalar_lea.vmem [#allocation2], 963
    %v1611 = vld [vmem:[%s1610] ss:$8 sm:$0xf0]
    %vm1612 = vcmask 1047556
    %v1613 = vsel %vm1612, %v1611, %v1609
    %1614 = vrot.lane.b32.xlu0 %v1613, 6
    %v1615 = vpop.permute.xlu0 %1614
    %vm1616 = vcmask 64560
    %s1617 = scalar_lea.vmem [#allocation0], 120
    %1618 = vst.msk [vmem:[%s1617] sm:$0xff] %vm1616, %v1615
    %s1619 = scalar_lea.vmem [#allocation2], 1219
    %v1620 = vld [vmem:[%s1619] ss:$8 sm:$0xf]
    %s1621 = scalar_lea.vmem [#allocation2], 1219
    %v1622 = vld [vmem:[%s1621] ss:$8 sm:$0xf0]
    %vm1623 = vcmask 1047556
    %v1624 = vsel %vm1623, %v1622, %v1620
    %1625 = vrot.lane.b32.xlu0 %v1624, 6
    %v1626 = vpop.permute.xlu0 %1625
    %vm1627 = vcmask 64560
    %s1628 = scalar_lea.vmem [#allocation0], 152
    %1629 = vst.msk [vmem:[%s1628] sm:$0xff] %vm1627, %v1626
    %s1630 = scalar_lea.vmem [#allocation2], 1475
    %v1631 = vld [vmem:[%s1630] ss:$8 sm:$0xf]
    %s1632 = scalar_lea.vmem [#allocation2], 1475
    %v1633 = vld [vmem:[%s1632] ss:$8 sm:$0xf0]
    %vm1634 = vcmask 1047556
    %v1635 = vsel %vm1634, %v1633, %v1631
    %1636 = vrot.lane.b32.xlu0 %v1635, 6
    %v1637 = vpop.permute.xlu0 %1636
    %vm1638 = vcmask 64560
    %s1639 = scalar_lea.vmem [#allocation0], 184
    %1640 = vst.msk [vmem:[%s1639] sm:$0xff] %vm1638, %v1637
    %s1641 = scalar_lea.vmem [#allocation2], 1731
    %v1642 = vld [vmem:[%s1641] ss:$8 sm:$0xf]
    %s1643 = scalar_lea.vmem [#allocation2], 1731
    %v1644 = vld [vmem:[%s1643] ss:$8 sm:$0xf0]
    %vm1645 = vcmask 1047556
    %v1646 = vsel %vm1645, %v1644, %v1642
    %1647 = vrot.lane.b32.xlu0 %v1646, 6
    %v1648 = vpop.permute.xlu0 %1647
    %vm1649 = vcmask 64560
    %s1650 = scalar_lea.vmem [#allocation0], 216
    %1651 = vst.msk [vmem:[%s1650] sm:$0xff] %vm1649, %v1648
    %s1652 = scalar_lea.vmem [#allocation2], 1987
    %v1653 = vld [vmem:[%s1652] ss:$8 sm:$0xf]
    %s1654 = scalar_lea.vmem [#allocation2], 1987
    %v1655 = vld [vmem:[%s1654] ss:$8 sm:$0xf0]
    %vm1656 = vcmask 1047556
    %v1657 = vsel %vm1656, %v1655, %v1653
    %1658 = vrot.lane.b32.xlu0 %v1657, 6
    %v1659 = vpop.permute.xlu0 %1658
    %vm1660 = vcmask 64560
    %s1661 = scalar_lea.vmem [#allocation0], 248
    %1662 = vst.msk [vmem:[%s1661] sm:$0xff] %vm1660, %v1659
    %s1663 = scalar_lea.vmem [#allocation2], 2
    %v1664 = vld [vmem:[%s1663] ss:$8 sm:$0xf]
    %s1665 = scalar_lea.vmem [#allocation2], 2
    %v1666 = vld [vmem:[%s1665] ss:$8 sm:$0xf0]
    %vm1667 = vcmask 1047556
    %v1668 = vsel %vm1667, %v1666, %v1664
    %1669 = vrot.lane.b32.xlu0 %v1668, 4
    %v1670 = vpop.permute.xlu0 %1669
    %vm1671 = vcmask 48160
    %1672 = vst.msk [vmem:[#allocation0] sm:$0xff] %vm1671, %v1670
    %s1673 = scalar_lea.vmem [#allocation2], 258
    %v1674 = vld [vmem:[%s1673] ss:$8 sm:$0xf]
    %s1675 = scalar_lea.vmem [#allocation2], 258
    %v1676 = vld [vmem:[%s1675] ss:$8 sm:$0xf0]
    %vm1677 = vcmask 1047556
    %v1678 = vsel %vm1677, %v1676, %v1674
    %1679 = vrot.lane.b32.xlu0 %v1678, 4
    %v1680 = vpop.permute.xlu0 %1679
    %vm1681 = vcmask 48160
    %s1682 = scalar_lea.vmem [#allocation0], 32
    %1683 = vst.msk [vmem:[%s1682] sm:$0xff] %vm1681, %v1680
    %s1684 = scalar_lea.vmem [#allocation2], 514
    %v1685 = vld [vmem:[%s1684] ss:$8 sm:$0xf]
    %s1686 = scalar_lea.vmem [#allocation2], 514
    %v1687 = vld [vmem:[%s1686] ss:$8 sm:$0xf0]
    %vm1688 = vcmask 1047556
    %v1689 = vsel %vm1688, %v1687, %v1685
    %1690 = vrot.lane.b32.xlu0 %v1689, 4
    %v1691 = vpop.permute.xlu0 %1690
    %vm1692 = vcmask 48160
    %s1693 = scalar_lea.vmem [#allocation0], 64
    %1694 = vst.msk [vmem:[%s1693] sm:$0xff] %vm1692, %v1691
    %s1695 = scalar_lea.vmem [#allocation2], 770
    %v1696 = vld [vmem:[%s1695] ss:$8 sm:$0xf]
    %s1697 = scalar_lea.vmem [#allocation2], 770
    %v1698 = vld [vmem:[%s1697] ss:$8 sm:$0xf0]
    %vm1699 = vcmask 1047556
    %v1700 = vsel %vm1699, %v1698, %v1696
    %1701 = vrot.lane.b32.xlu0 %v1700, 4
    %v1702 = vpop.permute.xlu0 %1701
    %vm1703 = vcmask 48160
    %s1704 = scalar_lea.vmem [#allocation0], 96
    %1705 = vst.msk [vmem:[%s1704] sm:$0xff] %vm1703, %v1702
    %s1706 = scalar_lea.vmem [#allocation2], 1026
    %v1707 = vld [vmem:[%s1706] ss:$8 sm:$0xf]
    %s1708 = scalar_lea.vmem [#allocation2], 1026
    %v1709 = vld [vmem:[%s1708] ss:$8 sm:$0xf0]
    %vm1710 = vcmask 1047556
    %v1711 = vsel %vm1710, %v1709, %v1707
    %1712 = vrot.lane.b32.xlu0 %v1711, 4
    %v1713 = vpop.permute.xlu0 %1712
    %vm1714 = vcmask 48160
    %s1715 = scalar_lea.vmem [#allocation0], 128
    %1716 = vst.msk [vmem:[%s1715] sm:$0xff] %vm1714, %v1713
    %s1717 = scalar_lea.vmem [#allocation2], 1282
    %v1718 = vld [vmem:[%s1717] ss:$8 sm:$0xf]
    %s1719 = scalar_lea.vmem [#allocation2], 1282
    %v1720 = vld [vmem:[%s1719] ss:$8 sm:$0xf0]
    %vm1721 = vcmask 1047556
    %v1722 = vsel %vm1721, %v1720, %v1718
    %1723 = vrot.lane.b32.xlu0 %v1722, 4
    %v1724 = vpop.permute.xlu0 %1723
    %vm1725 = vcmask 48160
    %s1726 = scalar_lea.vmem [#allocation0], 160
    %1727 = vst.msk [vmem:[%s1726] sm:$0xff] %vm1725, %v1724
    %s1728 = scalar_lea.vmem [#allocation2], 1538
    %v1729 = vld [vmem:[%s1728] ss:$8 sm:$0xf]
    %s1730 = scalar_lea.vmem [#allocation2], 1538
    %v1731 = vld [vmem:[%s1730] ss:$8 sm:$0xf0]
    %vm1732 = vcmask 1047556
    %v1733 = vsel %vm1732, %v1731, %v1729
    %1734 = vrot.lane.b32.xlu0 %v1733, 4
    %v1735 = vpop.permute.xlu0 %1734
    %vm1736 = vcmask 48160
    %s1737 = scalar_lea.vmem [#allocation0], 192
    %1738 = vst.msk [vmem:[%s1737] sm:$0xff] %vm1736, %v1735
    %s1739 = scalar_lea.vmem [#allocation2], 1794
    %v1740 = vld [vmem:[%s1739] ss:$8 sm:$0xf]
    %s1741 = scalar_lea.vmem [#allocation2], 1794
    %v1742 = vld [vmem:[%s1741] ss:$8 sm:$0xf0]
    %vm1743 = vcmask 1047556
    %v1744 = vsel %vm1743, %v1742, %v1740
    %1745 = vrot.lane.b32.xlu0 %v1744, 4
    %v1746 = vpop.permute.xlu0 %1745
    %vm1747 = vcmask 48160
    %s1748 = scalar_lea.vmem [#allocation0], 224
    %1749 = vst.msk [vmem:[%s1748] sm:$0xff] %vm1747, %v1746
    %s1750 = scalar_lea.vmem [#allocation2], 66
    %v1751 = vld [vmem:[%s1750] ss:$8 sm:$0xf]
    %s1752 = scalar_lea.vmem [#allocation2], 66
    %v1753 = vld [vmem:[%s1752] ss:$8 sm:$0xf0]
    %vm1754 = vcmask 1047556
    %v1755 = vsel %vm1754, %v1753, %v1751
    %1756 = vrot.lane.b32.xlu0 %v1755, 4
    %v1757 = vpop.permute.xlu0 %1756
    %vm1758 = vcmask 48160
    %s1759 = scalar_lea.vmem [#allocation0], 8
    %1760 = vst.msk [vmem:[%s1759] sm:$0xff] %vm1758, %v1757
    %s1761 = scalar_lea.vmem [#allocation2], 322
    %v1762 = vld [vmem:[%s1761] ss:$8 sm:$0xf]
    %s1763 = scalar_lea.vmem [#allocation2], 322
    %v1764 = vld [vmem:[%s1763] ss:$8 sm:$0xf0]
    %vm1765 = vcmask 1047556
    %v1766 = vsel %vm1765, %v1764, %v1762
    %1767 = vrot.lane.b32.xlu0 %v1766, 4
    %v1768 = vpop.permute.xlu0 %1767
    %vm1769 = vcmask 48160
    %s1770 = scalar_lea.vmem [#allocation0], 40
    %1771 = vst.msk [vmem:[%s1770] sm:$0xff] %vm1769, %v1768
    %s1772 = scalar_lea.vmem [#allocation2], 578
    %v1773 = vld [vmem:[%s1772] ss:$8 sm:$0xf]
    %s1774 = scalar_lea.vmem [#allocation2], 578
    %v1775 = vld [vmem:[%s1774] ss:$8 sm:$0xf0]
    %vm1776 = vcmask 1047556
    %v1777 = vsel %vm1776, %v1775, %v1773
    %1778 = vrot.lane.b32.xlu0 %v1777, 4
    %v1779 = vpop.permute.xlu0 %1778
    %vm1780 = vcmask 48160
    %s1781 = scalar_lea.vmem [#allocation0], 72
    %1782 = vst.msk [vmem:[%s1781] sm:$0xff] %vm1780, %v1779
    %s1783 = scalar_lea.vmem [#allocation2], 834
    %v1784 = vld [vmem:[%s1783] ss:$8 sm:$0xf]
    %s1785 = scalar_lea.vmem [#allocation2], 834
    %v1786 = vld [vmem:[%s1785] ss:$8 sm:$0xf0]
    %vm1787 = vcmask 1047556
    %v1788 = vsel %vm1787, %v1786, %v1784
    %1789 = vrot.lane.b32.xlu0 %v1788, 4
    %v1790 = vpop.permute.xlu0 %1789
    %vm1791 = vcmask 48160
    %s1792 = scalar_lea.vmem [#allocation0], 104
    %1793 = vst.msk [vmem:[%s1792] sm:$0xff] %vm1791, %v1790
    %s1794 = scalar_lea.vmem [#allocation2], 1090
    %v1795 = vld [vmem:[%s1794] ss:$8 sm:$0xf]
    %s1796 = scalar_lea.vmem [#allocation2], 1090
    %v1797 = vld [vmem:[%s1796] ss:$8 sm:$0xf0]
    %vm1798 = vcmask 1047556
    %v1799 = vsel %vm1798, %v1797, %v1795
    %1800 = vrot.lane.b32.xlu0 %v1799, 4
    %v1801 = vpop.permute.xlu0 %1800
    %vm1802 = vcmask 48160
    %s1803 = scalar_lea.vmem [#allocation0], 136
    %1804 = vst.msk [vmem:[%s1803] sm:$0xff] %vm1802, %v1801
    %s1805 = scalar_lea.vmem [#allocation2], 1346
    %v1806 = vld [vmem:[%s1805] ss:$8 sm:$0xf]
    %s1807 = scalar_lea.vmem [#allocation2], 1346
    %v1808 = vld [vmem:[%s1807] ss:$8 sm:$0xf0]
    %vm1809 = vcmask 1047556
    %v1810 = vsel %vm1809, %v1808, %v1806
    %1811 = vrot.lane.b32.xlu0 %v1810, 4
    %v1812 = vpop.permute.xlu0 %1811
    %vm1813 = vcmask 48160
    %s1814 = scalar_lea.vmem [#allocation0], 168
    %1815 = vst.msk [vmem:[%s1814] sm:$0xff] %vm1813, %v1812
    %s1816 = scalar_lea.vmem [#allocation2], 1602
    %v1817 = vld [vmem:[%s1816] ss:$8 sm:$0xf]
    %s1818 = scalar_lea.vmem [#allocation2], 1602
    %v1819 = vld [vmem:[%s1818] ss:$8 sm:$0xf0]
    %vm1820 = vcmask 1047556
    %v1821 = vsel %vm1820, %v1819, %v1817
    %1822 = vrot.lane.b32.xlu0 %v1821, 4
    %v1823 = vpop.permute.xlu0 %1822
    %vm1824 = vcmask 48160
    %s1825 = scalar_lea.vmem [#allocation0], 200
    %1826 = vst.msk [vmem:[%s1825] sm:$0xff] %vm1824, %v1823
    %s1827 = scalar_lea.vmem [#allocation2], 1858
    %v1828 = vld [vmem:[%s1827] ss:$8 sm:$0xf]
    %s1829 = scalar_lea.vmem [#allocation2], 1858
    %v1830 = vld [vmem:[%s1829] ss:$8 sm:$0xf0]
    %vm1831 = vcmask 1047556
    %v1832 = vsel %vm1831, %v1830, %v1828
    %1833 = vrot.lane.b32.xlu0 %v1832, 4
    %v1834 = vpop.permute.xlu0 %1833
    %vm1835 = vcmask 48160
    %s1836 = scalar_lea.vmem [#allocation0], 232
    %1837 = vst.msk [vmem:[%s1836] sm:$0xff] %vm1835, %v1834
    %s1838 = scalar_lea.vmem [#allocation2], 130
    %v1839 = vld [vmem:[%s1838] ss:$8 sm:$0xf]
    %s1840 = scalar_lea.vmem [#allocation2], 130
    %v1841 = vld [vmem:[%s1840] ss:$8 sm:$0xf0]
    %vm1842 = vcmask 1047556
    %v1843 = vsel %vm1842, %v1841, %v1839
    %1844 = vrot.lane.b32.xlu0 %v1843, 4
    %v1845 = vpop.permute.xlu0 %1844
    %vm1846 = vcmask 48160
    %s1847 = scalar_lea.vmem [#allocation0], 16
    %1848 = vst.msk [vmem:[%s1847] sm:$0xff] %vm1846, %v1845
    %s1849 = scalar_lea.vmem [#allocation2], 386
    %v1850 = vld [vmem:[%s1849] ss:$8 sm:$0xf]
    %s1851 = scalar_lea.vmem [#allocation2], 386
    %v1852 = vld [vmem:[%s1851] ss:$8 sm:$0xf0]
    %vm1853 = vcmask 1047556
    %v1854 = vsel %vm1853, %v1852, %v1850
    %1855 = vrot.lane.b32.xlu0 %v1854, 4
    %v1856 = vpop.permute.xlu0 %1855
    %vm1857 = vcmask 48160
    %s1858 = scalar_lea.vmem [#allocation0], 48
    %1859 = vst.msk [vmem:[%s1858] sm:$0xff] %vm1857, %v1856
    %s1860 = scalar_lea.vmem [#allocation2], 642
    %v1861 = vld [vmem:[%s1860] ss:$8 sm:$0xf]
    %s1862 = scalar_lea.vmem [#allocation2], 642
    %v1863 = vld [vmem:[%s1862] ss:$8 sm:$0xf0]
    %vm1864 = vcmask 1047556
    %v1865 = vsel %vm1864, %v1863, %v1861
    %1866 = vrot.lane.b32.xlu0 %v1865, 4
    %v1867 = vpop.permute.xlu0 %1866
    %vm1868 = vcmask 48160
    %s1869 = scalar_lea.vmem [#allocation0], 80
    %1870 = vst.msk [vmem:[%s1869] sm:$0xff] %vm1868, %v1867
    %s1871 = scalar_lea.vmem [#allocation2], 898
    %v1872 = vld [vmem:[%s1871] ss:$8 sm:$0xf]
    %s1873 = scalar_lea.vmem [#allocation2], 898
    %v1874 = vld [vmem:[%s1873] ss:$8 sm:$0xf0]
    %vm1875 = vcmask 1047556
    %v1876 = vsel %vm1875, %v1874, %v1872
    %1877 = vrot.lane.b32.xlu0 %v1876, 4
    %v1878 = vpop.permute.xlu0 %1877
    %vm1879 = vcmask 48160
    %s1880 = scalar_lea.vmem [#allocation0], 112
    %1881 = vst.msk [vmem:[%s1880] sm:$0xff] %vm1879, %v1878
    %s1882 = scalar_lea.vmem [#allocation2], 1154
    %v1883 = vld [vmem:[%s1882] ss:$8 sm:$0xf]
    %s1884 = scalar_lea.vmem [#allocation2], 1154
    %v1885 = vld [vmem:[%s1884] ss:$8 sm:$0xf0]
    %vm1886 = vcmask 1047556
    %v1887 = vsel %vm1886, %v1885, %v1883
    %1888 = vrot.lane.b32.xlu0 %v1887, 4
    %v1889 = vpop.permute.xlu0 %1888
    %vm1890 = vcmask 48160
    %s1891 = scalar_lea.vmem [#allocation0], 144
    %1892 = vst.msk [vmem:[%s1891] sm:$0xff] %vm1890, %v1889
    %s1893 = scalar_lea.vmem [#allocation2], 1410
    %v1894 = vld [vmem:[%s1893] ss:$8 sm:$0xf]
    %s1895 = scalar_lea.vmem [#allocation2], 1410
    %v1896 = vld [vmem:[%s1895] ss:$8 sm:$0xf0]
    %vm1897 = vcmask 1047556
    %v1898 = vsel %vm1897, %v1896, %v1894
    %1899 = vrot.lane.b32.xlu0 %v1898, 4
    %v1900 = vpop.permute.xlu0 %1899
    %vm1901 = vcmask 48160
    %s1902 = scalar_lea.vmem [#allocation0], 176
    %1903 = vst.msk [vmem:[%s1902] sm:$0xff] %vm1901, %v1900
    %s1904 = scalar_lea.vmem [#allocation2], 1666
    %v1905 = vld [vmem:[%s1904] ss:$8 sm:$0xf]
    %s1906 = scalar_lea.vmem [#allocation2], 1666
    %v1907 = vld [vmem:[%s1906] ss:$8 sm:$0xf0]
    %vm1908 = vcmask 1047556
    %v1909 = vsel %vm1908, %v1907, %v1905
    %1910 = vrot.lane.b32.xlu0 %v1909, 4
    %v1911 = vpop.permute.xlu0 %1910
    %vm1912 = vcmask 48160
    %s1913 = scalar_lea.vmem [#allocation0], 208
    %1914 = vst.msk [vmem:[%s1913] sm:$0xff] %vm1912, %v1911
    %s1915 = scalar_lea.vmem [#allocation2], 1922
    %v1916 = vld [vmem:[%s1915] ss:$8 sm:$0xf]
    %s1917 = scalar_lea.vmem [#allocation2], 1922
    %v1918 = vld [vmem:[%s1917] ss:$8 sm:$0xf0]
    %vm1919 = vcmask 1047556
    %v1920 = vsel %vm1919, %v1918, %v1916
    %1921 = vrot.lane.b32.xlu0 %v1920, 4
    %v1922 = vpop.permute.xlu0 %1921
    %vm1923 = vcmask 48160
    %s1924 = scalar_lea.vmem [#allocation0], 240
    %1925 = vst.msk [vmem:[%s1924] sm:$0xff] %vm1923, %v1922
    %s1926 = scalar_lea.vmem [#allocation2], 194
    %v1927 = vld [vmem:[%s1926] ss:$8 sm:$0xf]
    %s1928 = scalar_lea.vmem [#allocation2], 194
    %v1929 = vld [vmem:[%s1928] ss:$8 sm:$0xf0]
    %vm1930 = vcmask 1047556
    %v1931 = vsel %vm1930, %v1929, %v1927
    %1932 = vrot.lane.b32.xlu0 %v1931, 4
    %v1933 = vpop.permute.xlu0 %1932
    %vm1934 = vcmask 48160
    %s1935 = scalar_lea.vmem [#allocation0], 24
    %1936 = vst.msk [vmem:[%s1935] sm:$0xff] %vm1934, %v1933
    %s1937 = scalar_lea.vmem [#allocation2], 450
    %v1938 = vld [vmem:[%s1937] ss:$8 sm:$0xf]
    %s1939 = scalar_lea.vmem [#allocation2], 450
    %v1940 = vld [vmem:[%s1939] ss:$8 sm:$0xf0]
    %vm1941 = vcmask 1047556
    %v1942 = vsel %vm1941, %v1940, %v1938
    %1943 = vrot.lane.b32.xlu0 %v1942, 4
    %v1944 = vpop.permute.xlu0 %1943
    %vm1945 = vcmask 48160
    %s1946 = scalar_lea.vmem [#allocation0], 56
    %1947 = vst.msk [vmem:[%s1946] sm:$0xff] %vm1945, %v1944
    %s1948 = scalar_lea.vmem [#allocation2], 706
    %v1949 = vld [vmem:[%s1948] ss:$8 sm:$0xf]
    %s1950 = scalar_lea.vmem [#allocation2], 706
    %v1951 = vld [vmem:[%s1950] ss:$8 sm:$0xf0]
    %vm1952 = vcmask 1047556
    %v1953 = vsel %vm1952, %v1951, %v1949
    %1954 = vrot.lane.b32.xlu0 %v1953, 4
    %v1955 = vpop.permute.xlu0 %1954
    %vm1956 = vcmask 48160
    %s1957 = scalar_lea.vmem [#allocation0], 88
    %1958 = vst.msk [vmem:[%s1957] sm:$0xff] %vm1956, %v1955
    %s1959 = scalar_lea.vmem [#allocation2], 962
    %v1960 = vld [vmem:[%s1959] ss:$8 sm:$0xf]
    %s1961 = scalar_lea.vmem [#allocation2], 962
    %v1962 = vld [vmem:[%s1961] ss:$8 sm:$0xf0]
    %vm1963 = vcmask 1047556
    %v1964 = vsel %vm1963, %v1962, %v1960
    %1965 = vrot.lane.b32.xlu0 %v1964, 4
    %v1966 = vpop.permute.xlu0 %1965
    %vm1967 = vcmask 48160
    %s1968 = scalar_lea.vmem [#allocation0], 120
    %1969 = vst.msk [vmem:[%s1968] sm:$0xff] %vm1967, %v1966
    %s1970 = scalar_lea.vmem [#allocation2], 1218
    %v1971 = vld [vmem:[%s1970] ss:$8 sm:$0xf]
    %s1972 = scalar_lea.vmem [#allocation2], 1218
    %v1973 = vld [vmem:[%s1972] ss:$8 sm:$0xf0]
    %vm1974 = vcmask 1047556
    %v1975 = vsel %vm1974, %v1973, %v1971
    %1976 = vrot.lane.b32.xlu0 %v1975, 4
    %v1977 = vpop.permute.xlu0 %1976
    %vm1978 = vcmask 48160
    %s1979 = scalar_lea.vmem [#allocation0], 152
    %1980 = vst.msk [vmem:[%s1979] sm:$0xff] %vm1978, %v1977
    %s1981 = scalar_lea.vmem [#allocation2], 1474
    %v1982 = vld [vmem:[%s1981] ss:$8 sm:$0xf]
    %s1983 = scalar_lea.vmem [#allocation2], 1474
    %v1984 = vld [vmem:[%s1983] ss:$8 sm:$0xf0]
    %vm1985 = vcmask 1047556
    %v1986 = vsel %vm1985, %v1984, %v1982
    %1987 = vrot.lane.b32.xlu0 %v1986, 4
    %v1988 = vpop.permute.xlu0 %1987
    %vm1989 = vcmask 48160
    %s1990 = scalar_lea.vmem [#allocation0], 184
    %1991 = vst.msk [vmem:[%s1990] sm:$0xff] %vm1989, %v1988
    %s1992 = scalar_lea.vmem [#allocation2], 1730
    %v1993 = vld [vmem:[%s1992] ss:$8 sm:$0xf]
    %s1994 = scalar_lea.vmem [#allocation2], 1730
    %v1995 = vld [vmem:[%s1994] ss:$8 sm:$0xf0]
    %vm1996 = vcmask 1047556
    %v1997 = vsel %vm1996, %v1995, %v1993
    %1998 = vrot.lane.b32.xlu0 %v1997, 4
    %v1999 = vpop.permute.xlu0 %1998
    %vm2000 = vcmask 48160
    %s2001 = scalar_lea.vmem [#allocation0], 216
    %2002 = vst.msk [vmem:[%s2001] sm:$0xff] %vm2000, %v1999
    %s2003 = scalar_lea.vmem [#allocation2], 1986
    %v2004 = vld [vmem:[%s2003] ss:$8 sm:$0xf]
    %s2005 = scalar_lea.vmem [#allocation2], 1986
    %v2006 = vld [vmem:[%s2005] ss:$8 sm:$0xf0]
    %vm2007 = vcmask 1047556
    %v2008 = vsel %vm2007, %v2006, %v2004
    %2009 = vrot.lane.b32.xlu0 %v2008, 4
    %v2010 = vpop.permute.xlu0 %2009
    %vm2011 = vcmask 48160
    %s2012 = scalar_lea.vmem [#allocation0], 248
    %2013 = vst.msk [vmem:[%s2012] sm:$0xff] %vm2011, %v2010
    %s2014 = scalar_lea.vmem [#allocation2], 1
    %v2015 = vld [vmem:[%s2014] ss:$8 sm:$0xf]
    %s2016 = scalar_lea.vmem [#allocation2], 1
    %v2017 = vld [vmem:[%s2016] ss:$8 sm:$0xf0]
    %vm2018 = vcmask 1047556
    %v2019 = vsel %vm2018, %v2017, %v2015
    %2020 = vrot.lane.b32.xlu0 %v2019, 2
    %v2021 = vpop.permute.xlu0 %2020
    %vm2022 = vcmask 31760
    %2023 = vst.msk [vmem:[#allocation0] sm:$0xff] %vm2022, %v2021
    %s2024 = scalar_lea.vmem [#allocation2], 257
    %v2025 = vld [vmem:[%s2024] ss:$8 sm:$0xf]
    %s2026 = scalar_lea.vmem [#allocation2], 257
    %v2027 = vld [vmem:[%s2026] ss:$8 sm:$0xf0]
    %vm2028 = vcmask 1047556
    %v2029 = vsel %vm2028, %v2027, %v2025
    %2030 = vrot.lane.b32.xlu0 %v2029, 2
    %v2031 = vpop.permute.xlu0 %2030
    %vm2032 = vcmask 31760
    %s2033 = scalar_lea.vmem [#allocation0], 32
    %2034 = vst.msk [vmem:[%s2033] sm:$0xff] %vm2032, %v2031
    %s2035 = scalar_lea.vmem [#allocation2], 513
    %v2036 = vld [vmem:[%s2035] ss:$8 sm:$0xf]
    %s2037 = scalar_lea.vmem [#allocation2], 513
    %v2038 = vld [vmem:[%s2037] ss:$8 sm:$0xf0]
    %vm2039 = vcmask 1047556
    %v2040 = vsel %vm2039, %v2038, %v2036
    %2041 = vrot.lane.b32.xlu0 %v2040, 2
    %v2042 = vpop.permute.xlu0 %2041
    %vm2043 = vcmask 31760
    %s2044 = scalar_lea.vmem [#allocation0], 64
    %2045 = vst.msk [vmem:[%s2044] sm:$0xff] %vm2043, %v2042
    %s2046 = scalar_lea.vmem [#allocation2], 769
    %v2047 = vld [vmem:[%s2046] ss:$8 sm:$0xf]
    %s2048 = scalar_lea.vmem [#allocation2], 769
    %v2049 = vld [vmem:[%s2048] ss:$8 sm:$0xf0]
    %vm2050 = vcmask 1047556
    %v2051 = vsel %vm2050, %v2049, %v2047
    %2052 = vrot.lane.b32.xlu0 %v2051, 2
    %v2053 = vpop.permute.xlu0 %2052
    %vm2054 = vcmask 31760
    %s2055 = scalar_lea.vmem [#allocation0], 96
    %2056 = vst.msk [vmem:[%s2055] sm:$0xff] %vm2054, %v2053
    %s2057 = scalar_lea.vmem [#allocation2], 1025
    %v2058 = vld [vmem:[%s2057] ss:$8 sm:$0xf]
    %s2059 = scalar_lea.vmem [#allocation2], 1025
    %v2060 = vld [vmem:[%s2059] ss:$8 sm:$0xf0]
    %vm2061 = vcmask 1047556
    %v2062 = vsel %vm2061, %v2060, %v2058
    %2063 = vrot.lane.b32.xlu0 %v2062, 2
    %v2064 = vpop.permute.xlu0 %2063
    %vm2065 = vcmask 31760
    %s2066 = scalar_lea.vmem [#allocation0], 128
    %2067 = vst.msk [vmem:[%s2066] sm:$0xff] %vm2065, %v2064
    %s2068 = scalar_lea.vmem [#allocation2], 1281
    %v2069 = vld [vmem:[%s2068] ss:$8 sm:$0xf]
    %s2070 = scalar_lea.vmem [#allocation2], 1281
    %v2071 = vld [vmem:[%s2070] ss:$8 sm:$0xf0]
    %vm2072 = vcmask 1047556
    %v2073 = vsel %vm2072, %v2071, %v2069
    %2074 = vrot.lane.b32.xlu0 %v2073, 2
    %v2075 = vpop.permute.xlu0 %2074
    %vm2076 = vcmask 31760
    %s2077 = scalar_lea.vmem [#allocation0], 160
    %2078 = vst.msk [vmem:[%s2077] sm:$0xff] %vm2076, %v2075
    %s2079 = scalar_lea.vmem [#allocation2], 1537
    %v2080 = vld [vmem:[%s2079] ss:$8 sm:$0xf]
    %s2081 = scalar_lea.vmem [#allocation2], 1537
    %v2082 = vld [vmem:[%s2081] ss:$8 sm:$0xf0]
    %vm2083 = vcmask 1047556
    %v2084 = vsel %vm2083, %v2082, %v2080
    %2085 = vrot.lane.b32.xlu0 %v2084, 2
    %v2086 = vpop.permute.xlu0 %2085
    %vm2087 = vcmask 31760
    %s2088 = scalar_lea.vmem [#allocation0], 192
    %2089 = vst.msk [vmem:[%s2088] sm:$0xff] %vm2087, %v2086
    %s2090 = scalar_lea.vmem [#allocation2], 1793
    %v2091 = vld [vmem:[%s2090] ss:$8 sm:$0xf]
    %s2092 = scalar_lea.vmem [#allocation2], 1793
    %v2093 = vld [vmem:[%s2092] ss:$8 sm:$0xf0]
    %vm2094 = vcmask 1047556
    %v2095 = vsel %vm2094, %v2093, %v2091
    %2096 = vrot.lane.b32.xlu0 %v2095, 2
    %v2097 = vpop.permute.xlu0 %2096
    %vm2098 = vcmask 31760
    %s2099 = scalar_lea.vmem [#allocation0], 224
    %2100 = vst.msk [vmem:[%s2099] sm:$0xff] %vm2098, %v2097
    %s2101 = scalar_lea.vmem [#allocation2], 65
    %v2102 = vld [vmem:[%s2101] ss:$8 sm:$0xf]
    %s2103 = scalar_lea.vmem [#allocation2], 65
    %v2104 = vld [vmem:[%s2103] ss:$8 sm:$0xf0]
    %vm2105 = vcmask 1047556
    %v2106 = vsel %vm2105, %v2104, %v2102
    %2107 = vrot.lane.b32.xlu0 %v2106, 2
    %v2108 = vpop.permute.xlu0 %2107
    %vm2109 = vcmask 31760
    %s2110 = scalar_lea.vmem [#allocation0], 8
    %2111 = vst.msk [vmem:[%s2110] sm:$0xff] %vm2109, %v2108
    %s2112 = scalar_lea.vmem [#allocation2], 321
    %v2113 = vld [vmem:[%s2112] ss:$8 sm:$0xf]
    %s2114 = scalar_lea.vmem [#allocation2], 321
    %v2115 = vld [vmem:[%s2114] ss:$8 sm:$0xf0]
    %vm2116 = vcmask 1047556
    %v2117 = vsel %vm2116, %v2115, %v2113
    %2118 = vrot.lane.b32.xlu0 %v2117, 2
    %v2119 = vpop.permute.xlu0 %2118
    %vm2120 = vcmask 31760
    %s2121 = scalar_lea.vmem [#allocation0], 40
    %2122 = vst.msk [vmem:[%s2121] sm:$0xff] %vm2120, %v2119
    %s2123 = scalar_lea.vmem [#allocation2], 577
    %v2124 = vld [vmem:[%s2123] ss:$8 sm:$0xf]
    %s2125 = scalar_lea.vmem [#allocation2], 577
    %v2126 = vld [vmem:[%s2125] ss:$8 sm:$0xf0]
    %vm2127 = vcmask 1047556
    %v2128 = vsel %vm2127, %v2126, %v2124
    %2129 = vrot.lane.b32.xlu0 %v2128, 2
    %v2130 = vpop.permute.xlu0 %2129
    %vm2131 = vcmask 31760
    %s2132 = scalar_lea.vmem [#allocation0], 72
    %2133 = vst.msk [vmem:[%s2132] sm:$0xff] %vm2131, %v2130
    %s2134 = scalar_lea.vmem [#allocation2], 833
    %v2135 = vld [vmem:[%s2134] ss:$8 sm:$0xf]
    %s2136 = scalar_lea.vmem [#allocation2], 833
    %v2137 = vld [vmem:[%s2136] ss:$8 sm:$0xf0]
    %vm2138 = vcmask 1047556
    %v2139 = vsel %vm2138, %v2137, %v2135
    %2140 = vrot.lane.b32.xlu0 %v2139, 2
    %v2141 = vpop.permute.xlu0 %2140
    %vm2142 = vcmask 31760
    %s2143 = scalar_lea.vmem [#allocation0], 104
    %2144 = vst.msk [vmem:[%s2143] sm:$0xff] %vm2142, %v2141
    %s2145 = scalar_lea.vmem [#allocation2], 1089
    %v2146 = vld [vmem:[%s2145] ss:$8 sm:$0xf]
    %s2147 = scalar_lea.vmem [#allocation2], 1089
    %v2148 = vld [vmem:[%s2147] ss:$8 sm:$0xf0]
    %vm2149 = vcmask 1047556
    %v2150 = vsel %vm2149, %v2148, %v2146
    %2151 = vrot.lane.b32.xlu0 %v2150, 2
    %v2152 = vpop.permute.xlu0 %2151
    %vm2153 = vcmask 31760
    %s2154 = scalar_lea.vmem [#allocation0], 136
    %2155 = vst.msk [vmem:[%s2154] sm:$0xff] %vm2153, %v2152
    %s2156 = scalar_lea.vmem [#allocation2], 1345
    %v2157 = vld [vmem:[%s2156] ss:$8 sm:$0xf]
    %s2158 = scalar_lea.vmem [#allocation2], 1345
    %v2159 = vld [vmem:[%s2158] ss:$8 sm:$0xf0]
    %vm2160 = vcmask 1047556
    %v2161 = vsel %vm2160, %v2159, %v2157
    %2162 = vrot.lane.b32.xlu0 %v2161, 2
    %v2163 = vpop.permute.xlu0 %2162
    %vm2164 = vcmask 31760
    %s2165 = scalar_lea.vmem [#allocation0], 168
    %2166 = vst.msk [vmem:[%s2165] sm:$0xff] %vm2164, %v2163
    %s2167 = scalar_lea.vmem [#allocation2], 1601
    %v2168 = vld [vmem:[%s2167] ss:$8 sm:$0xf]
    %s2169 = scalar_lea.vmem [#allocation2], 1601
    %v2170 = vld [vmem:[%s2169] ss:$8 sm:$0xf0]
    %vm2171 = vcmask 1047556
    %v2172 = vsel %vm2171, %v2170, %v2168
    %2173 = vrot.lane.b32.xlu0 %v2172, 2
    %v2174 = vpop.permute.xlu0 %2173
    %vm2175 = vcmask 31760
    %s2176 = scalar_lea.vmem [#allocation0], 200
    %2177 = vst.msk [vmem:[%s2176] sm:$0xff] %vm2175, %v2174
    %s2178 = scalar_lea.vmem [#allocation2], 1857
    %v2179 = vld [vmem:[%s2178] ss:$8 sm:$0xf]
    %s2180 = scalar_lea.vmem [#allocation2], 1857
    %v2181 = vld [vmem:[%s2180] ss:$8 sm:$0xf0]
    %vm2182 = vcmask 1047556
    %v2183 = vsel %vm2182, %v2181, %v2179
    %2184 = vrot.lane.b32.xlu0 %v2183, 2
    %v2185 = vpop.permute.xlu0 %2184
    %vm2186 = vcmask 31760
    %s2187 = scalar_lea.vmem [#allocation0], 232
    %2188 = vst.msk [vmem:[%s2187] sm:$0xff] %vm2186, %v2185
    %s2189 = scalar_lea.vmem [#allocation2], 129
    %v2190 = vld [vmem:[%s2189] ss:$8 sm:$0xf]
    %s2191 = scalar_lea.vmem [#allocation2], 129
    %v2192 = vld [vmem:[%s2191] ss:$8 sm:$0xf0]
    %vm2193 = vcmask 1047556
    %v2194 = vsel %vm2193, %v2192, %v2190
    %2195 = vrot.lane.b32.xlu0 %v2194, 2
    %v2196 = vpop.permute.xlu0 %2195
    %vm2197 = vcmask 31760
    %s2198 = scalar_lea.vmem [#allocation0], 16
    %2199 = vst.msk [vmem:[%s2198] sm:$0xff] %vm2197, %v2196
    %s2200 = scalar_lea.vmem [#allocation2], 385
    %v2201 = vld [vmem:[%s2200] ss:$8 sm:$0xf]
    %s2202 = scalar_lea.vmem [#allocation2], 385
    %v2203 = vld [vmem:[%s2202] ss:$8 sm:$0xf0]
    %vm2204 = vcmask 1047556
    %v2205 = vsel %vm2204, %v2203, %v2201
    %2206 = vrot.lane.b32.xlu0 %v2205, 2
    %v2207 = vpop.permute.xlu0 %2206
    %vm2208 = vcmask 31760
    %s2209 = scalar_lea.vmem [#allocation0], 48
    %2210 = vst.msk [vmem:[%s2209] sm:$0xff] %vm2208, %v2207
    %s2211 = scalar_lea.vmem [#allocation2], 641
    %v2212 = vld [vmem:[%s2211] ss:$8 sm:$0xf]
    %s2213 = scalar_lea.vmem [#allocation2], 641
    %v2214 = vld [vmem:[%s2213] ss:$8 sm:$0xf0]
    %vm2215 = vcmask 1047556
    %v2216 = vsel %vm2215, %v2214, %v2212
    %2217 = vrot.lane.b32.xlu0 %v2216, 2
    %v2218 = vpop.permute.xlu0 %2217
    %vm2219 = vcmask 31760
    %s2220 = scalar_lea.vmem [#allocation0], 80
    %2221 = vst.msk [vmem:[%s2220] sm:$0xff] %vm2219, %v2218
    %s2222 = scalar_lea.vmem [#allocation2], 897
    %v2223 = vld [vmem:[%s2222] ss:$8 sm:$0xf]
    %s2224 = scalar_lea.vmem [#allocation2], 897
    %v2225 = vld [vmem:[%s2224] ss:$8 sm:$0xf0]
    %vm2226 = vcmask 1047556
    %v2227 = vsel %vm2226, %v2225, %v2223
    %2228 = vrot.lane.b32.xlu0 %v2227, 2
    %v2229 = vpop.permute.xlu0 %2228
    %vm2230 = vcmask 31760
    %s2231 = scalar_lea.vmem [#allocation0], 112
    %2232 = vst.msk [vmem:[%s2231] sm:$0xff] %vm2230, %v2229
    %s2233 = scalar_lea.vmem [#allocation2], 1153
    %v2234 = vld [vmem:[%s2233] ss:$8 sm:$0xf]
    %s2235 = scalar_lea.vmem [#allocation2], 1153
    %v2236 = vld [vmem:[%s2235] ss:$8 sm:$0xf0]
    %vm2237 = vcmask 1047556
    %v2238 = vsel %vm2237, %v2236, %v2234
    %2239 = vrot.lane.b32.xlu0 %v2238, 2
    %v2240 = vpop.permute.xlu0 %2239
    %vm2241 = vcmask 31760
    %s2242 = scalar_lea.vmem [#allocation0], 144
    %2243 = vst.msk [vmem:[%s2242] sm:$0xff] %vm2241, %v2240
    %s2244 = scalar_lea.vmem [#allocation2], 1409
    %v2245 = vld [vmem:[%s2244] ss:$8 sm:$0xf]
    %s2246 = scalar_lea.vmem [#allocation2], 1409
    %v2247 = vld [vmem:[%s2246] ss:$8 sm:$0xf0]
    %vm2248 = vcmask 1047556
    %v2249 = vsel %vm2248, %v2247, %v2245
    %2250 = vrot.lane.b32.xlu0 %v2249, 2
    %v2251 = vpop.permute.xlu0 %2250
    %vm2252 = vcmask 31760
    %s2253 = scalar_lea.vmem [#allocation0], 176
    %2254 = vst.msk [vmem:[%s2253] sm:$0xff] %vm2252, %v2251
    %s2255 = scalar_lea.vmem [#allocation2], 1665
    %v2256 = vld [vmem:[%s2255] ss:$8 sm:$0xf]
    %s2257 = scalar_lea.vmem [#allocation2], 1665
    %v2258 = vld [vmem:[%s2257] ss:$8 sm:$0xf0]
    %vm2259 = vcmask 1047556
    %v2260 = vsel %vm2259, %v2258, %v2256
    %2261 = vrot.lane.b32.xlu0 %v2260, 2
    %v2262 = vpop.permute.xlu0 %2261
    %vm2263 = vcmask 31760
    %s2264 = scalar_lea.vmem [#allocation0], 208
    %2265 = vst.msk [vmem:[%s2264] sm:$0xff] %vm2263, %v2262
    %s2266 = scalar_lea.vmem [#allocation2], 1921
    %v2267 = vld [vmem:[%s2266] ss:$8 sm:$0xf]
    %s2268 = scalar_lea.vmem [#allocation2], 1921
    %v2269 = vld [vmem:[%s2268] ss:$8 sm:$0xf0]
    %vm2270 = vcmask 1047556
    %v2271 = vsel %vm2270, %v2269, %v2267
    %2272 = vrot.lane.b32.xlu0 %v2271, 2
    %v2273 = vpop.permute.xlu0 %2272
    %vm2274 = vcmask 31760
    %s2275 = scalar_lea.vmem [#allocation0], 240
    %2276 = vst.msk [vmem:[%s2275] sm:$0xff] %vm2274, %v2273
    %s2277 = scalar_lea.vmem [#allocation2], 193
    %v2278 = vld [vmem:[%s2277] ss:$8 sm:$0xf]
    %s2279 = scalar_lea.vmem [#allocation2], 193
    %v2280 = vld [vmem:[%s2279] ss:$8 sm:$0xf0]
    %vm2281 = vcmask 1047556
    %v2282 = vsel %vm2281, %v2280, %v2278
    %2283 = vrot.lane.b32.xlu0 %v2282, 2
    %v2284 = vpop.permute.xlu0 %2283
    %vm2285 = vcmask 31760
    %s2286 = scalar_lea.vmem [#allocation0], 24
    %2287 = vst.msk [vmem:[%s2286] sm:$0xff] %vm2285, %v2284
    %s2288 = scalar_lea.vmem [#allocation2], 449
    %v2289 = vld [vmem:[%s2288] ss:$8 sm:$0xf]
    %s2290 = scalar_lea.vmem [#allocation2], 449
    %v2291 = vld [vmem:[%s2290] ss:$8 sm:$0xf0]
    %vm2292 = vcmask 1047556
    %v2293 = vsel %vm2292, %v2291, %v2289
    %2294 = vrot.lane.b32.xlu0 %v2293, 2
    %v2295 = vpop.permute.xlu0 %2294
    %vm2296 = vcmask 31760
    %s2297 = scalar_lea.vmem [#allocation0], 56
    %2298 = vst.msk [vmem:[%s2297] sm:$0xff] %vm2296, %v2295
    %s2299 = scalar_lea.vmem [#allocation2], 705
    %v2300 = vld [vmem:[%s2299] ss:$8 sm:$0xf]
    %s2301 = scalar_lea.vmem [#allocation2], 705
    %v2302 = vld [vmem:[%s2301] ss:$8 sm:$0xf0]
    %vm2303 = vcmask 1047556
    %v2304 = vsel %vm2303, %v2302, %v2300
    %2305 = vrot.lane.b32.xlu0 %v2304, 2
    %v2306 = vpop.permute.xlu0 %2305
    %vm2307 = vcmask 31760
    %s2308 = scalar_lea.vmem [#allocation0], 88
    %2309 = vst.msk [vmem:[%s2308] sm:$0xff] %vm2307, %v2306
    %s2310 = scalar_lea.vmem [#allocation2], 961
    %v2311 = vld [vmem:[%s2310] ss:$8 sm:$0xf]
    %s2312 = scalar_lea.vmem [#allocation2], 961
    %v2313 = vld [vmem:[%s2312] ss:$8 sm:$0xf0]
    %vm2314 = vcmask 1047556
    %v2315 = vsel %vm2314, %v2313, %v2311
    %2316 = vrot.lane.b32.xlu0 %v2315, 2
    %v2317 = vpop.permute.xlu0 %2316
    %vm2318 = vcmask 31760
    %s2319 = scalar_lea.vmem [#allocation0], 120
    %2320 = vst.msk [vmem:[%s2319] sm:$0xff] %vm2318, %v2317
    %s2321 = scalar_lea.vmem [#allocation2], 1217
    %v2322 = vld [vmem:[%s2321] ss:$8 sm:$0xf]
    %s2323 = scalar_lea.vmem [#allocation2], 1217
    %v2324 = vld [vmem:[%s2323] ss:$8 sm:$0xf0]
    %vm2325 = vcmask 1047556
    %v2326 = vsel %vm2325, %v2324, %v2322
    %2327 = vrot.lane.b32.xlu0 %v2326, 2
    %v2328 = vpop.permute.xlu0 %2327
    %vm2329 = vcmask 31760
    %s2330 = scalar_lea.vmem [#allocation0], 152
    %2331 = vst.msk [vmem:[%s2330] sm:$0xff] %vm2329, %v2328
    %s2332 = scalar_lea.vmem [#allocation2], 1473
    %v2333 = vld [vmem:[%s2332] ss:$8 sm:$0xf]
    %s2334 = scalar_lea.vmem [#allocation2], 1473
    %v2335 = vld [vmem:[%s2334] ss:$8 sm:$0xf0]
    %vm2336 = vcmask 1047556
    %v2337 = vsel %vm2336, %v2335, %v2333
    %2338 = vrot.lane.b32.xlu0 %v2337, 2
    %v2339 = vpop.permute.xlu0 %2338
    %vm2340 = vcmask 31760
    %s2341 = scalar_lea.vmem [#allocation0], 184
    %2342 = vst.msk [vmem:[%s2341] sm:$0xff] %vm2340, %v2339
    %s2343 = scalar_lea.vmem [#allocation2], 1729
    %v2344 = vld [vmem:[%s2343] ss:$8 sm:$0xf]
    %s2345 = scalar_lea.vmem [#allocation2], 1729
    %v2346 = vld [vmem:[%s2345] ss:$8 sm:$0xf0]
    %vm2347 = vcmask 1047556
    %v2348 = vsel %vm2347, %v2346, %v2344
    %2349 = vrot.lane.b32.xlu0 %v2348, 2
    %v2350 = vpop.permute.xlu0 %2349
    %vm2351 = vcmask 31760
    %s2352 = scalar_lea.vmem [#allocation0], 216
    %2353 = vst.msk [vmem:[%s2352] sm:$0xff] %vm2351, %v2350
    %s2354 = scalar_lea.vmem [#allocation2], 1985
    %v2355 = vld [vmem:[%s2354] ss:$8 sm:$0xf]
    %s2356 = scalar_lea.vmem [#allocation2], 1985
    %v2357 = vld [vmem:[%s2356] ss:$8 sm:$0xf0]
    %vm2358 = vcmask 1047556
    %v2359 = vsel %vm2358, %v2357, %v2355
    %2360 = vrot.lane.b32.xlu0 %v2359, 2
    %v2361 = vpop.permute.xlu0 %2360
    %vm2362 = vcmask 31760
    %s2363 = scalar_lea.vmem [#allocation0], 248
    %2364 = vst.msk [vmem:[%s2363] sm:$0xff] %vm2362, %v2361
    %2366 = vsyncadd [#allocation1], 0
    %s2368 = sshll.u32 [#allocation0], 4
    %s2369 = int_to_ptr.vmem [resolvable:$true] %s2368
    %s2370 = sshll.u32 %s1, 4
    %s2371 = int_to_ptr.hbm [resolvable:$true] %s2370
    %2373 = dma.vmem_to_hbm [thread:$0]  %s2369, 4096, %s2371, [#allocation1]
    %2375 = dma.done [#allocation1], 4096
    %2376 = vsyncpa [#allocation1], 1

</llo_original>
